<compile_context>
chip_gen: v6e
topology: v6e:2x2x1
jax: 0.10.0
libtpu: 0.0.40
codegen_flags: <defaults>
</compile_context>

<pallas_src>
import numpy as np

import jax
import jax.numpy as jnp
from jax.experimental import pallas as pl
from jax.experimental.pallas import tpu as pltpu


# ----------------------------------------------------------------------------
# Static row offsets inside the two packed operand slabs (shared by host prep
# and the kernel so they cannot drift apart).
# ----------------------------------------------------------------------------
# "sel" slab: [704, 84]
_EC1, _OC1 = 0, 168        # lane pickers pool1, [168, 84] each (col = c*14+w)
_EC2, _OC2 = 336, 496      # lane pickers pool2, [160, 80] each (col = co*5+w)
_ER1, _OR1 = 656, 672      # row pickers pool1, [14, 28] each
_ER2, _OR2 = 688, 696      # row pickers pool2, [5, 10] each
_SEL_ROWS, _SEL_COLS = 704, 84

# "head" slab: [216, 120]
_WFC2 = 0                  # fc2 weight [120, 84]
_WFC3 = 120                # fc3 weight [84, 10]
_B1, _B2 = 208, 209        # conv biases, widened to pooled layout: [1,84] / [1,80]
_BF1, _BF2, _BF3 = 210, 211, 212
_HEAD_ROWS, _HEAD_COLS = 216, 120


def _dot(a, b):
    return jnp.dot(a, b, preferred_element_type=jnp.float32)


# ----------------------------------------------------------------------------
# Fused LeNet forward kernel: one image per grid step (grid=(B,), "parallel")
# ----------------------------------------------------------------------------
def _lenet_kernel(x_ref, w1e_ref, w2e_ref, wfc1_ref, sel_ref, head_ref,
                  out_ref, p1s, p2s):
    # --- unpack packed slabs (static VMEM ref slices, no extra DMAs) ---------
    sel_ec1 = sel_ref[_EC1:_EC1 + 168, :]          # [168, 84]
    sel_oc1 = sel_ref[_OC1:_OC1 + 168, :]          # [168, 84]
    sel_ec2 = sel_ref[_EC2:_EC2 + 160, 0:80]       # [160, 80]
    sel_oc2 = sel_ref[_OC2:_OC2 + 160, 0:80]       # [160, 80]
    sel_er1 = sel_ref[_ER1:_ER1 + 14, 0:28]        # [14, 28]
    sel_or1 = sel_ref[_OR1:_OR1 + 14, 0:28]        # [14, 28]
    sel_er2 = sel_ref[_ER2:_ER2 + 5, 0:10]         # [5, 10]
    sel_or2 = sel_ref[_OR2:_OR2 + 5, 0:10]         # [5, 10]

    wfc2 = head_ref[_WFC2:_WFC2 + 120, 0:84]       # [120, 84]
    wfc3 = head_ref[_WFC3:_WFC3 + 84, 0:10]        # [84, 10]
    b1c = head_ref[_B1:_B1 + 1, 0:84]              # [1, 84]
    b2c = head_ref[_B2:_B2 + 1, 0:80]              # [1, 80]
    bf1 = head_ref[_BF1:_BF1 + 1, 0:120]           # [1, 120]
    bf2 = head_ref[_BF2:_BF2 + 1, 0:84]            # [1, 84]
    bf3 = head_ref[_BF3:_BF3 + 1, 0:10]            # [1, 10]

    # --- conv1 (no bias yet): 5 structured matmuls -> [28, 168], col = c*28+j
    y1 = _dot(x_ref[0, 0:28, :], w1e_ref[0])
    for kh in range(1, 5):
        y1 = y1 + _dot(x_ref[0, kh:kh + 28, :], w1e_ref[kh])

    # --- 2x2/2 max-pool + bias + ReLU -> [14, 84], col = c*14+w  (all on MXU)
    r1 = jnp.maximum(_dot(sel_er1, y1), _dot(sel_or1, y1))           # [14, 168]
    p1 = jnp.maximum(jnp.maximum(_dot(r1, sel_ec1), _dot(r1, sel_oc1)) + b1c, 0.0)
    p1s[...] = p1                                                    # for kh row-slices

    # --- conv2 (no bias yet): 5 structured matmuls -> [10, 160], col = co*10+j
    y2 = _dot(p1s[0:10, :], w2e_ref[0])
    for kh in range(1, 5):
        y2 = y2 + _dot(p1s[kh:kh + 10, :], w2e_ref[kh])

    # --- 2x2/2 max-pool + bias + ReLU -> [5, 80], col = co*5+w
    r2 = jnp.maximum(_dot(sel_er2, y2), _dot(sel_or2, y2))           # [5, 160]
    p2 = jnp.maximum(jnp.maximum(_dot(r2, sel_ec2), _dot(r2, sel_oc2)) + b2c, 0.0)
    p2s[...] = p2                                                    # for fc1 h-slices

    # --- fc1: contract over (h, co*5+w) with per-h permuted weight slabs
    h1 = _dot(p2s[0:1, :], wfc1_ref[0])
    for h in range(1, 5):
        h1 = h1 + _dot(p2s[h:h + 1, :], wfc1_ref[h])
    h1 = jnp.maximum(h1 + bf1, 0.0)                                  # [1, 120]

    # --- fc2 / fc3
    h2 = jnp.maximum(_dot(h1, wfc2) + bf2, 0.0)                      # [1, 84]
    out_ref[0, :, :] = _dot(h2, wfc3) + bf3                          # [1, 10]


# ----------------------------------------------------------------------------
# Host-side one-time operand preparation (pure numpy, tiny; all VMEM-resident)
# ----------------------------------------------------------------------------
def build_lenet_operands(params):
    w1 = np.asarray(params["conv1_w"], np.float32)      # [6, 1, 5, 5]
    b1 = np.asarray(params["conv1_b"], np.float32)      # [6]
    w2 = np.asarray(params["conv2_w"], np.float32)      # [16, 6, 5, 5]
    b2 = np.asarray(params["conv2_b"], np.float32)      # [16]
    fc1w = np.asarray(params["fc1_w"], np.float32)      # [400, 120]
    fc1b = np.asarray(params["fc1_b"], np.float32)
    fc2w = np.asarray(params["fc2_w"], np.float32)      # [120, 84]
    fc2b = np.asarray(params["fc2_b"], np.float32)
    fc3w = np.asarray(params["fc3_w"], np.float32)      # [84, 10]
    fc3b = np.asarray(params["fc3_b"], np.float32)

    # conv1 expansion: (x[i+kh, :] @ W1e[kh])[c*28+j] = sum_kw x[i+kh, j+kw]*w1[c,0,kh,kw]
    j28 = np.arange(28)
    w1e = np.zeros((5, 32, 168), np.float32)
    for kh in range(5):
        for c in range(6):
            for kw in range(5):
                w1e[kh, kw + j28, c * 28 + j28] = w1[c, 0, kh, kw]

    # conv2 expansion over the compact pool1 layout (lane = ci*14 + x):
    # (p1[i+kh, :] @ W2e[kh])[co*10+j] = sum_{ci,kw} p1[i+kh, ci*14 + j+kw]*w2[co,ci,kh,kw]
    j10 = np.arange(10)
    w2e = np.zeros((5, 84, 160), np.float32)
    for kh in range(5):
        for ci in range(6):
            for kw in range(5):
                for co in range(16):
                    w2e[kh, ci * 14 + kw + j10, co * 10 + j10] = w2[co, ci, kh, kw]

    # fc1 weight permuted to match the pooled tile layout [5(h), 80(co*5+w)] against
    # torch's flatten order f = co*25 + h*5 + w.
    wfc1p = fc1w.reshape(16, 5, 5, 120).transpose(1, 0, 2, 3).reshape(5, 80, 120)

    # ---- selector slab: even/odd row & lane pickers for both max-pools ------
    sel = np.zeros((_SEL_ROWS, _SEL_COLS), np.float32)
    w14, w5 = np.arange(14), np.arange(5)
    for c in range(6):
        sel[_EC1 + c * 28 + 2 * w14, c * 14 + w14] = 1.0      # pool1 even lanes
        sel[_OC1 + c * 28 + 2 * w14 + 1, c * 14 + w14] = 1.0  # pool1 odd lanes
    for co in range(16):
        sel[_EC2 + co * 10 + 2 * w5, co * 5 + w5] = 1.0       # pool2 even lanes
        sel[_OC2 + co * 10 + 2 * w5 + 1, co * 5 + w5] = 1.0   # pool2 odd lanes
    h14, h5 = np.arange(14), np.arange(5)
    sel[_ER1 + h14, 2 * h14] = 1.0                            # pool1 even rows
    sel[_OR1 + h14, 2 * h14 + 1] = 1.0                        # pool1 odd rows
    sel[_ER2 + h5, 2 * h5] = 1.0                              # pool2 even rows
    sel[_OR2 + h5, 2 * h5 + 1] = 1.0                          # pool2 odd rows

    # ---- head slab: fc2/fc3 weights + all biases (widened conv biases) ------
    head = np.zeros((_HEAD_ROWS, _HEAD_COLS), np.float32)
    head[_WFC2:_WFC2 + 120, 0:84] = fc2w
    head[_WFC3:_WFC3 + 84, 0:10] = fc3w
    head[_B1, 0:84] = np.repeat(b1, 14)     # bias at col c*14+w is b1[c]
    head[_B2, 0:80] = np.repeat(b2, 5)      # bias at col co*5+w is b2[co]
    head[_BF1, 0:120] = fc1b
    head[_BF2, 0:84] = fc2b
    head[_BF3, 0:10] = fc3b

    return [jnp.asarray(o) for o in (w1e, w2e, wfc1p, sel, head)]


def _const_spec(shape):
    zeros = (0,) * len(shape)
    return pl.BlockSpec(shape, lambda b, _z=zeros: _z)


def lenet_forward(x_nchw, operands):
    B = x_nchw.shape[0]
    assert x_nchw.shape[1:] == (1, 32, 32)
    f32 = jnp.float32
    xk = x_nchw.astype(f32).reshape(B, 32, 32)
    args = [xk] + list(operands)

    in_specs = [pl.BlockSpec((1, 32, 32), lambda b: (b, 0, 0))]
    in_specs += [_const_spec(a.shape) for a in args[1:]]

    out = pl.pallas_call(
        _lenet_kernel,
        out_shape=jax.ShapeDtypeStruct((B, 1, 10), f32),
        grid=(B,),                                    # one image per grid step
        in_specs=in_specs,
        out_specs=pl.BlockSpec((1, 1, 10), lambda b: (b, 0, 0)),
        scratch_shapes=[
            pltpu.VMEM((14, 84), f32),    # pool1 output (col = c*14 + w)
            pltpu.VMEM((5, 80), f32),     # pool2 output (col = co*5 + w)
        ],
        compiler_params=pltpu.CompilerParams(
            dimension_semantics=("parallel",)),       # v7x: one image per TensorCore
    )(*args)
    return out.reshape(B, 10)


# ----------------------------------------------------------------------------
# Parameters + pure-JAX reference (for correctness check)
# ----------------------------------------------------------------------------
def init_params(key):
    ks = jax.random.split(key, 10)

    def w(k, shape, fan_in):
        return (jax.random.normal(k, shape, jnp.float32) / jnp.sqrt(fan_in)).astype(jnp.float32)

    return {
        "conv1_w": w(ks[0], (6, 1, 5, 5), 1 * 5 * 5),
        "conv1_b": w(ks[1], (6,), 1 * 5 * 5),
        "conv2_w": w(ks[2], (16, 6, 5, 5), 6 * 5 * 5),
        "conv2_b": w(ks[3], (16,), 6 * 5 * 5),
        # fc weights stored as [in, out] (torch weight transposed)
        "fc1_w": w(ks[4], (400, 120), 400),
        "fc1_b": w(ks[5], (120,), 400),
        "fc2_w": w(ks[6], (120, 84), 120),
        "fc2_b": w(ks[7], (84,), 120),
        "fc3_w": w(ks[8], (84, 10), 84),
        "fc3_b": w(ks[9], (10,), 84),
    }


def reference_forward(x_nchw, params):
    hp = jax.lax.Precision.HIGHEST
    dn = ("NCHW", "OIHW", "NCHW")
    y = jax.lax.conv_general_dilated(x_nchw, params["conv1_w"], (1, 1), "VALID",
                                     dimension_numbers=dn, precision=hp)
    y = jax.nn.relu(y + params["conv1_b"].reshape(1, 6, 1, 1))
    y = jax.lax.reduce_window(y, -jnp.inf, jax.lax.max, (1, 1, 2, 2), (1, 1, 2, 2), "VALID")
    y = jax.lax.conv_general_dilated(y, params["conv2_w"], (1, 1), "VALID",
                                     dimension_numbers=dn, precision=hp)
    y = jax.nn.relu(y + params["conv2_b"].reshape(1, 16, 1, 1))
    y = jax.lax.reduce_window(y, -jnp.inf, jax.lax.max, (1, 1, 2, 2), (1, 1, 2, 2), "VALID")
    flat = y.reshape(y.shape[0], 16 * 5 * 5)            # (C, H, W) flatten, as in torch
    h = jax.nn.relu(jnp.dot(flat, params["fc1_w"], precision=hp) + params["fc1_b"])
    h = jax.nn.relu(jnp.dot(h, params["fc2_w"], precision=hp) + params["fc2_b"])
    return jnp.dot(h, params["fc3_w"], precision=hp) + params["fc3_b"]


if __name__ == "__main__":
    key = jax.random.PRNGKey(0)
    k_x, k_p = jax.random.split(key)
    # LeNet requires 32x32 single-channel input so that 16*5*5 = 400 flat features.
    x = jax.random.normal(k_x, (2, 1, 32, 32), jnp.float32)
    params = init_params(k_p)
    operands = build_lenet_operands(params)

    out = jax.block_until_ready(lenet_forward(x, operands))
    assert out.shape == (2, 10) and out.dtype == jnp.float32

    ref = jax.block_until_ready(reference_forward(x, params))
    max_err = float(np.max(np.abs(np.asarray(out) - np.asarray(ref))))
    assert np.allclose(np.asarray(out), np.asarray(ref), atol=2e-3, rtol=2e-3), max_err

    print("KERNEL_OK")
</pallas_src>

<mosaic_0001>
module attributes {stable_mosaic.version = 11 : i64} {
  func.func @_lenet_kernel(%arg0: i32, %arg1: memref<1x32x32xf32, #tpu.memory_space<vmem>>, %arg2: memref<5x32x168xf32, #tpu.memory_space<vmem>>, %arg3: memref<5x84x160xf32, #tpu.memory_space<vmem>>, %arg4: memref<5x80x120xf32, #tpu.memory_space<vmem>>, %arg5: memref<704x84xf32, #tpu.memory_space<vmem>>, %arg6: memref<216x120xf32, #tpu.memory_space<vmem>>, %arg7: memref<1x1x10xf32, #tpu.memory_space<vmem>>, %arg8: memref<14x84xf32, #tpu.memory_space<vmem>>, %arg9: memref<5x80xf32, #tpu.memory_space<vmem>>) attributes {dimension_semantics = [#tpu.dimension_semantics<parallel>], iteration_bounds = array<i64: 2>, scalar_prefetch = 0 : i64, scratch_operands = 2 : i64, tpu.core_type = #tpu.core_type<tc>, window_params = [{transform_indices = @transform_0, window_bounds = array<i64: 1, 32, 32>}, {pipeline_mode = #tpu.pipeline_mode<synchronous>, transform_indices = @transform_1, window_bounds = array<i64: 5, 32, 168>}, {pipeline_mode = #tpu.pipeline_mode<synchronous>, transform_indices = @transform_2, window_bounds = array<i64: 5, 84, 160>}, {pipeline_mode = #tpu.pipeline_mode<synchronous>, transform_indices = @transform_3, window_bounds = array<i64: 5, 80, 120>}, {pipeline_mode = #tpu.pipeline_mode<synchronous>, transform_indices = @transform_4, window_bounds = array<i64: 704, 84>}, {pipeline_mode = #tpu.pipeline_mode<synchronous>, transform_indices = @transform_5, window_bounds = array<i64: 216, 120>}, {transform_indices = @transform_6, window_bounds = array<i64: 1, 1, 10>}]} {
    %c0 = arith.constant 0 : index
    %c0_0 = arith.constant 0 : index
    %0 = vector.load %arg5[%c0, %c0_0] : memref<704x84xf32, #tpu.memory_space<vmem>>, vector<168x84xf32>
    %c168 = arith.constant 168 : index
    %c0_1 = arith.constant 0 : index
    %1 = vector.load %arg5[%c168, %c0_1] : memref<704x84xf32, #tpu.memory_space<vmem>>, vector<168x84xf32>
    %c336 = arith.constant 336 : index
    %c0_2 = arith.constant 0 : index
    %2 = vector.load %arg5[%c336, %c0_2] : memref<704x84xf32, #tpu.memory_space<vmem>>, vector<160x80xf32>
    %c496 = arith.constant 496 : index
    %c0_3 = arith.constant 0 : index
    %3 = vector.load %arg5[%c496, %c0_3] : memref<704x84xf32, #tpu.memory_space<vmem>>, vector<160x80xf32>
    %c656 = arith.constant 656 : index
    %c0_4 = arith.constant 0 : index
    %4 = vector.load %arg5[%c656, %c0_4] : memref<704x84xf32, #tpu.memory_space<vmem>>, vector<14x28xf32>
    %c672 = arith.constant 672 : index
    %c0_5 = arith.constant 0 : index
    %5 = vector.load %arg5[%c672, %c0_5] : memref<704x84xf32, #tpu.memory_space<vmem>>, vector<14x28xf32>
    %c688 = arith.constant 688 : index
    %c0_6 = arith.constant 0 : index
    %6 = vector.load %arg5[%c688, %c0_6] : memref<704x84xf32, #tpu.memory_space<vmem>>, vector<5x10xf32>
    %c696 = arith.constant 696 : index
    %c0_7 = arith.constant 0 : index
    %7 = vector.load %arg5[%c696, %c0_7] : memref<704x84xf32, #tpu.memory_space<vmem>>, vector<5x10xf32>
    %c0_8 = arith.constant 0 : index
    %c0_9 = arith.constant 0 : index
    %8 = vector.load %arg6[%c0_8, %c0_9] : memref<216x120xf32, #tpu.memory_space<vmem>>, vector<120x84xf32>
    %c120 = arith.constant 120 : index
    %c0_10 = arith.constant 0 : index
    %9 = vector.load %arg6[%c120, %c0_10] : memref<216x120xf32, #tpu.memory_space<vmem>>, vector<84x10xf32>
    %c208 = arith.constant 208 : index
    %c0_11 = arith.constant 0 : index
    %10 = vector.load %arg6[%c208, %c0_11] : memref<216x120xf32, #tpu.memory_space<vmem>>, vector<1x84xf32>
    %c209 = arith.constant 209 : index
    %c0_12 = arith.constant 0 : index
    %11 = vector.load %arg6[%c209, %c0_12] : memref<216x120xf32, #tpu.memory_space<vmem>>, vector<1x80xf32>
    %c210 = arith.constant 210 : index
    %c0_13 = arith.constant 0 : index
    %12 = vector.load %arg6[%c210, %c0_13] : memref<216x120xf32, #tpu.memory_space<vmem>>, vector<1x120xf32>
    %c211 = arith.constant 211 : index
    %c0_14 = arith.constant 0 : index
    %13 = vector.load %arg6[%c211, %c0_14] : memref<216x120xf32, #tpu.memory_space<vmem>>, vector<1x84xf32>
    %c212 = arith.constant 212 : index
    %c0_15 = arith.constant 0 : index
    %14 = vector.load %arg6[%c212, %c0_15] : memref<216x120xf32, #tpu.memory_space<vmem>>, vector<1x10xf32>
    %c0_16 = arith.constant 0 : index
    %c0_17 = arith.constant 0 : index
    %c0_18 = arith.constant 0 : index
    %15 = vector.load %arg1[%c0_16, %c0_17, %c0_18] : memref<1x32x32xf32, #tpu.memory_space<vmem>>, vector<1x28x32xf32>
    %16 = vector.shape_cast %15 : vector<1x28x32xf32> to vector<28x32xf32>
    %c0_19 = arith.constant 0 : index
    %c0_20 = arith.constant 0 : index
    %c0_21 = arith.constant 0 : index
    %17 = vector.load %arg2[%c0_19, %c0_20, %c0_21] : memref<5x32x168xf32, #tpu.memory_space<vmem>>, vector<1x32x168xf32>
    %18 = vector.shape_cast %17 : vector<1x32x168xf32> to vector<32x168xf32>
    %cst = arith.constant dense<0.000000e+00> : vector<28x168xf32>
    %19 = tpu.matmul %16, %18, %cst {dimension_numbers = #tpu.dot_dimension_numbers<[1], [0], [0], [1], [0, 0, 1, 1], [], []>} : vector<28x32xf32>, vector<32x168xf32>, vector<28x168xf32> -> vector<28x168xf32>
    %c0_22 = arith.constant 0 : index
    %c1 = arith.constant 1 : index
    %c0_23 = arith.constant 0 : index
    %20 = vector.load %arg1[%c0_22, %c1, %c0_23] : memref<1x32x32xf32, #tpu.memory_space<vmem>>, vector<1x28x32xf32>
    %21 = vector.shape_cast %20 : vector<1x28x32xf32> to vector<28x32xf32>
    %c1_24 = arith.constant 1 : index
    %c0_25 = arith.constant 0 : index
    %c0_26 = arith.constant 0 : index
    %22 = vector.load %arg2[%c1_24, %c0_25, %c0_26] : memref<5x32x168xf32, #tpu.memory_space<vmem>>, vector<1x32x168xf32>
    %23 = vector.shape_cast %22 : vector<1x32x168xf32> to vector<32x168xf32>
    %cst_27 = arith.constant dense<0.000000e+00> : vector<28x168xf32>
    %24 = tpu.matmul %21, %23, %cst_27 {dimension_numbers = #tpu.dot_dimension_numbers<[1], [0], [0], [1], [0, 0, 1, 1], [], []>} : vector<28x32xf32>, vector<32x168xf32>, vector<28x168xf32> -> vector<28x168xf32>
    %25 = arith.addf %19, %24 : vector<28x168xf32>
    %c0_28 = arith.constant 0 : index
    %c2 = arith.constant 2 : index
    %c0_29 = arith.constant 0 : index
    %26 = vector.load %arg1[%c0_28, %c2, %c0_29] : memref<1x32x32xf32, #tpu.memory_space<vmem>>, vector<1x28x32xf32>
    %27 = vector.shape_cast %26 : vector<1x28x32xf32> to vector<28x32xf32>
    %c2_30 = arith.constant 2 : index
    %c0_31 = arith.constant 0 : index
    %c0_32 = arith.constant 0 : index
    %28 = vector.load %arg2[%c2_30, %c0_31, %c0_32] : memref<5x32x168xf32, #tpu.memory_space<vmem>>, vector<1x32x168xf32>
    %29 = vector.shape_cast %28 : vector<1x32x168xf32> to vector<32x168xf32>
    %cst_33 = arith.constant dense<0.000000e+00> : vector<28x168xf32>
    %30 = tpu.matmul %27, %29, %cst_33 {dimension_numbers = #tpu.dot_dimension_numbers<[1], [0], [0], [1], [0, 0, 1, 1], [], []>} : vector<28x32xf32>, vector<32x168xf32>, vector<28x168xf32> -> vector<28x168xf32>
    %31 = arith.addf %25, %30 : vector<28x168xf32>
    %c0_34 = arith.constant 0 : index
    %c3 = arith.constant 3 : index
    %c0_35 = arith.constant 0 : index
    %32 = vector.load %arg1[%c0_34, %c3, %c0_35] : memref<1x32x32xf32, #tpu.memory_space<vmem>>, vector<1x28x32xf32>
    %33 = vector.shape_cast %32 : vector<1x28x32xf32> to vector<28x32xf32>
    %c3_36 = arith.constant 3 : index
    %c0_37 = arith.constant 0 : index
    %c0_38 = arith.constant 0 : index
    %34 = vector.load %arg2[%c3_36, %c0_37, %c0_38] : memref<5x32x168xf32, #tpu.memory_space<vmem>>, vector<1x32x168xf32>
    %35 = vector.shape_cast %34 : vector<1x32x168xf32> to vector<32x168xf32>
    %cst_39 = arith.constant dense<0.000000e+00> : vector<28x168xf32>
    %36 = tpu.matmul %33, %35, %cst_39 {dimension_numbers = #tpu.dot_dimension_numbers<[1], [0], [0], [1], [0, 0, 1, 1], [], []>} : vector<28x32xf32>, vector<32x168xf32>, vector<28x168xf32> -> vector<28x168xf32>
    %37 = arith.addf %31, %36 : vector<28x168xf32>
    %c0_40 = arith.constant 0 : index
    %c4 = arith.constant 4 : index
    %c0_41 = arith.constant 0 : index
    %38 = vector.load %arg1[%c0_40, %c4, %c0_41] : memref<1x32x32xf32, #tpu.memory_space<vmem>>, vector<1x28x32xf32>
    %39 = vector.shape_cast %38 : vector<1x28x32xf32> to vector<28x32xf32>
    %c4_42 = arith.constant 4 : index
    %c0_43 = arith.constant 0 : index
    %c0_44 = arith.constant 0 : index
    %40 = vector.load %arg2[%c4_42, %c0_43, %c0_44] : memref<5x32x168xf32, #tpu.memory_space<vmem>>, vector<1x32x168xf32>
    %41 = vector.shape_cast %40 : vector<1x32x168xf32> to vector<32x168xf32>
    %cst_45 = arith.constant dense<0.000000e+00> : vector<28x168xf32>
    %42 = tpu.matmul %39, %41, %cst_45 {dimension_numbers = #tpu.dot_dimension_numbers<[1], [0], [0], [1], [0, 0, 1, 1], [], []>} : vector<28x32xf32>, vector<32x168xf32>, vector<28x168xf32> -> vector<28x168xf32>
    %43 = arith.addf %37, %42 : vector<28x168xf32>
    %cst_46 = arith.constant dense<0.000000e+00> : vector<14x168xf32>
    %44 = tpu.matmul %4, %43, %cst_46 {dimension_numbers = #tpu.dot_dimension_numbers<[1], [0], [0], [1], [0, 0, 1, 1], [], []>} : vector<14x28xf32>, vector<28x168xf32>, vector<14x168xf32> -> vector<14x168xf32>
    %cst_47 = arith.constant dense<0.000000e+00> : vector<14x168xf32>
    %45 = tpu.matmul %5, %43, %cst_47 {dimension_numbers = #tpu.dot_dimension_numbers<[1], [0], [0], [1], [0, 0, 1, 1], [], []>} : vector<14x28xf32>, vector<28x168xf32>, vector<14x168xf32> -> vector<14x168xf32>
    %46 = arith.maximumf %44, %45 : vector<14x168xf32>
    %cst_48 = arith.constant dense<0.000000e+00> : vector<14x84xf32>
    %47 = tpu.matmul %46, %0, %cst_48 {dimension_numbers = #tpu.dot_dimension_numbers<[1], [0], [0], [1], [0, 0, 1, 1], [], []>} : vector<14x168xf32>, vector<168x84xf32>, vector<14x84xf32> -> vector<14x84xf32>
    %cst_49 = arith.constant dense<0.000000e+00> : vector<14x84xf32>
    %48 = tpu.matmul %46, %1, %cst_49 {dimension_numbers = #tpu.dot_dimension_numbers<[1], [0], [0], [1], [0, 0, 1, 1], [], []>} : vector<14x168xf32>, vector<168x84xf32>, vector<14x84xf32> -> vector<14x84xf32>
    %49 = arith.maximumf %47, %48 : vector<14x84xf32>
    %50 = vector.broadcast %10 : vector<1x84xf32> to vector<14x84xf32>
    %51 = arith.addf %49, %50 : vector<14x84xf32>
    %cst_50 = arith.constant 0.000000e+00 : f32
    %52 = vector.broadcast %cst_50 : f32 to vector<14x84xf32>
    %53 = arith.maximumf %51, %52 : vector<14x84xf32>
    %c0_51 = arith.constant 0 : index
    %c0_52 = arith.constant 0 : index
    %54 = vector.load %arg8[%c0_51, %c0_52] : memref<14x84xf32, #tpu.memory_space<vmem>>, vector<14x84xf32>
    tpu.vector_store %arg8[%c0_51, %c0_52], %53 {strides = array<i32>} : memref<14x84xf32, #tpu.memory_space<vmem>>, vector<14x84xf32>,
    %c0_53 = arith.constant 0 : index
    %c0_54 = arith.constant 0 : index
    %55 = vector.load %arg8[%c0_53, %c0_54] : memref<14x84xf32, #tpu.memory_space<vmem>>, vector<10x84xf32>
    %c0_55 = arith.constant 0 : index
    %c0_56 = arith.constant 0 : index
    %c0_57 = arith.constant 0 : index
    %56 = vector.load %arg3[%c0_55, %c0_56, %c0_57] : memref<5x84x160xf32, #tpu.memory_space<vmem>>, vector<1x84x160xf32>
    %57 = vector.shape_cast %56 : vector<1x84x160xf32> to vector<84x160xf32>
    %cst_58 = arith.constant dense<0.000000e+00> : vector<10x160xf32>
    %58 = tpu.matmul %55, %57, %cst_58 {dimension_numbers = #tpu.dot_dimension_numbers<[1], [0], [0], [1], [0, 0, 1, 1], [], []>} : vector<10x84xf32>, vector<84x160xf32>, vector<10x160xf32> -> vector<10x160xf32>
    %c1_59 = arith.constant 1 : index
    %c0_60 = arith.constant 0 : index
    %59 = vector.load %arg8[%c1_59, %c0_60] : memref<14x84xf32, #tpu.memory_space<vmem>>, vector<10x84xf32>
    %c1_61 = arith.constant 1 : index
    %c0_62 = arith.constant 0 : index
    %c0_63 = arith.constant 0 : index
    %60 = vector.load %arg3[%c1_61, %c0_62, %c0_63] : memref<5x84x160xf32, #tpu.memory_space<vmem>>, vector<1x84x160xf32>
    %61 = vector.shape_cast %60 : vector<1x84x160xf32> to vector<84x160xf32>
    %cst_64 = arith.constant dense<0.000000e+00> : vector<10x160xf32>
    %62 = tpu.matmul %59, %61, %cst_64 {dimension_numbers = #tpu.dot_dimension_numbers<[1], [0], [0], [1], [0, 0, 1, 1], [], []>} : vector<10x84xf32>, vector<84x160xf32>, vector<10x160xf32> -> vector<10x160xf32>
    %63 = arith.addf %58, %62 : vector<10x160xf32>
    %c2_65 = arith.constant 2 : index
    %c0_66 = arith.constant 0 : index
    %64 = vector.load %arg8[%c2_65, %c0_66] : memref<14x84xf32, #tpu.memory_space<vmem>>, vector<10x84xf32>
    %c2_67 = arith.constant 2 : index
    %c0_68 = arith.constant 0 : index
    %c0_69 = arith.constant 0 : index
    %65 = vector.load %arg3[%c2_67, %c0_68, %c0_69] : memref<5x84x160xf32, #tpu.memory_space<vmem>>, vector<1x84x160xf32>
    %66 = vector.shape_cast %65 : vector<1x84x160xf32> to vector<84x160xf32>
    %cst_70 = arith.constant dense<0.000000e+00> : vector<10x160xf32>
    %67 = tpu.matmul %64, %66, %cst_70 {dimension_numbers = #tpu.dot_dimension_numbers<[1], [0], [0], [1], [0, 0, 1, 1], [], []>} : vector<10x84xf32>, vector<84x160xf32>, vector<10x160xf32> -> vector<10x160xf32>
    %68 = arith.addf %63, %67 : vector<10x160xf32>
    %c3_71 = arith.constant 3 : index
    %c0_72 = arith.constant 0 : index
    %69 = vector.load %arg8[%c3_71, %c0_72] : memref<14x84xf32, #tpu.memory_space<vmem>>, vector<10x84xf32>
    %c3_73 = arith.constant 3 : index
    %c0_74 = arith.constant 0 : index
    %c0_75 = arith.constant 0 : index
    %70 = vector.load %arg3[%c3_73, %c0_74, %c0_75] : memref<5x84x160xf32, #tpu.memory_space<vmem>>, vector<1x84x160xf32>
    %71 = vector.shape_cast %70 : vector<1x84x160xf32> to vector<84x160xf32>
    %cst_76 = arith.constant dense<0.000000e+00> : vector<10x160xf32>
    %72 = tpu.matmul %69, %71, %cst_76 {dimension_numbers = #tpu.dot_dimension_numbers<[1], [0], [0], [1], [0, 0, 1, 1], [], []>} : vector<10x84xf32>, vector<84x160xf32>, vector<10x160xf32> -> vector<10x160xf32>
    %73 = arith.addf %68, %72 : vector<10x160xf32>
    %c4_77 = arith.constant 4 : index
    %c0_78 = arith.constant 0 : index
    %74 = vector.load %arg8[%c4_77, %c0_78] : memref<14x84xf32, #tpu.memory_space<vmem>>, vector<10x84xf32>
    %c4_79 = arith.constant 4 : index
    %c0_80 = arith.constant 0 : index
    %c0_81 = arith.constant 0 : index
    %75 = vector.load %arg3[%c4_79, %c0_80, %c0_81] : memref<5x84x160xf32, #tpu.memory_space<vmem>>, vector<1x84x160xf32>
    %76 = vector.shape_cast %75 : vector<1x84x160xf32> to vector<84x160xf32>
    %cst_82 = arith.constant dense<0.000000e+00> : vector<10x160xf32>
    %77 = tpu.matmul %74, %76, %cst_82 {dimension_numbers = #tpu.dot_dimension_numbers<[1], [0], [0], [1], [0, 0, 1, 1], [], []>} : vector<10x84xf32>, vector<84x160xf32>, vector<10x160xf32> -> vector<10x160xf32>
    %78 = arith.addf %73, %77 : vector<10x160xf32>
    %cst_83 = arith.constant dense<0.000000e+00> : vector<5x160xf32>
    %79 = tpu.matmul %6, %78, %cst_83 {dimension_numbers = #tpu.dot_dimension_numbers<[1], [0], [0], [1], [0, 0, 1, 1], [], []>} : vector<5x10xf32>, vector<10x160xf32>, vector<5x160xf32> -> vector<5x160xf32>
    %cst_84 = arith.constant dense<0.000000e+00> : vector<5x160xf32>
    %80 = tpu.matmul %7, %78, %cst_84 {dimension_numbers = #tpu.dot_dimension_numbers<[1], [0], [0], [1], [0, 0, 1, 1], [], []>} : vector<5x10xf32>, vector<10x160xf32>, vector<5x160xf32> -> vector<5x160xf32>
    %81 = arith.maximumf %79, %80 : vector<5x160xf32>
    %cst_85 = arith.constant dense<0.000000e+00> : vector<5x80xf32>
    %82 = tpu.matmul %81, %2, %cst_85 {dimension_numbers = #tpu.dot_dimension_numbers<[1], [0], [0], [1], [0, 0, 1, 1], [], []>} : vector<5x160xf32>, vector<160x80xf32>, vector<5x80xf32> -> vector<5x80xf32>
    %cst_86 = arith.constant dense<0.000000e+00> : vector<5x80xf32>
    %83 = tpu.matmul %81, %3, %cst_86 {dimension_numbers = #tpu.dot_dimension_numbers<[1], [0], [0], [1], [0, 0, 1, 1], [], []>} : vector<5x160xf32>, vector<160x80xf32>, vector<5x80xf32> -> vector<5x80xf32>
    %84 = arith.maximumf %82, %83 : vector<5x80xf32>
    %85 = vector.broadcast %11 : vector<1x80xf32> to vector<5x80xf32>
    %86 = arith.addf %84, %85 : vector<5x80xf32>
    %cst_87 = arith.constant 0.000000e+00 : f32
    %87 = vector.broadcast %cst_87 : f32 to vector<5x80xf32>
    %88 = arith.maximumf %86, %87 : vector<5x80xf32>
    %c0_88 = arith.constant 0 : index
    %c0_89 = arith.constant 0 : index
    %89 = vector.load %arg9[%c0_88, %c0_89] : memref<5x80xf32, #tpu.memory_space<vmem>>, vector<5x80xf32>
    tpu.vector_store %arg9[%c0_88, %c0_89], %88 {strides = array<i32>} : memref<5x80xf32, #tpu.memory_space<vmem>>, vector<5x80xf32>,
    %c0_90 = arith.constant 0 : index
    %c0_91 = arith.constant 0 : index
    %90 = vector.load %arg9[%c0_90, %c0_91] : memref<5x80xf32, #tpu.memory_space<vmem>>, vector<1x80xf32>
    %c0_92 = arith.constant 0 : index
    %c0_93 = arith.constant 0 : index
    %c0_94 = arith.constant 0 : index
    %91 = vector.load %arg4[%c0_92, %c0_93, %c0_94] : memref<5x80x120xf32, #tpu.memory_space<vmem>>, vector<1x80x120xf32>
    %92 = vector.shape_cast %91 : vector<1x80x120xf32> to vector<80x120xf32>
    %cst_95 = arith.constant dense<0.000000e+00> : vector<1x120xf32>
    %93 = tpu.matmul %90, %92, %cst_95 {dimension_numbers = #tpu.dot_dimension_numbers<[1], [0], [0], [1], [0, 0, 1, 1], [], []>} : vector<1x80xf32>, vector<80x120xf32>, vector<1x120xf32> -> vector<1x120xf32>
    %c1_96 = arith.constant 1 : index
    %c0_97 = arith.constant 0 : index
    %94 = vector.load %arg9[%c1_96, %c0_97] : memref<5x80xf32, #tpu.memory_space<vmem>>, vector<1x80xf32>
    %c1_98 = arith.constant 1 : index
    %c0_99 = arith.constant 0 : index
    %c0_100 = arith.constant 0 : index
    %95 = vector.load %arg4[%c1_98, %c0_99, %c0_100] : memref<5x80x120xf32, #tpu.memory_space<vmem>>, vector<1x80x120xf32>
    %96 = vector.shape_cast %95 : vector<1x80x120xf32> to vector<80x120xf32>
    %cst_101 = arith.constant dense<0.000000e+00> : vector<1x120xf32>
    %97 = tpu.matmul %94, %96, %cst_101 {dimension_numbers = #tpu.dot_dimension_numbers<[1], [0], [0], [1], [0, 0, 1, 1], [], []>} : vector<1x80xf32>, vector<80x120xf32>, vector<1x120xf32> -> vector<1x120xf32>
    %98 = arith.addf %93, %97 : vector<1x120xf32>
    %c2_102 = arith.constant 2 : index
    %c0_103 = arith.constant 0 : index
    %99 = vector.load %arg9[%c2_102, %c0_103] : memref<5x80xf32, #tpu.memory_space<vmem>>, vector<1x80xf32>
    %c2_104 = arith.constant 2 : index
    %c0_105 = arith.constant 0 : index
    %c0_106 = arith.constant 0 : index
    %100 = vector.load %arg4[%c2_104, %c0_105, %c0_106] : memref<5x80x120xf32, #tpu.memory_space<vmem>>, vector<1x80x120xf32>
    %101 = vector.shape_cast %100 : vector<1x80x120xf32> to vector<80x120xf32>
    %cst_107 = arith.constant dense<0.000000e+00> : vector<1x120xf32>
    %102 = tpu.matmul %99, %101, %cst_107 {dimension_numbers = #tpu.dot_dimension_numbers<[1], [0], [0], [1], [0, 0, 1, 1], [], []>} : vector<1x80xf32>, vector<80x120xf32>, vector<1x120xf32> -> vector<1x120xf32>
    %103 = arith.addf %98, %102 : vector<1x120xf32>
    %c3_108 = arith.constant 3 : index
    %c0_109 = arith.constant 0 : index
    %104 = vector.load %arg9[%c3_108, %c0_109] : memref<5x80xf32, #tpu.memory_space<vmem>>, vector<1x80xf32>
    %c3_110 = arith.constant 3 : index
    %c0_111 = arith.constant 0 : index
    %c0_112 = arith.constant 0 : index
    %105 = vector.load %arg4[%c3_110, %c0_111, %c0_112] : memref<5x80x120xf32, #tpu.memory_space<vmem>>, vector<1x80x120xf32>
    %106 = vector.shape_cast %105 : vector<1x80x120xf32> to vector<80x120xf32>
    %cst_113 = arith.constant dense<0.000000e+00> : vector<1x120xf32>
    %107 = tpu.matmul %104, %106, %cst_113 {dimension_numbers = #tpu.dot_dimension_numbers<[1], [0], [0], [1], [0, 0, 1, 1], [], []>} : vector<1x80xf32>, vector<80x120xf32>, vector<1x120xf32> -> vector<1x120xf32>
    %108 = arith.addf %103, %107 : vector<1x120xf32>
    %c4_114 = arith.constant 4 : index
    %c0_115 = arith.constant 0 : index
    %109 = vector.load %arg9[%c4_114, %c0_115] : memref<5x80xf32, #tpu.memory_space<vmem>>, vector<1x80xf32>
    %c4_116 = arith.constant 4 : index
    %c0_117 = arith.constant 0 : index
    %c0_118 = arith.constant 0 : index
    %110 = vector.load %arg4[%c4_116, %c0_117, %c0_118] : memref<5x80x120xf32, #tpu.memory_space<vmem>>, vector<1x80x120xf32>
    %111 = vector.shape_cast %110 : vector<1x80x120xf32> to vector<80x120xf32>
    %cst_119 = arith.constant dense<0.000000e+00> : vector<1x120xf32>
    %112 = tpu.matmul %109, %111, %cst_119 {dimension_numbers = #tpu.dot_dimension_numbers<[1], [0], [0], [1], [0, 0, 1, 1], [], []>} : vector<1x80xf32>, vector<80x120xf32>, vector<1x120xf32> -> vector<1x120xf32>
    %113 = arith.addf %108, %112 : vector<1x120xf32>
    %114 = arith.addf %113, %12 : vector<1x120xf32>
    %cst_120 = arith.constant 0.000000e+00 : f32
    %115 = vector.broadcast %cst_120 : f32 to vector<1x120xf32>
    %116 = arith.maximumf %114, %115 : vector<1x120xf32>
    %cst_121 = arith.constant dense<0.000000e+00> : vector<1x84xf32>
    %117 = tpu.matmul %116, %8, %cst_121 {dimension_numbers = #tpu.dot_dimension_numbers<[1], [0], [0], [1], [0, 0, 1, 1], [], []>} : vector<1x120xf32>, vector<120x84xf32>, vector<1x84xf32> -> vector<1x84xf32>
    %118 = arith.addf %117, %13 : vector<1x84xf32>
    %cst_122 = arith.constant 0.000000e+00 : f32
    %119 = vector.broadcast %cst_122 : f32 to vector<1x84xf32>
    %120 = arith.maximumf %118, %119 : vector<1x84xf32>
    %cst_123 = arith.constant dense<0.000000e+00> : vector<1x10xf32>
    %121 = tpu.matmul %120, %9, %cst_123 {dimension_numbers = #tpu.dot_dimension_numbers<[1], [0], [0], [1], [0, 0, 1, 1], [], []>} : vector<1x84xf32>, vector<84x10xf32>, vector<1x10xf32> -> vector<1x10xf32>
    %122 = arith.addf %121, %14 : vector<1x10xf32>
    %c0_124 = arith.constant 0 : index
    %c0_125 = arith.constant 0 : index
    %c0_126 = arith.constant 0 : index
    %123 = vector.load %arg7[%c0_124, %c0_125, %c0_126] : memref<1x1x10xf32, #tpu.memory_space<vmem>>, vector<1x1x10xf32>
    %124 = vector.shape_cast %123 : vector<1x1x10xf32> to vector<1x10xf32>
    %125 = vector.shape_cast %122 : vector<1x10xf32> to vector<1x1x10xf32>
    tpu.vector_store %arg7[%c0_124, %c0_125, %c0_126], %125 {strides = array<i32>} : memref<1x1x10xf32, #tpu.memory_space<vmem>>, vector<1x1x10xf32>,
    return
  }
  func.func @transform_0(%arg0: i32) -> (i32, i32, i32) {
    %c0_i32 = arith.constant 0 : i32
    %c0_i32_0 = arith.constant 0 : i32
    %c0_i32_1 = arith.constant 0 : i32
    return %arg0, %c0_i32, %c0_i32_0 : i32, i32, i32
  }
  func.func @transform_1(%arg0: i32) -> (i32, i32, i32) {
    %c0_i32 = arith.constant 0 : i32
    %c0_i32_0 = arith.constant 0 : i32
    %c0_i32_1 = arith.constant 0 : i32
    %c0_i32_2 = arith.constant 0 : i32
    return %c0_i32, %c0_i32_0, %c0_i32_1 : i32, i32, i32
  }
  func.func @transform_2(%arg0: i32) -> (i32, i32, i32) {
    %c0_i32 = arith.constant 0 : i32
    %c0_i32_0 = arith.constant 0 : i32
    %c0_i32_1 = arith.constant 0 : i32
    %c0_i32_2 = arith.constant 0 : i32
    return %c0_i32, %c0_i32_0, %c0_i32_1 : i32, i32, i32
  }
  func.func @transform_3(%arg0: i32) -> (i32, i32, i32) {
    %c0_i32 = arith.constant 0 : i32
    %c0_i32_0 = arith.constant 0 : i32
    %c0_i32_1 = arith.constant 0 : i32
    %c0_i32_2 = arith.constant 0 : i32
    return %c0_i32, %c0_i32_0, %c0_i32_1 : i32, i32, i32
  }
  func.func @transform_4(%arg0: i32) -> (i32, i32) {
    %c0_i32 = arith.constant 0 : i32
    %c0_i32_0 = arith.constant 0 : i32
    %c0_i32_1 = arith.constant 0 : i32
    return %c0_i32, %c0_i32_0 : i32, i32
  }
  func.func @transform_5(%arg0: i32) -> (i32, i32) {
    %c0_i32 = arith.constant 0 : i32
    %c0_i32_0 = arith.constant 0 : i32
    %c0_i32_1 = arith.constant 0 : i32
    return %c0_i32, %c0_i32_0 : i32, i32
  }
  func.func @transform_6(%arg0: i32) -> (i32, i32, i32) {
    %c0_i32 = arith.constant 0 : i32
    %c0_i32_0 = arith.constant 0 : i32
    %c0_i32_1 = arith.constant 0 : i32
    return %arg0, %c0_i32, %c0_i32_0 : i32, i32, i32
  }
}

</mosaic_0001>

<llo_original>
// kernel: tpu_custom_call.1
$region0: #{tpu_custom_call.1}
  #allocation0 [shape = 'u32[]', space=smem, size = 0x4, offset = 0x4, fixed_abs, tag = 'smem constant byte address 0x4 - core index']
  #allocation1 [shape = 'u32[144,128]{1,0:T(1,128)}', space=vmem, size = 0x12000, scoped, tag = 'internal scratch']
  #allocation2 [shape = 'f32[14,84]{1,0:T(8,128)}', space=vmem, size = 0x2000, scoped, tag = 'scratch operand']
  #allocation3 [shape = 'f32[5,80]{1,0:T(8,128)}', space=vmem, size = 0x1000, scoped, tag = 'scratch operand']
  %s0 = inlined_call_operand.vmem [shape: f32[2,32,32], index: 0, kind: input, shape index: {}]
  %s1 = inlined_call_operand.vmem [shape: f32[5,32,168], index: 1, kind: input, shape index: {}]
  %s2 = inlined_call_operand.vmem [shape: f32[5,84,160], index: 2, kind: input, shape index: {}]
  %s3 = inlined_call_operand.vmem [shape: f32[5,80,120], index: 3, kind: input, shape index: {}]
  %s4 = inlined_call_operand.vmem [shape: f32[704,84], index: 4, kind: input, shape index: {}]
  %s5 = inlined_call_operand.vmem [shape: f32[216,120], index: 5, kind: input, shape index: {}]
  %s6 = inlined_call_operand.hbm [shape: f32[2,1,10], index: 6, kind: output, shape index: {}]
  %s7 = sld [smem:[#allocation0]]
  $region57: #{tpu_custom_call.1} parent=0
    _
  %s9 = ssub.s32 1, %s7
  %s10 = scalar_select 0, %s9, %s7
  $region1: #{tpu_custom_call.1} parent=0
    #allocation4 [shape = 'u8[1024]{0}', space=vmem, size = 0x400, scoped, tag = 'output window, operand 0']
    #allocation5 [shape = 's32[2]{0}', space=sflag, size = 0x8, scoped, tag = 'scoped memory for tpu_custom_call.1']
    %11 = vsyncpa [#allocation5], 0
    %s12 = scalar_lea.sflag [#allocation5], 1
    %13 = vsyncpa %s12, 0
    loop: start=0, step=1, limit=4
    $region2: #{tpu_custom_call.1} parent=1 // loop_pre_header
      _
    $region3: #{tpu_custom_call.1} parent=1 // loop_header
      %s15 = sphi 0, %s19
      %p16 = scmp.ge.s32.totalorder %s15, 4
      %s25 = sphi 0, %s27
      %s28 = sphi 0, %s25
      %s29 = sphi 0, %s28
      %s45 = sphi 0, %s29
      %s49 = sphi 0, %s49
      %s51 = sphi 0, %s49
      %s52 = sphi 0, %s51
      %s66 = sphi 0, %s52
      %s70 = sphi 0, %s70
      %s72 = sphi 0, %s70
      %s73 = sphi 0, %s72
      %s87 = sphi 0, %s73
      %s91 = sphi 0, %s91
      %s93 = sphi 0, %s91
      %s94 = sphi 0, %s93
      %s108 = sphi 0, %s94
      %s112 = sphi 0, %s112
      %s114 = sphi 0, %s112
      %s115 = sphi 0, %s114
      %s129 = sphi 0, %s115
      %s133 = sphi 0, %s133
      %s135 = sphi 0, %s133
      %s136 = sphi 0, %s135
      %s150 = sphi 0, %s136
      %s156 = sphi 0, %s158
      %s159 = sphi 0, %s156
      %s160 = sphi 0, %s159
      %s176 = sphi 0, %s160
    $region4: #{tpu_custom_call.1} parent=1 // loop_header_branch
      %18 = sbr.rel (%p16) target = $region8
    $region5: #{tpu_custom_call.1} parent=1 // loop_body
      %s20 = ssub.s32 %s15, 1
      %s21 = ssub.s32 %s15, 2
      %s22 = sadd.s32 %s15, 1
      %s23 = ssub.s32 %s15, %s22
      %p24 = scmp.eq.s32.totalorder %s23, 0
      %s26 = sadd.s32 %s25, 1
      %s27 = scalar_select %p24, %s25, %s26
      %p30 = pneg %p24
      %p31 = scmp.eq.s32.totalorder %s15, 1
      %p32 = por %p30, %p31
      %p33 = scmp.ne.s32.totalorder %s25, %s28
      %p34 = scmp.eq.s32.totalorder %s15, 0
      %p35 = por %p33, %p34
      %p36 = scmp.ne.s32.totalorder %s25, %s28
      %p37 = scmp.eq.s32.totalorder %s20, 1
      %p38 = por %p36, %p37
      %p39 = scmp.ne.s32.totalorder %s28, %s29
      %p40 = scmp.eq.s32.totalorder %s20, 0
      %p41 = por %p39, %p40
      %p42 = scmp.ne.s32.totalorder %s28, %s29
      %p43 = scmp.eq.s32.totalorder %s21, 1
      %p44 = por %p42, %p43
      %p46 = scmp.ne.s32.totalorder %s29, %s45
      %p47 = scmp.eq.s32.totalorder %s21, 0
      %p48 = por %p46, %p47
      %s50 = sadd.s32 %s49, 1
      %p53 = scmp.eq.s32.totalorder %s15, 1
      %p54 = scmp.ne.s32.totalorder %s49, %s51
      %p55 = scmp.eq.s32.totalorder %s15, 0
      %p56 = por %p54, %p55
      %p57 = scmp.ne.s32.totalorder %s49, %s51
      %p58 = scmp.eq.s32.totalorder %s20, 1
      %p59 = por %p57, %p58
      %p60 = scmp.ne.s32.totalorder %s51, %s52
      %p61 = scmp.eq.s32.totalorder %s20, 0
      %p62 = por %p60, %p61
      %p63 = scmp.ne.s32.totalorder %s51, %s52
      %p64 = scmp.eq.s32.totalorder %s21, 1
      %p65 = por %p63, %p64
      %p67 = scmp.ne.s32.totalorder %s52, %s66
      %p68 = scmp.eq.s32.totalorder %s21, 0
      %p69 = por %p67, %p68
      %s71 = sadd.s32 %s70, 1
      %p74 = scmp.eq.s32.totalorder %s15, 1
      %p75 = scmp.ne.s32.totalorder %s70, %s72
      %p76 = scmp.eq.s32.totalorder %s15, 0
      %p77 = por %p75, %p76
      %p78 = scmp.ne.s32.totalorder %s70, %s72
      %p79 = scmp.eq.s32.totalorder %s20, 1
      %p80 = por %p78, %p79
      %p81 = scmp.ne.s32.totalorder %s72, %s73
      %p82 = scmp.eq.s32.totalorder %s20, 0
      %p83 = por %p81, %p82
      %p84 = scmp.ne.s32.totalorder %s72, %s73
      %p85 = scmp.eq.s32.totalorder %s21, 1
      %p86 = por %p84, %p85
      %p88 = scmp.ne.s32.totalorder %s73, %s87
      %p89 = scmp.eq.s32.totalorder %s21, 0
      %p90 = por %p88, %p89
      %s92 = sadd.s32 %s91, 1
      %p95 = scmp.eq.s32.totalorder %s15, 1
      %p96 = scmp.ne.s32.totalorder %s91, %s93
      %p97 = scmp.eq.s32.totalorder %s15, 0
      %p98 = por %p96, %p97
      %p99 = scmp.ne.s32.totalorder %s91, %s93
      %p100 = scmp.eq.s32.totalorder %s20, 1
      %p101 = por %p99, %p100
      %p102 = scmp.ne.s32.totalorder %s93, %s94
      %p103 = scmp.eq.s32.totalorder %s20, 0
      %p104 = por %p102, %p103
      %p105 = scmp.ne.s32.totalorder %s93, %s94
      %p106 = scmp.eq.s32.totalorder %s21, 1
      %p107 = por %p105, %p106
      %p109 = scmp.ne.s32.totalorder %s94, %s108
      %p110 = scmp.eq.s32.totalorder %s21, 0
      %p111 = por %p109, %p110
      %s113 = sadd.s32 %s112, 1
      %p116 = scmp.eq.s32.totalorder %s15, 1
      %p117 = scmp.ne.s32.totalorder %s112, %s114
      %p118 = scmp.eq.s32.totalorder %s15, 0
      %p119 = por %p117, %p118
      %p120 = scmp.ne.s32.totalorder %s112, %s114
      %p121 = scmp.eq.s32.totalorder %s20, 1
      %p122 = por %p120, %p121
      %p123 = scmp.ne.s32.totalorder %s114, %s115
      %p124 = scmp.eq.s32.totalorder %s20, 0
      %p125 = por %p123, %p124
      %p126 = scmp.ne.s32.totalorder %s114, %s115
      %p127 = scmp.eq.s32.totalorder %s21, 1
      %p128 = por %p126, %p127
      %p130 = scmp.ne.s32.totalorder %s115, %s129
      %p131 = scmp.eq.s32.totalorder %s21, 0
      %p132 = por %p130, %p131
      %s134 = sadd.s32 %s133, 1
      %p137 = scmp.eq.s32.totalorder %s15, 1
      %p138 = scmp.ne.s32.totalorder %s133, %s135
      %p139 = scmp.eq.s32.totalorder %s15, 0
      %p140 = por %p138, %p139
      %p141 = scmp.ne.s32.totalorder %s133, %s135
      %p142 = scmp.eq.s32.totalorder %s20, 1
      %p143 = por %p141, %p142
      %p144 = scmp.ne.s32.totalorder %s135, %s136
      %p145 = scmp.eq.s32.totalorder %s20, 0
      %p146 = por %p144, %p145
      %p147 = scmp.ne.s32.totalorder %s135, %s136
      %p148 = scmp.eq.s32.totalorder %s21, 1
      %p149 = por %p147, %p148
      %p151 = scmp.ne.s32.totalorder %s136, %s150
      %p152 = scmp.eq.s32.totalorder %s21, 0
      %p153 = por %p151, %p152
      %s154 = ssub.s32 %s15, %s22
      %p155 = scmp.eq.s32.totalorder %s154, 0
      %s157 = sadd.s32 %s156, 1
      %s158 = scalar_select %p155, %s156, %s157
      %p161 = pneg %p155
      %p162 = scmp.eq.s32.totalorder %s15, 1
      %p163 = por %p161, %p162
      %p164 = scmp.ne.s32.totalorder %s156, %s159
      %p165 = scmp.eq.s32.totalorder %s15, 0
      %p166 = por %p164, %p165
      %p167 = scmp.ne.s32.totalorder %s156, %s159
      %p168 = scmp.eq.s32.totalorder %s20, 1
      %p169 = por %p167, %p168
      %p170 = scmp.ne.s32.totalorder %s159, %s160
      %p171 = scmp.eq.s32.totalorder %s20, 0
      %p172 = por %p170, %p171
      %p173 = scmp.ne.s32.totalorder %s159, %s160
      %p174 = scmp.eq.s32.totalorder %s21, 1
      %p175 = por %p173, %p174
      %p177 = scmp.ne.s32.totalorder %s160, %s176
      %p178 = scmp.eq.s32.totalorder %s21, 0
      %p179 = por %p177, %p178
      %p180 = scmp.le.s32.totalorder 1, %s15
      %p181 = scmp.lt.s32.totalorder %s15, 3
      %p182 = pnand %p180, %p181
      %p183 = pneg %p182
      // Predicated region
      $region9: #{tpu_custom_call.1} parent=5 // pred_check
        _
      $region10: #{tpu_custom_call.1} parent=5 // pred_check_branch
        %185 = sbr.rel (%p182) target = $region12
      $region11: #{tpu_custom_call.1} parent=5 // pred_region
        %s186 = ssub.s32 %s15, 1
        // Predicated region
        $region13: #{tpu_custom_call.1} parent=11 // pred_check
          %p187 = pneg %p62
        $region14: #{tpu_custom_call.1} parent=11 // pred_check_branch
          %189 = sbr.rel (%p187) target = $region16
        $region15: #{tpu_custom_call.1} parent=11 // pred_region
          _
        $region16: #{tpu_custom_call.1} parent=11 // pred_fallthru
          _
        // Predicated region
        $region17: #{tpu_custom_call.1} parent=11 // pred_check
          %p190 = pneg %p83
        $region18: #{tpu_custom_call.1} parent=11 // pred_check_branch
          %192 = sbr.rel (%p190) target = $region20
        $region19: #{tpu_custom_call.1} parent=11 // pred_region
          _
        $region20: #{tpu_custom_call.1} parent=11 // pred_fallthru
          _
        // Predicated region
        $region21: #{tpu_custom_call.1} parent=11 // pred_check
          %p193 = pneg %p104
        $region22: #{tpu_custom_call.1} parent=11 // pred_check_branch
          %195 = sbr.rel (%p193) target = $region24
        $region23: #{tpu_custom_call.1} parent=11 // pred_region
          _
        $region24: #{tpu_custom_call.1} parent=11 // pred_fallthru
          _
        // Predicated region
        $region25: #{tpu_custom_call.1} parent=11 // pred_check
          %p196 = pneg %p125
        $region26: #{tpu_custom_call.1} parent=11 // pred_check_branch
          %198 = sbr.rel (%p196) target = $region28
        $region27: #{tpu_custom_call.1} parent=11 // pred_region
          _
        $region28: #{tpu_custom_call.1} parent=11 // pred_fallthru
          _
        // Predicated region
        $region29: #{tpu_custom_call.1} parent=11 // pred_check
          %p199 = pneg %p146
        $region30: #{tpu_custom_call.1} parent=11 // pred_check_branch
          %201 = sbr.rel (%p199) target = $region32
        $region31: #{tpu_custom_call.1} parent=11 // pred_region
          _
        $region32: #{tpu_custom_call.1} parent=11 // pred_fallthru
          _
      $region12: #{tpu_custom_call.1} parent=5 // pred_fallthru
        _
      %p202 = scmp.lt.s32.totalorder %s15, 2
      // Predicated region
      $region33: #{tpu_custom_call.1} parent=5 // pred_check
        %p203 = pneg %p202
      $region34: #{tpu_custom_call.1} parent=5 // pred_check_branch
        %205 = sbr.rel (%p203) target = $region36
      $region35: #{tpu_custom_call.1} parent=5 // pred_region
        // Predicated region
        $region37: #{tpu_custom_call.1} parent=35 // pred_check
          %p206 = pneg %p35
        $region38: #{tpu_custom_call.1} parent=35 // pred_check_branch
          %208 = sbr.rel (%p206) target = $region40
        $region39: #{tpu_custom_call.1} parent=35 // pred_region
          %p209 = scmp.lt.s32.totalorder %s15, 1
          %s210 = scalar_select %p209, %s15, 1
          %s211 = smul.addr %s210, 4
          %s212 = smul.addr %s211, 8
          %s213 = scalar_lea.vmem %s0, %s212
        $region40: #{tpu_custom_call.1} parent=35 // pred_fallthru
          _
      $region36: #{tpu_custom_call.1} parent=5 // pred_fallthru
        _
      %p214 = scmp.le.s32.totalorder 1, %s15
      %p215 = scmp.lt.s32.totalorder %s15, 3
      %p216 = pnand %p214, %p215
      %p217 = pneg %p216
      // Predicated region
      $region41: #{tpu_custom_call.1} parent=5 // pred_check
        _
      $region42: #{tpu_custom_call.1} parent=5 // pred_check_branch
        %219 = sbr.rel (%p216) target = $region44
      $region43: #{tpu_custom_call.1} parent=5 // pred_region
        %s220 = ssub.s32 %s15, 1
        %p221 = scmp.lt.s32.totalorder %s20, 1
        %s222 = scalar_select %p221, %s20, 1
        %s223 = smul.addr %s222, 4
        %s224 = smul.addr %s223, 8
        %s225 = scalar_lea.vmem %s0, %s224
        %p226 = pneg %p41
        %p227 = pneg %p38
        %p228 = pneg %p62
        %p229 = pneg %p59
        %p230 = pneg %p83
        %p231 = pneg %p80
        %p232 = pneg %p104
        %p233 = pneg %p101
        %p234 = pneg %p125
        %p235 = pneg %p122
        %p236 = pneg %p146
        %p237 = pneg %p143
        %p238 = pneg %p172
        %p239 = pneg %p169
        %s240 = sand.u32 %s159, 1
        %s241 = scalar_lea.sflag [#allocation5], %s240
        %s242 = sand.u32 %s159, 1
        %s243 = scalar_lea.vmem [#allocation4], %s242
        %p244 = scmp.lt.s32.totalorder %s20, 1
        %s245 = scalar_select %p244, %s20, 1
        %s246 = smul.addr %s245, 4
        %s247 = smul.addr %s246, 8
        %s248 = scalar_lea.vmem %s0, %s247
        %v249 = vld [vmem:[%s4] sm:$0xff]
        %v250 = vld [vmem:[%s4 + $0x8] sm:$0xff]
        %v251 = vld [vmem:[%s4 + $0x10] sm:$0xff]
        %v252 = vld [vmem:[%s4 + $0x18] sm:$0xff]
        %v253 = vld [vmem:[%s4 + $0x20] sm:$0xff]
        %v254 = vld [vmem:[%s4 + $0x28] sm:$0xff]
        %v255 = vld [vmem:[%s4 + $0x30] sm:$0xff]
        %v256 = vld [vmem:[%s4 + $0x38] sm:$0xff]
        %v257 = vld [vmem:[%s4 + $0x40] sm:$0xff]
        %v258 = vld [vmem:[%s4 + $0x48] sm:$0xff]
        %v259 = vld [vmem:[%s4 + $0x50] sm:$0xff]
        %v260 = vld [vmem:[%s4 + $0x58] sm:$0xff]
        %v261 = vld [vmem:[%s4 + $0x60] sm:$0xff]
        %v262 = vld [vmem:[%s4 + $0x68] sm:$0xff]
        %v263 = vld [vmem:[%s4 + $0x70] sm:$0xff]
        %v264 = vld [vmem:[%s4 + $0x78] sm:$0xff]
        %v265 = vld [vmem:[%s4 + $0x80] sm:$0xff]
        %v266 = vld [vmem:[%s4 + $0x88] sm:$0xff]
        %v267 = vld [vmem:[%s4 + $0x90] sm:$0xff]
        %v268 = vld [vmem:[%s4 + $0x98] sm:$0xff]
        %v269 = vld [vmem:[%s4 + $0xa0] sm:$0xff]
        %v270 = vld [vmem:[%s4 + $0xa8] sm:$0xff]
        %v271 = vld [vmem:[%s4 + $0xb0] sm:$0xff]
        %v272 = vld [vmem:[%s4 + $0xb8] sm:$0xff]
        %v273 = vld [vmem:[%s4 + $0xc0] sm:$0xff]
        %v274 = vld [vmem:[%s4 + $0xc8] sm:$0xff]
        %v275 = vld [vmem:[%s4 + $0xd0] sm:$0xff]
        %v276 = vld [vmem:[%s4 + $0xd8] sm:$0xff]
        %v277 = vld [vmem:[%s4 + $0xe0] sm:$0xff]
        %v278 = vld [vmem:[%s4 + $0xe8] sm:$0xff]
        %v279 = vld [vmem:[%s4 + $0xf0] sm:$0xff]
        %v280 = vld [vmem:[%s4 + $0xf8] sm:$0xff]
        %v281 = vld [vmem:[%s4 + $0x100] sm:$0xff]
        %v282 = vld [vmem:[%s4 + $0x108] sm:$0xff]
        %v283 = vld [vmem:[%s4 + $0x110] sm:$0xff]
        %v284 = vld [vmem:[%s4 + $0x118] sm:$0xff]
        %v285 = vld [vmem:[%s4 + $0x120] sm:$0xff]
        %v286 = vld [vmem:[%s4 + $0x128] sm:$0xff]
        %v287 = vld [vmem:[%s4 + $0x130] sm:$0xff]
        %v288 = vld [vmem:[%s4 + $0x138] sm:$0xff]
        %v289 = vld [vmem:[%s4 + $0x140] sm:$0xff]
        %v290 = vld [vmem:[%s4 + $0x148] sm:$0xff]
        %v291 = vld [vmem:[%s4 + $0x150] sm:$0xff]
        %v292 = vld [vmem:[%s4 + $0x158] sm:$0xff]
        %v293 = vld [vmem:[%s4 + $0x160] sm:$0xff]
        %v294 = vld [vmem:[%s4 + $0x168] sm:$0xff]
        %v295 = vld [vmem:[%s4 + $0x170] sm:$0xff]
        %v296 = vld [vmem:[%s4 + $0x178] sm:$0xff]
        %v297 = vld [vmem:[%s4 + $0x180] sm:$0xff]
        %v298 = vld [vmem:[%s4 + $0x188] sm:$0xff]
        %v299 = vld [vmem:[%s4 + $0x190] sm:$0xff]
        %v300 = vld [vmem:[%s4 + $0x198] sm:$0xff]
        %v301 = vld [vmem:[%s4 + $0x1a0] sm:$0xff]
        %v302 = vld [vmem:[%s4 + $0x1a8] sm:$0xff]
        %v303 = vld [vmem:[%s4 + $0x1b0] sm:$0xff]
        %v304 = vld [vmem:[%s4 + $0x1b8] sm:$0xff]
        %v305 = vld [vmem:[%s4 + $0x1c0] sm:$0xff]
        %v306 = vld [vmem:[%s4 + $0x1c8] sm:$0xff]
        %v307 = vld [vmem:[%s4 + $0x1d0] sm:$0xff]
        %v308 = vld [vmem:[%s4 + $0x1d8] sm:$0xff]
        %v309 = vld [vmem:[%s4 + $0x1e0] sm:$0xff]
        %v310 = vld [vmem:[%s4 + $0x1e8] sm:$0xff]
        %v311 = vld [vmem:[%s4 + $0x1f0] sm:$0xff]
        %v312 = vld [vmem:[%s4 + $0x1f8] sm:$0xff]
        %v313 = vld [vmem:[%s4 + $0x200] sm:$0xff]
        %v314 = vld [vmem:[%s4 + $0x208] sm:$0xff]
        %v315 = vld [vmem:[%s4 + $0x210] sm:$0xff]
        %v316 = vld [vmem:[%s4 + $0x218] sm:$0xff]
        %v317 = vld [vmem:[%s4 + $0x220] sm:$0xff]
        %v318 = vld [vmem:[%s4 + $0x228] sm:$0xff]
        %v319 = vld [vmem:[%s4 + $0x230] sm:$0xff]
        %v320 = vld [vmem:[%s4 + $0x238] sm:$0xff]
        %v321 = vld [vmem:[%s4 + $0x240] sm:$0xff]
        %v322 = vld [vmem:[%s4 + $0x248] sm:$0xff]
        %v323 = vld [vmem:[%s4 + $0x250] sm:$0xff]
        %v324 = vld [vmem:[%s4 + $0x258] sm:$0xff]
        %v325 = vld [vmem:[%s4 + $0x260] sm:$0xff]
        %v326 = vld [vmem:[%s4 + $0x268] sm:$0xff]
        %v327 = vld [vmem:[%s4 + $0x270] sm:$0xff]
        %v328 = vld [vmem:[%s4 + $0x278] sm:$0xff]
        %v329 = vld [vmem:[%s4 + $0x280] sm:$0xff]
        %v330 = vld [vmem:[%s4 + $0x288] sm:$0xff]
        %v331 = vld [vmem:[%s4 + $0x290] sm:$0xff]
        %v332 = vld [vmem:[%s4 + $0x298] sm:$0x3f]
        %v333 = vld [vmem:[%s4 + $0x2a0] sm:$0xff]
        %v334 = vld [vmem:[%s4 + $0x2a8] sm:$0x3f]
        %v335 = vld [vmem:[%s4 + $0x2b0] sm:$0x1f]
        %v336 = vld [vmem:[%s4 + $0x2b8] sm:$0x1f]
        %v337 = vld [vmem:[%s5] sm:$0xff]
        %v338 = vld [vmem:[%s5 + $0x8] sm:$0xff]
        %v339 = vld [vmem:[%s5 + $0x10] sm:$0xff]
        %v340 = vld [vmem:[%s5 + $0x18] sm:$0xff]
        %v341 = vld [vmem:[%s5 + $0x20] sm:$0xff]
        %v342 = vld [vmem:[%s5 + $0x28] sm:$0xff]
        %v343 = vld [vmem:[%s5 + $0x30] sm:$0xff]
        %v344 = vld [vmem:[%s5 + $0x38] sm:$0xff]
        %v345 = vld [vmem:[%s5 + $0x40] sm:$0xff]
        %v346 = vld [vmem:[%s5 + $0x48] sm:$0xff]
        %v347 = vld [vmem:[%s5 + $0x50] sm:$0xff]
        %v348 = vld [vmem:[%s5 + $0x58] sm:$0xff]
        %v349 = vld [vmem:[%s5 + $0x60] sm:$0xff]
        %v350 = vld [vmem:[%s5 + $0x68] sm:$0xff]
        %v351 = vld [vmem:[%s5 + $0x70] sm:$0xff]
        %v352 = vld [vmem:[%s5 + $0x78] sm:$0xff]
        %v353 = vld [vmem:[%s5 + $0x80] sm:$0xff]
        %v354 = vld [vmem:[%s5 + $0x88] sm:$0xff]
        %v355 = vld [vmem:[%s5 + $0x90] sm:$0xff]
        %v356 = vld [vmem:[%s5 + $0x98] sm:$0xff]
        %v357 = vld [vmem:[%s5 + $0xa0] sm:$0xff]
        %v358 = vld [vmem:[%s5 + $0xa8] sm:$0xff]
        %v359 = vld [vmem:[%s5 + $0xb0] sm:$0xff]
        %v360 = vld [vmem:[%s5 + $0xb8] sm:$0xff]
        %v361 = vld [vmem:[%s5 + $0xc0] sm:$0xff]
        %v362 = vld [vmem:[%s5 + $0xc8] sm:$0xf]
        %v363 = vld [vmem:[%s5 + $0xd0] sm:$0x1]
        %v364 = vld [vmem:[%s5 + $0xd1] sm:$0x1]
        %v365 = vld [vmem:[%s5 + $0xd2] sm:$0x1]
        %v366 = vld [vmem:[%s5 + $0xd3] sm:$0x1]
        %v367 = vld [vmem:[%s5 + $0xd4] sm:$0x1]
        %v368 = vld [vmem:[%s248] sm:$0xff]
        %v369 = vld [vmem:[%s248 + $0x8] sm:$0xff]
        %v370 = vld [vmem:[%s248 + $0x10] sm:$0xff]
        %v371 = vld [vmem:[%s248 + $0x18] sm:$0xf]
        %v372 = vld [vmem:[%s1] sm:$0xff]
        %v373 = vld [vmem:[%s1 + $0x8] sm:$0xff]
        %v374 = vld [vmem:[%s1 + $0x10] sm:$0xff]
        %v375 = vld [vmem:[%s1 + $0x18] sm:$0xff]
        %v376 = vld [vmem:[%s1 + $0x20] sm:$0xff]
        %v377 = vld [vmem:[%s1 + $0x28] sm:$0xff]
        %v378 = vld [vmem:[%s1 + $0x30] sm:$0xff]
        %v379 = vld [vmem:[%s1 + $0x38] sm:$0xff]
        %v380 = vld [vmem:[%s248 + $0x1] sm:$0xff]
        %v381 = vld [vmem:[%s248 + $0x9] sm:$0xff]
        %v382 = vld [vmem:[%s248 + $0x11] sm:$0xff]
        %v383 = vld [vmem:[%s248 + $0x19] sm:$0xf]
        %s384 = scalar_lea.vmem %s1, 64
        %v385 = vld [vmem:[%s384] sm:$0xff]
        %v386 = vld [vmem:[%s384 + $0x8] sm:$0xff]
        %v387 = vld [vmem:[%s384 + $0x10] sm:$0xff]
        %v388 = vld [vmem:[%s384 + $0x18] sm:$0xff]
        %v389 = vld [vmem:[%s384 + $0x20] sm:$0xff]
        %v390 = vld [vmem:[%s384 + $0x28] sm:$0xff]
        %v391 = vld [vmem:[%s384 + $0x30] sm:$0xff]
        %v392 = vld [vmem:[%s384 + $0x38] sm:$0xff]
        %vm393 = vcmask 261120
        %v395 = vsel %vm393, %v380, 0
        %v398 = vsel %vm393, %v381, 0
        %v401 = vsel %vm393, %v382, 0
        %v404 = vsel %vm393, %v383, 0
        %406 = vmatprep.subr.mxu0 0.0
        %407 = vmatpush1.msra.mxu0 0.0
        %408 = vmatprep.subr.mxu0 0.0
        %409 = vmatpush1.msra.mxu0 0.0
        %410 = vmatprep.subr.mxu0 0.0
        %411 = vmatpush1.msra.mxu0 0.0
        %412 = vmatprep.subr.mxu0 0.0
        %413 = vmatpush1.msra.mxu0 0.0
        %414 = vmatprep.subr.mxu0 0.0
        %415 = vmatpush1.msra.mxu0 0.0
        %416 = vmatprep.subr.mxu0 0.0
        %417 = vmatpush1.msra.mxu0 0.0
        %418 = vmatprep.subr.mxu0 0.0
        %419 = vmatpush1.msra.mxu0 0.0
        %420 = vmatprep.subr.mxu0 0.0
        %421 = vmatpush1.msra.mxu0 0.0
        %422 = vmatprep.subr.mxu0 0.0
        %423 = vmatpush1.msra.mxu0 0.0
        %424 = vmatprep.subr.mxu0 0.0
        %425 = vmatpush1.msra.mxu0 0.0
        %426 = vmatprep.subr.mxu0 0.0
        %427 = vmatpush1.msra.mxu0 0.0
        %428 = vmatprep.subr.mxu0 0.0
        %429 = vmatpush1.msra.mxu0 0.0
        %430 = vmatprep.subr.mxu0 %v392
        %431 = vmatpush1.msra.mxu0 %v391
        %432 = vmatprep.subr.mxu0 %v390
        %433 = vmatpush1.msra.mxu0 %v389
        %434 = vmatprep.subr.mxu0 %v388
        %435 = vmatpush1.msra.mxu0 %v387
        %436 = vmatprep.subr.mxu0 %v386
        %437 = vmatpush1.msra.mxu0 %v385
        %438 = vmatprep.subr.mxu0 0.0
        %439 = vmatpush2.msra.mxu0 0.0
        %440 = vmatprep.subr.mxu0 0.0
        %441 = vmatpush2.msra.mxu0 0.0
        %442 = vmatprep.subr.mxu0 0.0
        %443 = vmatpush2.msra.mxu0 0.0
        %444 = vmatprep.subr.mxu0 0.0
        %445 = vmatpush2.msra.mxu0 0.0
        %446 = vmatprep.subr.mxu0 0.0
        %447 = vmatpush2.msra.mxu0 0.0
        %448 = vmatprep.subr.mxu0 0.0
        %449 = vmatpush2.msra.mxu0 0.0
        %450 = vmatprep.subr.mxu0 0.0
        %451 = vmatpush2.msra.mxu0 0.0
        %452 = vmatprep.subr.mxu0 0.0
        %453 = vmatpush2.msra.mxu0 0.0
        %454 = vmatprep.subr.mxu0 0.0
        %455 = vmatpush2.msra.mxu0 0.0
        %456 = vmatprep.subr.mxu0 0.0
        %457 = vmatpush2.msra.mxu0 0.0
        %458 = vmatprep.subr.mxu0 0.0
        %459 = vmatpush2.msra.mxu0 0.0
        %460 = vmatprep.subr.mxu0 0.0
        %461 = vmatpush2.msra.mxu0 0.0
        %462 = vmatprep.subr.mxu0 0.0
        %463 = vmatpush2.msra.mxu0 0.0
        %464 = vmatprep.subr.mxu0 0.0
        %465 = vmatpush2.msra.mxu0 0.0
        %466 = vmatprep.subr.mxu0 0.0
        %467 = vmatpush2.msra.mxu0 0.0
        %468 = vmatprep.subr.mxu0 0.0
        %469 = vmatpush2.msra.mxu0 0.0
        %470 = vmatprep.mubr.f32.mxu0 0.0
        %471 = vmatmul.mubr.f32.gmra.mxu0 %v395
        %v472 = vpop.f32.mrf.mxu0
        %v473 = vadd.f32 0.0, %v472
        %v474 = vpop.f32.mrf.mxu0
        %v475 = vadd.f32 0.0, %v474
        %476 = vmatprep.mubr.f32.mxu0 0.0
        %477 = vmatmul.mubr.f32.gmra.mxu0 %v398
        %v478 = vpop.f32.mrf.mxu0
        %v479 = vadd.f32 0.0, %v478
        %v480 = vpop.f32.mrf.mxu0
        %v481 = vadd.f32 0.0, %v480
        %482 = vmatprep.mubr.f32.mxu0 0.0
        %483 = vmatmul.mubr.f32.gmra.mxu0 %v401
        %v484 = vpop.f32.mrf.mxu0
        %v485 = vadd.f32 0.0, %v484
        %v486 = vpop.f32.mrf.mxu0
        %v487 = vadd.f32 0.0, %v486
        %488 = vmatprep.mubr.f32.mxu0 0.0
        %489 = vmatmul.mubr.f32.gmra.mxu0 %v404
        %v490 = vpop.f32.mrf.mxu0
        %v491 = vadd.f32 0.0, %v490
        %v492 = vpop.f32.mrf.mxu0
        %v493 = vadd.f32 0.0, %v492
        %494 = vdwg.mxu0
        %v496 = vsel %vm393, %v368, 0
        %v499 = vsel %vm393, %v369, 0
        %v502 = vsel %vm393, %v370, 0
        %v505 = vsel %vm393, %v371, 0
        %507 = vmatprep.subr.mxu0 0.0
        %508 = vmatpush1.msra.mxu0 0.0
        %509 = vmatprep.subr.mxu0 0.0
        %510 = vmatpush1.msra.mxu0 0.0
        %511 = vmatprep.subr.mxu0 0.0
        %512 = vmatpush1.msra.mxu0 0.0
        %513 = vmatprep.subr.mxu0 0.0
        %514 = vmatpush1.msra.mxu0 0.0
        %515 = vmatprep.subr.mxu0 0.0
        %516 = vmatpush1.msra.mxu0 0.0
        %517 = vmatprep.subr.mxu0 0.0
        %518 = vmatpush1.msra.mxu0 0.0
        %519 = vmatprep.subr.mxu0 0.0
        %520 = vmatpush1.msra.mxu0 0.0
        %521 = vmatprep.subr.mxu0 0.0
        %522 = vmatpush1.msra.mxu0 0.0
        %523 = vmatprep.subr.mxu0 0.0
        %524 = vmatpush1.msra.mxu0 0.0
        %525 = vmatprep.subr.mxu0 0.0
        %526 = vmatpush1.msra.mxu0 0.0
        %527 = vmatprep.subr.mxu0 0.0
        %528 = vmatpush1.msra.mxu0 0.0
        %529 = vmatprep.subr.mxu0 0.0
        %530 = vmatpush1.msra.mxu0 0.0
        %531 = vmatprep.subr.mxu0 %v379
        %532 = vmatpush1.msra.mxu0 %v378
        %533 = vmatprep.subr.mxu0 %v377
        %534 = vmatpush1.msra.mxu0 %v376
        %535 = vmatprep.subr.mxu0 %v375
        %536 = vmatpush1.msra.mxu0 %v374
        %537 = vmatprep.subr.mxu0 %v373
        %538 = vmatpush1.msra.mxu0 %v372
        %539 = vmatprep.subr.mxu0 0.0
        %540 = vmatpush2.msra.mxu0 0.0
        %541 = vmatprep.subr.mxu0 0.0
        %542 = vmatpush2.msra.mxu0 0.0
        %543 = vmatprep.subr.mxu0 0.0
        %544 = vmatpush2.msra.mxu0 0.0
        %545 = vmatprep.subr.mxu0 0.0
        %546 = vmatpush2.msra.mxu0 0.0
        %547 = vmatprep.subr.mxu0 0.0
        %548 = vmatpush2.msra.mxu0 0.0
        %549 = vmatprep.subr.mxu0 0.0
        %550 = vmatpush2.msra.mxu0 0.0
        %551 = vmatprep.subr.mxu0 0.0
        %552 = vmatpush2.msra.mxu0 0.0
        %553 = vmatprep.subr.mxu0 0.0
        %554 = vmatpush2.msra.mxu0 0.0
        %555 = vmatprep.subr.mxu0 0.0
        %556 = vmatpush2.msra.mxu0 0.0
        %557 = vmatprep.subr.mxu0 0.0
        %558 = vmatpush2.msra.mxu0 0.0
        %559 = vmatprep.subr.mxu0 0.0
        %560 = vmatpush2.msra.mxu0 0.0
        %561 = vmatprep.subr.mxu0 0.0
        %562 = vmatpush2.msra.mxu0 0.0
        %563 = vmatprep.subr.mxu0 0.0
        %564 = vmatpush2.msra.mxu0 0.0
        %565 = vmatprep.subr.mxu0 0.0
        %566 = vmatpush2.msra.mxu0 0.0
        %567 = vmatprep.subr.mxu0 0.0
        %568 = vmatpush2.msra.mxu0 0.0
        %569 = vmatprep.subr.mxu0 0.0
        %570 = vmatpush2.msra.mxu0 0.0
        %571 = vmatprep.mubr.f32.mxu0 0.0
        %572 = vmatmul.mubr.f32.gmra.mxu0 %v496
        %v573 = vpop.f32.mrf.mxu0
        %v574 = vadd.f32 %v473, %v573
        %v575 = vpop.f32.mrf.mxu0
        %v576 = vadd.f32 %v475, %v575
        %577 = vmatprep.mubr.f32.mxu0 0.0
        %578 = vmatmul.mubr.f32.gmra.mxu0 %v499
        %v579 = vpop.f32.mrf.mxu0
        %v580 = vadd.f32 %v479, %v579
        %v581 = vpop.f32.mrf.mxu0
        %v582 = vadd.f32 %v481, %v581
        %583 = vmatprep.mubr.f32.mxu0 0.0
        %584 = vmatmul.mubr.f32.gmra.mxu0 %v502
        %v585 = vpop.f32.mrf.mxu0
        %v586 = vadd.f32 %v485, %v585
        %v587 = vpop.f32.mrf.mxu0
        %v588 = vadd.f32 %v487, %v587
        %589 = vmatprep.mubr.f32.mxu0 0.0
        %590 = vmatmul.mubr.f32.gmra.mxu0 %v505
        %v591 = vpop.f32.mrf.mxu0
        %v592 = vadd.f32 %v491, %v591
        %v593 = vpop.f32.mrf.mxu0
        %v594 = vadd.f32 %v493, %v593
        %595 = vdwg.mxu0
        %v596 = vld [vmem:[%s248 + $0x2] sm:$0xff]
        %v597 = vld [vmem:[%s248 + $0xa] sm:$0xff]
        %v598 = vld [vmem:[%s248 + $0x12] sm:$0xff]
        %v599 = vld [vmem:[%s248 + $0x1a] sm:$0xf]
        %s600 = scalar_lea.vmem %s1, 128
        %v601 = vld [vmem:[%s600] sm:$0xff]
        %v602 = vld [vmem:[%s600 + $0x8] sm:$0xff]
        %v603 = vld [vmem:[%s600 + $0x10] sm:$0xff]
        %v604 = vld [vmem:[%s600 + $0x18] sm:$0xff]
        %v605 = vld [vmem:[%s600 + $0x20] sm:$0xff]
        %v606 = vld [vmem:[%s600 + $0x28] sm:$0xff]
        %v607 = vld [vmem:[%s600 + $0x30] sm:$0xff]
        %v608 = vld [vmem:[%s600 + $0x38] sm:$0xff]
        %v610 = vsel %vm393, %v596, 0
        %v613 = vsel %vm393, %v597, 0
        %v616 = vsel %vm393, %v598, 0
        %v619 = vsel %vm393, %v599, 0
        %621 = vmatprep.subr.mxu0 0.0
        %622 = vmatpush1.msra.mxu0 0.0
        %623 = vmatprep.subr.mxu0 0.0
        %624 = vmatpush1.msra.mxu0 0.0
        %625 = vmatprep.subr.mxu0 0.0
        %626 = vmatpush1.msra.mxu0 0.0
        %627 = vmatprep.subr.mxu0 0.0
        %628 = vmatpush1.msra.mxu0 0.0
        %629 = vmatprep.subr.mxu0 0.0
        %630 = vmatpush1.msra.mxu0 0.0
        %631 = vmatprep.subr.mxu0 0.0
        %632 = vmatpush1.msra.mxu0 0.0
        %633 = vmatprep.subr.mxu0 0.0
        %634 = vmatpush1.msra.mxu0 0.0
        %635 = vmatprep.subr.mxu0 0.0
        %636 = vmatpush1.msra.mxu0 0.0
        %637 = vmatprep.subr.mxu0 0.0
        %638 = vmatpush1.msra.mxu0 0.0
        %639 = vmatprep.subr.mxu0 0.0
        %640 = vmatpush1.msra.mxu0 0.0
        %641 = vmatprep.subr.mxu0 0.0
        %642 = vmatpush1.msra.mxu0 0.0
        %643 = vmatprep.subr.mxu0 0.0
        %644 = vmatpush1.msra.mxu0 0.0
        %645 = vmatprep.subr.mxu0 %v608
        %646 = vmatpush1.msra.mxu0 %v607
        %647 = vmatprep.subr.mxu0 %v606
        %648 = vmatpush1.msra.mxu0 %v605
        %649 = vmatprep.subr.mxu0 %v604
        %650 = vmatpush1.msra.mxu0 %v603
        %651 = vmatprep.subr.mxu0 %v602
        %652 = vmatpush1.msra.mxu0 %v601
        %653 = vmatprep.subr.mxu0 0.0
        %654 = vmatpush2.msra.mxu0 0.0
        %655 = vmatprep.subr.mxu0 0.0
        %656 = vmatpush2.msra.mxu0 0.0
        %657 = vmatprep.subr.mxu0 0.0
        %658 = vmatpush2.msra.mxu0 0.0
        %659 = vmatprep.subr.mxu0 0.0
        %660 = vmatpush2.msra.mxu0 0.0
        %661 = vmatprep.subr.mxu0 0.0
        %662 = vmatpush2.msra.mxu0 0.0
        %663 = vmatprep.subr.mxu0 0.0
        %664 = vmatpush2.msra.mxu0 0.0
        %665 = vmatprep.subr.mxu0 0.0
        %666 = vmatpush2.msra.mxu0 0.0
        %667 = vmatprep.subr.mxu0 0.0
        %668 = vmatpush2.msra.mxu0 0.0
        %669 = vmatprep.subr.mxu0 0.0
        %670 = vmatpush2.msra.mxu0 0.0
        %671 = vmatprep.subr.mxu0 0.0
        %672 = vmatpush2.msra.mxu0 0.0
        %673 = vmatprep.subr.mxu0 0.0
        %674 = vmatpush2.msra.mxu0 0.0
        %675 = vmatprep.subr.mxu0 0.0
        %676 = vmatpush2.msra.mxu0 0.0
        %677 = vmatprep.subr.mxu0 0.0
        %678 = vmatpush2.msra.mxu0 0.0
        %679 = vmatprep.subr.mxu0 0.0
        %680 = vmatpush2.msra.mxu0 0.0
        %681 = vmatprep.subr.mxu0 0.0
        %682 = vmatpush2.msra.mxu0 0.0
        %683 = vmatprep.subr.mxu0 0.0
        %684 = vmatpush2.msra.mxu0 0.0
        %685 = vmatprep.mubr.f32.mxu0 0.0
        %686 = vmatmul.mubr.f32.gmra.mxu0 %v610
        %v687 = vpop.f32.mrf.mxu0
        %v688 = vadd.f32 0.0, %v687
        %v689 = vpop.f32.mrf.mxu0
        %v690 = vadd.f32 0.0, %v689
        %691 = vmatprep.mubr.f32.mxu0 0.0
        %692 = vmatmul.mubr.f32.gmra.mxu0 %v613
        %v693 = vpop.f32.mrf.mxu0
        %v694 = vadd.f32 0.0, %v693
        %v695 = vpop.f32.mrf.mxu0
        %v696 = vadd.f32 0.0, %v695
        %697 = vmatprep.mubr.f32.mxu0 0.0
        %698 = vmatmul.mubr.f32.gmra.mxu0 %v616
        %v699 = vpop.f32.mrf.mxu0
        %v700 = vadd.f32 0.0, %v699
        %v701 = vpop.f32.mrf.mxu0
        %v702 = vadd.f32 0.0, %v701
        %703 = vmatprep.mubr.f32.mxu0 0.0
        %704 = vmatmul.mubr.f32.gmra.mxu0 %v619
        %v705 = vpop.f32.mrf.mxu0
        %v706 = vadd.f32 0.0, %v705
        %v707 = vpop.f32.mrf.mxu0
        %v708 = vadd.f32 0.0, %v707
        %709 = vdwg.mxu0
        %v710 = vadd.f32 %v574, %v688
        %v711 = vadd.f32 %v576, %v690
        %v712 = vadd.f32 %v580, %v694
        %v713 = vadd.f32 %v582, %v696
        %v714 = vadd.f32 %v586, %v700
        %v715 = vadd.f32 %v588, %v702
        %v716 = vadd.f32 %v592, %v706
        %v717 = vadd.f32 %v594, %v708
        %v718 = vld [vmem:[%s248 + $0x3] sm:$0xff]
        %v719 = vld [vmem:[%s248 + $0xb] sm:$0xff]
        %v720 = vld [vmem:[%s248 + $0x13] sm:$0xff]
        %v721 = vld [vmem:[%s248 + $0x1b] sm:$0xf]
        %s722 = scalar_lea.vmem %s1, 192
        %v723 = vld [vmem:[%s722] sm:$0xff]
        %v724 = vld [vmem:[%s722 + $0x8] sm:$0xff]
        %v725 = vld [vmem:[%s722 + $0x10] sm:$0xff]
        %v726 = vld [vmem:[%s722 + $0x18] sm:$0xff]
        %v727 = vld [vmem:[%s722 + $0x20] sm:$0xff]
        %v728 = vld [vmem:[%s722 + $0x28] sm:$0xff]
        %v729 = vld [vmem:[%s722 + $0x30] sm:$0xff]
        %v730 = vld [vmem:[%s722 + $0x38] sm:$0xff]
        %v732 = vsel %vm393, %v718, 0
        %v735 = vsel %vm393, %v719, 0
        %v738 = vsel %vm393, %v720, 0
        %v741 = vsel %vm393, %v721, 0
        %743 = vmatprep.subr.mxu0 0.0
        %744 = vmatpush1.msra.mxu0 0.0
        %745 = vmatprep.subr.mxu0 0.0
        %746 = vmatpush1.msra.mxu0 0.0
        %747 = vmatprep.subr.mxu0 0.0
        %748 = vmatpush1.msra.mxu0 0.0
        %749 = vmatprep.subr.mxu0 0.0
        %750 = vmatpush1.msra.mxu0 0.0
        %751 = vmatprep.subr.mxu0 0.0
        %752 = vmatpush1.msra.mxu0 0.0
        %753 = vmatprep.subr.mxu0 0.0
        %754 = vmatpush1.msra.mxu0 0.0
        %755 = vmatprep.subr.mxu0 0.0
        %756 = vmatpush1.msra.mxu0 0.0
        %757 = vmatprep.subr.mxu0 0.0
        %758 = vmatpush1.msra.mxu0 0.0
        %759 = vmatprep.subr.mxu0 0.0
        %760 = vmatpush1.msra.mxu0 0.0
        %761 = vmatprep.subr.mxu0 0.0
        %762 = vmatpush1.msra.mxu0 0.0
        %763 = vmatprep.subr.mxu0 0.0
        %764 = vmatpush1.msra.mxu0 0.0
        %765 = vmatprep.subr.mxu0 0.0
        %766 = vmatpush1.msra.mxu0 0.0
        %767 = vmatprep.subr.mxu0 %v730
        %768 = vmatpush1.msra.mxu0 %v729
        %769 = vmatprep.subr.mxu0 %v728
        %770 = vmatpush1.msra.mxu0 %v727
        %771 = vmatprep.subr.mxu0 %v726
        %772 = vmatpush1.msra.mxu0 %v725
        %773 = vmatprep.subr.mxu0 %v724
        %774 = vmatpush1.msra.mxu0 %v723
        %775 = vmatprep.subr.mxu0 0.0
        %776 = vmatpush2.msra.mxu0 0.0
        %777 = vmatprep.subr.mxu0 0.0
        %778 = vmatpush2.msra.mxu0 0.0
        %779 = vmatprep.subr.mxu0 0.0
        %780 = vmatpush2.msra.mxu0 0.0
        %781 = vmatprep.subr.mxu0 0.0
        %782 = vmatpush2.msra.mxu0 0.0
        %783 = vmatprep.subr.mxu0 0.0
        %784 = vmatpush2.msra.mxu0 0.0
        %785 = vmatprep.subr.mxu0 0.0
        %786 = vmatpush2.msra.mxu0 0.0
        %787 = vmatprep.subr.mxu0 0.0
        %788 = vmatpush2.msra.mxu0 0.0
        %789 = vmatprep.subr.mxu0 0.0
        %790 = vmatpush2.msra.mxu0 0.0
        %791 = vmatprep.subr.mxu0 0.0
        %792 = vmatpush2.msra.mxu0 0.0
        %793 = vmatprep.subr.mxu0 0.0
        %794 = vmatpush2.msra.mxu0 0.0
        %795 = vmatprep.subr.mxu0 0.0
        %796 = vmatpush2.msra.mxu0 0.0
        %797 = vmatprep.subr.mxu0 0.0
        %798 = vmatpush2.msra.mxu0 0.0
        %799 = vmatprep.subr.mxu0 0.0
        %800 = vmatpush2.msra.mxu0 0.0
        %801 = vmatprep.subr.mxu0 0.0
        %802 = vmatpush2.msra.mxu0 0.0
        %803 = vmatprep.subr.mxu0 0.0
        %804 = vmatpush2.msra.mxu0 0.0
        %805 = vmatprep.subr.mxu0 0.0
        %806 = vmatpush2.msra.mxu0 0.0
        %807 = vmatprep.mubr.f32.mxu0 0.0
        %808 = vmatmul.mubr.f32.gmra.mxu0 %v732
        %v809 = vpop.f32.mrf.mxu0
        %v810 = vadd.f32 0.0, %v809
        %v811 = vpop.f32.mrf.mxu0
        %v812 = vadd.f32 0.0, %v811
        %813 = vmatprep.mubr.f32.mxu0 0.0
        %814 = vmatmul.mubr.f32.gmra.mxu0 %v735
        %v815 = vpop.f32.mrf.mxu0
        %v816 = vadd.f32 0.0, %v815
        %v817 = vpop.f32.mrf.mxu0
        %v818 = vadd.f32 0.0, %v817
        %819 = vmatprep.mubr.f32.mxu0 0.0
        %820 = vmatmul.mubr.f32.gmra.mxu0 %v738
        %v821 = vpop.f32.mrf.mxu0
        %v822 = vadd.f32 0.0, %v821
        %v823 = vpop.f32.mrf.mxu0
        %v824 = vadd.f32 0.0, %v823
        %825 = vmatprep.mubr.f32.mxu0 0.0
        %826 = vmatmul.mubr.f32.gmra.mxu0 %v741
        %v827 = vpop.f32.mrf.mxu0
        %v828 = vadd.f32 0.0, %v827
        %v829 = vpop.f32.mrf.mxu0
        %v830 = vadd.f32 0.0, %v829
        %831 = vdwg.mxu0
        %v832 = vadd.f32 %v710, %v810
        %v833 = vadd.f32 %v711, %v812
        %v834 = vadd.f32 %v712, %v816
        %v835 = vadd.f32 %v713, %v818
        %v836 = vadd.f32 %v714, %v822
        %v837 = vadd.f32 %v715, %v824
        %v838 = vadd.f32 %v716, %v828
        %v839 = vadd.f32 %v717, %v830
        %v840 = vld [vmem:[%s248 + $0x4] sm:$0xff]
        %v841 = vld [vmem:[%s248 + $0xc] sm:$0xff]
        %v842 = vld [vmem:[%s248 + $0x14] sm:$0xff]
        %v843 = vld [vmem:[%s248 + $0x1c] sm:$0xf]
        %s844 = scalar_lea.vmem %s1, 256
        %v845 = vld [vmem:[%s844] sm:$0xff]
        %v846 = vld [vmem:[%s844 + $0x8] sm:$0xff]
        %v847 = vld [vmem:[%s844 + $0x10] sm:$0xff]
        %v848 = vld [vmem:[%s844 + $0x18] sm:$0xff]
        %v849 = vld [vmem:[%s844 + $0x20] sm:$0xff]
        %v850 = vld [vmem:[%s844 + $0x28] sm:$0xff]
        %v851 = vld [vmem:[%s844 + $0x30] sm:$0xff]
        %v852 = vld [vmem:[%s844 + $0x38] sm:$0xff]
        %v854 = vsel %vm393, %v840, 0
        %v857 = vsel %vm393, %v841, 0
        %v860 = vsel %vm393, %v842, 0
        %v863 = vsel %vm393, %v843, 0
        %865 = vmatprep.subr.mxu0 0.0
        %866 = vmatpush1.msra.mxu0 0.0
        %867 = vmatprep.subr.mxu0 0.0
        %868 = vmatpush1.msra.mxu0 0.0
        %869 = vmatprep.subr.mxu0 0.0
        %870 = vmatpush1.msra.mxu0 0.0
        %871 = vmatprep.subr.mxu0 0.0
        %872 = vmatpush1.msra.mxu0 0.0
        %873 = vmatprep.subr.mxu0 0.0
        %874 = vmatpush1.msra.mxu0 0.0
        %875 = vmatprep.subr.mxu0 0.0
        %876 = vmatpush1.msra.mxu0 0.0
        %877 = vmatprep.subr.mxu0 0.0
        %878 = vmatpush1.msra.mxu0 0.0
        %879 = vmatprep.subr.mxu0 0.0
        %880 = vmatpush1.msra.mxu0 0.0
        %881 = vmatprep.subr.mxu0 0.0
        %882 = vmatpush1.msra.mxu0 0.0
        %883 = vmatprep.subr.mxu0 0.0
        %884 = vmatpush1.msra.mxu0 0.0
        %885 = vmatprep.subr.mxu0 0.0
        %886 = vmatpush1.msra.mxu0 0.0
        %887 = vmatprep.subr.mxu0 0.0
        %888 = vmatpush1.msra.mxu0 0.0
        %889 = vmatprep.subr.mxu0 %v852
        %890 = vmatpush1.msra.mxu0 %v851
        %891 = vmatprep.subr.mxu0 %v850
        %892 = vmatpush1.msra.mxu0 %v849
        %893 = vmatprep.subr.mxu0 %v848
        %894 = vmatpush1.msra.mxu0 %v847
        %895 = vmatprep.subr.mxu0 %v846
        %896 = vmatpush1.msra.mxu0 %v845
        %897 = vmatprep.subr.mxu0 0.0
        %898 = vmatpush2.msra.mxu0 0.0
        %899 = vmatprep.subr.mxu0 0.0
        %900 = vmatpush2.msra.mxu0 0.0
        %901 = vmatprep.subr.mxu0 0.0
        %902 = vmatpush2.msra.mxu0 0.0
        %903 = vmatprep.subr.mxu0 0.0
        %904 = vmatpush2.msra.mxu0 0.0
        %905 = vmatprep.subr.mxu0 0.0
        %906 = vmatpush2.msra.mxu0 0.0
        %907 = vmatprep.subr.mxu0 0.0
        %908 = vmatpush2.msra.mxu0 0.0
        %909 = vmatprep.subr.mxu0 0.0
        %910 = vmatpush2.msra.mxu0 0.0
        %911 = vmatprep.subr.mxu0 0.0
        %912 = vmatpush2.msra.mxu0 0.0
        %913 = vmatprep.subr.mxu0 0.0
        %914 = vmatpush2.msra.mxu0 0.0
        %915 = vmatprep.subr.mxu0 0.0
        %916 = vmatpush2.msra.mxu0 0.0
        %917 = vmatprep.subr.mxu0 0.0
        %918 = vmatpush2.msra.mxu0 0.0
        %919 = vmatprep.subr.mxu0 0.0
        %920 = vmatpush2.msra.mxu0 0.0
        %921 = vmatprep.subr.mxu0 0.0
        %922 = vmatpush2.msra.mxu0 0.0
        %923 = vmatprep.subr.mxu0 0.0
        %924 = vmatpush2.msra.mxu0 0.0
        %925 = vmatprep.subr.mxu0 0.0
        %926 = vmatpush2.msra.mxu0 0.0
        %927 = vmatprep.subr.mxu0 0.0
        %928 = vmatpush2.msra.mxu0 0.0
        %929 = vmatprep.mubr.f32.mxu0 0.0
        %930 = vmatmul.mubr.f32.gmra.mxu0 %v854
        %v931 = vpop.f32.mrf.mxu0
        %v932 = vadd.f32 0.0, %v931
        %v933 = vpop.f32.mrf.mxu0
        %v934 = vadd.f32 0.0, %v933
        %935 = vmatprep.mubr.f32.mxu0 0.0
        %936 = vmatmul.mubr.f32.gmra.mxu0 %v857
        %v937 = vpop.f32.mrf.mxu0
        %v938 = vadd.f32 0.0, %v937
        %v939 = vpop.f32.mrf.mxu0
        %v940 = vadd.f32 0.0, %v939
        %941 = vmatprep.mubr.f32.mxu0 0.0
        %942 = vmatmul.mubr.f32.gmra.mxu0 %v860
        %v943 = vpop.f32.mrf.mxu0
        %v944 = vadd.f32 0.0, %v943
        %v945 = vpop.f32.mrf.mxu0
        %v946 = vadd.f32 0.0, %v945
        %947 = vmatprep.mubr.f32.mxu0 0.0
        %948 = vmatmul.mubr.f32.gmra.mxu0 %v863
        %v949 = vpop.f32.mrf.mxu0
        %v950 = vadd.f32 0.0, %v949
        %v951 = vpop.f32.mrf.mxu0
        %v952 = vadd.f32 0.0, %v951
        %953 = vdwg.mxu0
        %v954 = vadd.f32 %v832, %v932
        %v955 = vadd.f32 %v833, %v934
        %v956 = vadd.f32 %v834, %v938
        %v957 = vadd.f32 %v835, %v940
        %v958 = vadd.f32 %v836, %v944
        %v959 = vadd.f32 %v837, %v946
        %v960 = vadd.f32 %v838, %v950
        %v961 = vadd.f32 %v839, %v952
        %vm962 = vcmask 228352
        %v964 = vsel %vm962, %v331, 0
        %v967 = vsel %vm962, %v332, 0
        %vm969 = vcmask 1043456
        %v971 = vsel %vm969, %v960, 0
        %v974 = vsel %vm969, %v961, 0
        %976 = vmatprep.subr.mxu0 0.0
        %977 = vmatpush1.msra.mxu0 0.0
        %978 = vmatprep.subr.mxu0 0.0
        %979 = vmatpush1.msra.mxu0 0.0
        %980 = vmatprep.subr.mxu0 0.0
        %981 = vmatpush1.msra.mxu0 0.0
        %982 = vmatprep.subr.mxu0 0.0
        %983 = vmatpush1.msra.mxu0 0.0
        %984 = vmatprep.subr.mxu0 0.0
        %985 = vmatpush1.msra.mxu0 0.0
        %986 = vmatprep.subr.mxu0 0.0
        %987 = vmatpush1.msra.mxu0 0.0
        %988 = vmatprep.subr.mxu0 0.0
        %989 = vmatpush1.msra.mxu0 0.0
        %990 = vmatprep.subr.mxu0 0.0
        %991 = vmatpush1.msra.mxu0 0.0
        %992 = vmatprep.subr.mxu0 0.0
        %993 = vmatpush1.msra.mxu0 0.0
        %994 = vmatprep.subr.mxu0 0.0
        %995 = vmatpush1.msra.mxu0 0.0
        %996 = vmatprep.subr.mxu0 0.0
        %997 = vmatpush1.msra.mxu0 0.0
        %998 = vmatprep.subr.mxu0 0.0
        %999 = vmatpush1.msra.mxu0 0.0
        %1000 = vmatprep.subr.mxu0 %v974
        %1001 = vmatpush1.msra.mxu0 %v971
        %1002 = vmatprep.subr.mxu0 %v959
        %1003 = vmatpush1.msra.mxu0 %v958
        %1004 = vmatprep.subr.mxu0 %v957
        %1005 = vmatpush1.msra.mxu0 %v956
        %1006 = vmatprep.subr.mxu0 %v955
        %1007 = vmatpush1.msra.mxu0 %v954
        %1008 = vmatprep.subr.mxu0 0.0
        %1009 = vmatpush2.msra.mxu0 0.0
        %1010 = vmatprep.subr.mxu0 0.0
        %1011 = vmatpush2.msra.mxu0 0.0
        %1012 = vmatprep.subr.mxu0 0.0
        %1013 = vmatpush2.msra.mxu0 0.0
        %1014 = vmatprep.subr.mxu0 0.0
        %1015 = vmatpush2.msra.mxu0 0.0
        %1016 = vmatprep.subr.mxu0 0.0
        %1017 = vmatpush2.msra.mxu0 0.0
        %1018 = vmatprep.subr.mxu0 0.0
        %1019 = vmatpush2.msra.mxu0 0.0
        %1020 = vmatprep.subr.mxu0 0.0
        %1021 = vmatpush2.msra.mxu0 0.0
        %1022 = vmatprep.subr.mxu0 0.0
        %1023 = vmatpush2.msra.mxu0 0.0
        %1024 = vmatprep.subr.mxu0 0.0
        %1025 = vmatpush2.msra.mxu0 0.0
        %1026 = vmatprep.subr.mxu0 0.0
        %1027 = vmatpush2.msra.mxu0 0.0
        %1028 = vmatprep.subr.mxu0 0.0
        %1029 = vmatpush2.msra.mxu0 0.0
        %1030 = vmatprep.subr.mxu0 0.0
        %1031 = vmatpush2.msra.mxu0 0.0
        %1032 = vmatprep.subr.mxu0 0.0
        %1033 = vmatpush2.msra.mxu0 0.0
        %1034 = vmatprep.subr.mxu0 0.0
        %1035 = vmatpush2.msra.mxu0 0.0
        %1036 = vmatprep.subr.mxu0 0.0
        %1037 = vmatpush2.msra.mxu0 0.0
        %1038 = vmatprep.subr.mxu0 0.0
        %1039 = vmatpush2.msra.mxu0 0.0
        %1040 = vmatprep.mubr.f32.mxu0 0.0
        %1041 = vmatmul.mubr.f32.gmra.mxu0 %v964
        %v1042 = vpop.f32.mrf.mxu0
        %v1043 = vadd.f32 0.0, %v1042
        %v1044 = vpop.f32.mrf.mxu0
        %v1045 = vadd.f32 0.0, %v1044
        %1046 = vmatprep.mubr.f32.mxu0 0.0
        %1047 = vmatmul.mubr.f32.gmra.mxu0 %v967
        %v1048 = vpop.f32.mrf.mxu0
        %v1049 = vadd.f32 0.0, %v1048
        %v1050 = vpop.f32.mrf.mxu0
        %v1051 = vadd.f32 0.0, %v1050
        %1052 = vdwg.mxu0
        %v1054 = vsel %vm962, %v333, 0
        %v1057 = vsel %vm962, %v334, 0
        %1059 = vmatprep.subr.mxu0 0.0
        %1060 = vmatpush1.msra.mxu0 0.0
        %1061 = vmatprep.subr.mxu0 0.0
        %1062 = vmatpush1.msra.mxu0 0.0
        %1063 = vmatprep.subr.mxu0 0.0
        %1064 = vmatpush1.msra.mxu0 0.0
        %1065 = vmatprep.subr.mxu0 0.0
        %1066 = vmatpush1.msra.mxu0 0.0
        %1067 = vmatprep.subr.mxu0 0.0
        %1068 = vmatpush1.msra.mxu0 0.0
        %1069 = vmatprep.subr.mxu0 0.0
        %1070 = vmatpush1.msra.mxu0 0.0
        %1071 = vmatprep.subr.mxu0 0.0
        %1072 = vmatpush1.msra.mxu0 0.0
        %1073 = vmatprep.subr.mxu0 0.0
        %1074 = vmatpush1.msra.mxu0 0.0
        %1075 = vmatprep.subr.mxu0 0.0
        %1076 = vmatpush1.msra.mxu0 0.0
        %1077 = vmatprep.subr.mxu0 0.0
        %1078 = vmatpush1.msra.mxu0 0.0
        %1079 = vmatprep.subr.mxu0 0.0
        %1080 = vmatpush1.msra.mxu0 0.0
        %1081 = vmatprep.subr.mxu0 0.0
        %1082 = vmatpush1.msra.mxu0 0.0
        %1083 = vmatprep.subr.mxu0 %v974
        %1084 = vmatpush1.msra.mxu0 %v971
        %1085 = vmatprep.subr.mxu0 %v959
        %1086 = vmatpush1.msra.mxu0 %v958
        %1087 = vmatprep.subr.mxu0 %v957
        %1088 = vmatpush1.msra.mxu0 %v956
        %1089 = vmatprep.subr.mxu0 %v955
        %1090 = vmatpush1.msra.mxu0 %v954
        %1091 = vmatprep.subr.mxu0 0.0
        %1092 = vmatpush2.msra.mxu0 0.0
        %1093 = vmatprep.subr.mxu0 0.0
        %1094 = vmatpush2.msra.mxu0 0.0
        %1095 = vmatprep.subr.mxu0 0.0
        %1096 = vmatpush2.msra.mxu0 0.0
        %1097 = vmatprep.subr.mxu0 0.0
        %1098 = vmatpush2.msra.mxu0 0.0
        %1099 = vmatprep.subr.mxu0 0.0
        %1100 = vmatpush2.msra.mxu0 0.0
        %1101 = vmatprep.subr.mxu0 0.0
        %1102 = vmatpush2.msra.mxu0 0.0
        %1103 = vmatprep.subr.mxu0 0.0
        %1104 = vmatpush2.msra.mxu0 0.0
        %1105 = vmatprep.subr.mxu0 0.0
        %1106 = vmatpush2.msra.mxu0 0.0
        %1107 = vmatprep.subr.mxu0 0.0
        %1108 = vmatpush2.msra.mxu0 0.0
        %1109 = vmatprep.subr.mxu0 0.0
        %1110 = vmatpush2.msra.mxu0 0.0
        %1111 = vmatprep.subr.mxu0 0.0
        %1112 = vmatpush2.msra.mxu0 0.0
        %1113 = vmatprep.subr.mxu0 0.0
        %1114 = vmatpush2.msra.mxu0 0.0
        %1115 = vmatprep.subr.mxu0 0.0
        %1116 = vmatpush2.msra.mxu0 0.0
        %1117 = vmatprep.subr.mxu0 0.0
        %1118 = vmatpush2.msra.mxu0 0.0
        %1119 = vmatprep.subr.mxu0 0.0
        %1120 = vmatpush2.msra.mxu0 0.0
        %1121 = vmatprep.subr.mxu0 0.0
        %1122 = vmatpush2.msra.mxu0 0.0
        %1123 = vmatprep.mubr.f32.mxu0 0.0
        %1124 = vmatmul.mubr.f32.gmra.mxu0 %v1054
        %v1125 = vpop.f32.mrf.mxu0
        %v1126 = vadd.f32 0.0, %v1125
        %v1127 = vpop.f32.mrf.mxu0
        %v1128 = vadd.f32 0.0, %v1127
        %1129 = vmatprep.mubr.f32.mxu0 0.0
        %1130 = vmatmul.mubr.f32.gmra.mxu0 %v1057
        %v1131 = vpop.f32.mrf.mxu0
        %v1132 = vadd.f32 0.0, %v1131
        %v1133 = vpop.f32.mrf.mxu0
        %v1134 = vadd.f32 0.0, %v1133
        %1135 = vdwg.mxu0
        %v1136 = vmax.f32 %v1043, %v1126
        %v1137 = vmax.f32 %v1045, %v1128
        %v1138 = vmax.f32 %v1049, %v1132
        %v1139 = vmax.f32 %v1051, %v1134
        %vm1140 = vcmask 326656
        %v1142 = vsel %vm1140, %v1137, 0
        %v1145 = vsel %vm1140, %v1139, 0
        %1147 = vmatprep.subr.mxu0 0.0
        %1148 = vmatpush1.msra.mxu0 %v264
        %1149 = vmatprep.subr.mxu0 0.0
        %1150 = vmatpush1.msra.mxu0 %v263
        %1151 = vmatprep.subr.mxu0 0.0
        %1152 = vmatpush1.msra.mxu0 %v262
        %1153 = vmatprep.subr.mxu0 0.0
        %1154 = vmatpush1.msra.mxu0 %v261
        %1155 = vmatprep.subr.mxu0 0.0
        %1156 = vmatpush1.msra.mxu0 %v260
        %1157 = vmatprep.subr.mxu0 0.0
        %1158 = vmatpush1.msra.mxu0 %v259
        %1159 = vmatprep.subr.mxu0 0.0
        %1160 = vmatpush1.msra.mxu0 %v258
        %1161 = vmatprep.subr.mxu0 0.0
        %1162 = vmatpush1.msra.mxu0 %v257
        %1163 = vmatprep.subr.mxu0 0.0
        %1164 = vmatpush1.msra.mxu0 %v256
        %1165 = vmatprep.subr.mxu0 0.0
        %1166 = vmatpush1.msra.mxu0 %v255
        %1167 = vmatprep.subr.mxu0 0.0
        %1168 = vmatpush1.msra.mxu0 %v254
        %1169 = vmatprep.subr.mxu0 0.0
        %1170 = vmatpush1.msra.mxu0 %v253
        %1171 = vmatprep.subr.mxu0 0.0
        %1172 = vmatpush1.msra.mxu0 %v252
        %1173 = vmatprep.subr.mxu0 0.0
        %1174 = vmatpush1.msra.mxu0 %v251
        %1175 = vmatprep.subr.mxu0 0.0
        %1176 = vmatpush1.msra.mxu0 %v250
        %1177 = vmatprep.subr.mxu0 0.0
        %1178 = vmatpush1.msra.mxu0 %v249
        %1179 = vmatprep.subr.mxu0 0.0
        %1180 = vmatpush2.msra.mxu0 0.0
        %1181 = vmatprep.subr.mxu0 0.0
        %1182 = vmatpush2.msra.mxu0 0.0
        %1183 = vmatprep.subr.mxu0 0.0
        %1184 = vmatpush2.msra.mxu0 0.0
        %1185 = vmatprep.subr.mxu0 0.0
        %1186 = vmatpush2.msra.mxu0 0.0
        %1187 = vmatprep.subr.mxu0 0.0
        %1188 = vmatpush2.msra.mxu0 0.0
        %1189 = vmatprep.subr.mxu0 0.0
        %1190 = vmatpush2.msra.mxu0 0.0
        %1191 = vmatprep.subr.mxu0 0.0
        %1192 = vmatpush2.msra.mxu0 0.0
        %1193 = vmatprep.subr.mxu0 0.0
        %1194 = vmatpush2.msra.mxu0 0.0
        %1195 = vmatprep.subr.mxu0 0.0
        %1196 = vmatpush2.msra.mxu0 0.0
        %1197 = vmatprep.subr.mxu0 0.0
        %1198 = vmatpush2.msra.mxu0 0.0
        %1199 = vmatprep.subr.mxu0 0.0
        %1200 = vmatpush2.msra.mxu0 0.0
        %1201 = vmatprep.subr.mxu0 0.0
        %1202 = vmatpush2.msra.mxu0 %v269
        %1203 = vmatprep.subr.mxu0 0.0
        %1204 = vmatpush2.msra.mxu0 %v268
        %1205 = vmatprep.subr.mxu0 0.0
        %1206 = vmatpush2.msra.mxu0 %v267
        %1207 = vmatprep.subr.mxu0 0.0
        %1208 = vmatpush2.msra.mxu0 %v266
        %1209 = vmatprep.subr.mxu0 0.0
        %1210 = vmatpush2.msra.mxu0 %v265
        %1211 = vmatprep.mubr.f32.mxu0 %v1142
        %1212 = vmatmul.mubr.f32.gmra.mxu0 %v1136
        %v1213 = vpop.f32.mrf.mxu0
        %v1214 = vadd.f32 0.0, %v1213
        %v1215 = vpop.f32.mrf.mxu0
        %1216 = vmatprep.mubr.f32.mxu0 %v1145
        %1217 = vmatmul.mubr.f32.gmra.mxu0 %v1138
        %v1218 = vpop.f32.mrf.mxu0
        %v1219 = vadd.f32 0.0, %v1218
        %v1220 = vpop.f32.mrf.mxu0
        %1221 = vdwg.mxu0
        %1222 = vmatprep.subr.mxu0 0.0
        %1223 = vmatpush1.msra.mxu0 %v285
        %1224 = vmatprep.subr.mxu0 0.0
        %1225 = vmatpush1.msra.mxu0 %v284
        %1226 = vmatprep.subr.mxu0 0.0
        %1227 = vmatpush1.msra.mxu0 %v283
        %1228 = vmatprep.subr.mxu0 0.0
        %1229 = vmatpush1.msra.mxu0 %v282
        %1230 = vmatprep.subr.mxu0 0.0
        %1231 = vmatpush1.msra.mxu0 %v281
        %1232 = vmatprep.subr.mxu0 0.0
        %1233 = vmatpush1.msra.mxu0 %v280
        %1234 = vmatprep.subr.mxu0 0.0
        %1235 = vmatpush1.msra.mxu0 %v279
        %1236 = vmatprep.subr.mxu0 0.0
        %1237 = vmatpush1.msra.mxu0 %v278
        %1238 = vmatprep.subr.mxu0 0.0
        %1239 = vmatpush1.msra.mxu0 %v277
        %1240 = vmatprep.subr.mxu0 0.0
        %1241 = vmatpush1.msra.mxu0 %v276
        %1242 = vmatprep.subr.mxu0 0.0
        %1243 = vmatpush1.msra.mxu0 %v275
        %1244 = vmatprep.subr.mxu0 0.0
        %1245 = vmatpush1.msra.mxu0 %v274
        %1246 = vmatprep.subr.mxu0 0.0
        %1247 = vmatpush1.msra.mxu0 %v273
        %1248 = vmatprep.subr.mxu0 0.0
        %1249 = vmatpush1.msra.mxu0 %v272
        %1250 = vmatprep.subr.mxu0 0.0
        %1251 = vmatpush1.msra.mxu0 %v271
        %1252 = vmatprep.subr.mxu0 0.0
        %1253 = vmatpush1.msra.mxu0 %v270
        %1254 = vmatprep.subr.mxu0 0.0
        %1255 = vmatpush2.msra.mxu0 0.0
        %1256 = vmatprep.subr.mxu0 0.0
        %1257 = vmatpush2.msra.mxu0 0.0
        %1258 = vmatprep.subr.mxu0 0.0
        %1259 = vmatpush2.msra.mxu0 0.0
        %1260 = vmatprep.subr.mxu0 0.0
        %1261 = vmatpush2.msra.mxu0 0.0
        %1262 = vmatprep.subr.mxu0 0.0
        %1263 = vmatpush2.msra.mxu0 0.0
        %1264 = vmatprep.subr.mxu0 0.0
        %1265 = vmatpush2.msra.mxu0 0.0
        %1266 = vmatprep.subr.mxu0 0.0
        %1267 = vmatpush2.msra.mxu0 0.0
        %1268 = vmatprep.subr.mxu0 0.0
        %1269 = vmatpush2.msra.mxu0 0.0
        %1270 = vmatprep.subr.mxu0 0.0
        %1271 = vmatpush2.msra.mxu0 0.0
        %1272 = vmatprep.subr.mxu0 0.0
        %1273 = vmatpush2.msra.mxu0 0.0
        %1274 = vmatprep.subr.mxu0 0.0
        %1275 = vmatpush2.msra.mxu0 0.0
        %1276 = vmatprep.subr.mxu0 0.0
        %1277 = vmatpush2.msra.mxu0 %v290
        %1278 = vmatprep.subr.mxu0 0.0
        %1279 = vmatpush2.msra.mxu0 %v289
        %1280 = vmatprep.subr.mxu0 0.0
        %1281 = vmatpush2.msra.mxu0 %v288
        %1282 = vmatprep.subr.mxu0 0.0
        %1283 = vmatpush2.msra.mxu0 %v287
        %1284 = vmatprep.subr.mxu0 0.0
        %1285 = vmatpush2.msra.mxu0 %v286
        %1286 = vmatprep.mubr.f32.mxu0 %v1142
        %1287 = vmatmul.mubr.f32.gmra.mxu0 %v1136
        %v1288 = vpop.f32.mrf.mxu0
        %v1289 = vadd.f32 0.0, %v1288
        %v1290 = vpop.f32.mrf.mxu0
        %1291 = vmatprep.mubr.f32.mxu0 %v1145
        %1292 = vmatmul.mubr.f32.gmra.mxu0 %v1138
        %v1293 = vpop.f32.mrf.mxu0
        %v1294 = vadd.f32 0.0, %v1293
        %v1295 = vpop.f32.mrf.mxu0
        %1296 = vdwg.mxu0
        %v1297 = vmax.f32 %v1214, %v1289
        %v1298 = vmax.f32 %v1219, %v1294
        %v1299 = vlaneseq
        %v1300 = vshrl.u32 %v1299, 7
        %v1301 = vsub.s32 0, %v1300
        %v1302 = vrot.slane %v363, %v1301
        %v1303 = vadd.f32 %v1297, %v1302
        %v1304 = vadd.f32 %v1298, %v1302
        %v1305 = vmax.f32 %v1303, 0.0
        %v1306 = vmax.f32 %v1304, 0.0
        %vm1307 = vcmask 687104
        %1308 = vst.msk [vmem:[#allocation2] sm:$0xff] %vm1307, %v1305
        %vm1309 = vcmask 685056
        %1310 = vst.msk [vmem:[#allocation2 + $0x8] sm:$0x3f] %vm1309, %v1306
        %v1311 = vld [vmem:[#allocation2] sm:$0xff]
        %v1312 = vld [vmem:[#allocation2 + $0x8] sm:$0x3]
        %v1313 = vld [vmem:[%s2] sm:$0xff]
        %v1314 = vld [vmem:[%s2 + $0x8] sm:$0xff]
        %v1315 = vld [vmem:[%s2 + $0x10] sm:$0xff]
        %v1316 = vld [vmem:[%s2 + $0x18] sm:$0xff]
        %v1317 = vld [vmem:[%s2 + $0x20] sm:$0xff]
        %v1318 = vld [vmem:[%s2 + $0x28] sm:$0xff]
        %v1319 = vld [vmem:[%s2 + $0x30] sm:$0xff]
        %v1320 = vld [vmem:[%s2 + $0x38] sm:$0xff]
        %v1321 = vld [vmem:[%s2 + $0x40] sm:$0xff]
        %v1322 = vld [vmem:[%s2 + $0x48] sm:$0xff]
        %v1323 = vld [vmem:[%s2 + $0x50] sm:$0xff]
        %v1324 = vld [vmem:[%s2 + $0x58] sm:$0xff]
        %v1325 = vld [vmem:[%s2 + $0x60] sm:$0xff]
        %v1326 = vld [vmem:[%s2 + $0x68] sm:$0xff]
        %v1327 = vld [vmem:[%s2 + $0x70] sm:$0xff]
        %v1328 = vld [vmem:[%s2 + $0x78] sm:$0xff]
        %v1329 = vld [vmem:[%s2 + $0x80] sm:$0xff]
        %v1330 = vld [vmem:[%s2 + $0x88] sm:$0xff]
        %v1331 = vld [vmem:[%s2 + $0x90] sm:$0xff]
        %v1332 = vld [vmem:[%s2 + $0x98] sm:$0xff]
        %v1333 = vld [vmem:[%s2 + $0xa0] sm:$0xf]
        %v1334 = vld [vmem:[%s2 + $0xa8] sm:$0xf]
        %v1335 = vld [vmem:[#allocation2 + $0x1] sm:$0xff]
        %v1336 = vld [vmem:[#allocation2 + $0x9] sm:$0x3]
        %s1337 = scalar_lea.vmem %s2, 176
        %v1338 = vld [vmem:[%s1337] sm:$0xff]
        %v1339 = vld [vmem:[%s1337 + $0x8] sm:$0xff]
        %v1340 = vld [vmem:[%s1337 + $0x10] sm:$0xff]
        %v1341 = vld [vmem:[%s1337 + $0x18] sm:$0xff]
        %v1342 = vld [vmem:[%s1337 + $0x20] sm:$0xff]
        %v1343 = vld [vmem:[%s1337 + $0x28] sm:$0xff]
        %v1344 = vld [vmem:[%s1337 + $0x30] sm:$0xff]
        %v1345 = vld [vmem:[%s1337 + $0x38] sm:$0xff]
        %v1346 = vld [vmem:[%s1337 + $0x40] sm:$0xff]
        %v1347 = vld [vmem:[%s1337 + $0x48] sm:$0xff]
        %v1348 = vld [vmem:[%s1337 + $0x50] sm:$0xff]
        %v1349 = vld [vmem:[%s1337 + $0x58] sm:$0xff]
        %v1350 = vld [vmem:[%s1337 + $0x60] sm:$0xff]
        %v1351 = vld [vmem:[%s1337 + $0x68] sm:$0xff]
        %v1352 = vld [vmem:[%s1337 + $0x70] sm:$0xff]
        %v1353 = vld [vmem:[%s1337 + $0x78] sm:$0xff]
        %v1354 = vld [vmem:[%s1337 + $0x80] sm:$0xff]
        %v1355 = vld [vmem:[%s1337 + $0x88] sm:$0xff]
        %v1356 = vld [vmem:[%s1337 + $0x90] sm:$0xff]
        %v1357 = vld [vmem:[%s1337 + $0x98] sm:$0xff]
        %v1358 = vld [vmem:[%s1337 + $0xa0] sm:$0xf]
        %v1359 = vld [vmem:[%s1337 + $0xa8] sm:$0xf]
        %v1361 = vsel %vm1307, %v1335, 0
        %v1364 = vsel %vm1307, %v1336, 0
        %v1367 = vsel %vm969, %v1358, 0
        %v1370 = vsel %vm969, %v1359, 0
        %1372 = vmatprep.subr.mxu0 0.0
        %1373 = vmatpush1.msra.mxu0 0.0
        %1374 = vmatprep.subr.mxu0 0.0
        %1375 = vmatpush1.msra.mxu0 0.0
        %1376 = vmatprep.subr.mxu0 0.0
        %1377 = vmatpush1.msra.mxu0 0.0
        %1378 = vmatprep.subr.mxu0 0.0
        %1379 = vmatpush1.msra.mxu0 0.0
        %1380 = vmatprep.subr.mxu0 0.0
        %1381 = vmatpush1.msra.mxu0 0.0
        %1382 = vmatprep.subr.mxu0 %v1370
        %1383 = vmatpush1.msra.mxu0 %v1367
        %1384 = vmatprep.subr.mxu0 %v1357
        %1385 = vmatpush1.msra.mxu0 %v1356
        %1386 = vmatprep.subr.mxu0 %v1355
        %1387 = vmatpush1.msra.mxu0 %v1354
        %1388 = vmatprep.subr.mxu0 %v1353
        %1389 = vmatpush1.msra.mxu0 %v1352
        %1390 = vmatprep.subr.mxu0 %v1351
        %1391 = vmatpush1.msra.mxu0 %v1350
        %1392 = vmatprep.subr.mxu0 %v1349
        %1393 = vmatpush1.msra.mxu0 %v1348
        %1394 = vmatprep.subr.mxu0 %v1347
        %1395 = vmatpush1.msra.mxu0 %v1346
        %1396 = vmatprep.subr.mxu0 %v1345
        %1397 = vmatpush1.msra.mxu0 %v1344
        %1398 = vmatprep.subr.mxu0 %v1343
        %1399 = vmatpush1.msra.mxu0 %v1342
        %1400 = vmatprep.subr.mxu0 %v1341
        %1401 = vmatpush1.msra.mxu0 %v1340
        %1402 = vmatprep.subr.mxu0 %v1339
        %1403 = vmatpush1.msra.mxu0 %v1338
        %1404 = vmatprep.subr.mxu0 0.0
        %1405 = vmatpush2.msra.mxu0 0.0
        %1406 = vmatprep.subr.mxu0 0.0
        %1407 = vmatpush2.msra.mxu0 0.0
        %1408 = vmatprep.subr.mxu0 0.0
        %1409 = vmatpush2.msra.mxu0 0.0
        %1410 = vmatprep.subr.mxu0 0.0
        %1411 = vmatpush2.msra.mxu0 0.0
        %1412 = vmatprep.subr.mxu0 0.0
        %1413 = vmatpush2.msra.mxu0 0.0
        %1414 = vmatprep.subr.mxu0 0.0
        %1415 = vmatpush2.msra.mxu0 0.0
        %1416 = vmatprep.subr.mxu0 0.0
        %1417 = vmatpush2.msra.mxu0 0.0
        %1418 = vmatprep.subr.mxu0 0.0
        %1419 = vmatpush2.msra.mxu0 0.0
        %1420 = vmatprep.subr.mxu0 0.0
        %1421 = vmatpush2.msra.mxu0 0.0
        %1422 = vmatprep.subr.mxu0 0.0
        %1423 = vmatpush2.msra.mxu0 0.0
        %1424 = vmatprep.subr.mxu0 0.0
        %1425 = vmatpush2.msra.mxu0 0.0
        %1426 = vmatprep.subr.mxu0 0.0
        %1427 = vmatpush2.msra.mxu0 0.0
        %1428 = vmatprep.subr.mxu0 0.0
        %1429 = vmatpush2.msra.mxu0 0.0
        %1430 = vmatprep.subr.mxu0 0.0
        %1431 = vmatpush2.msra.mxu0 0.0
        %1432 = vmatprep.subr.mxu0 0.0
        %1433 = vmatpush2.msra.mxu0 0.0
        %1434 = vmatprep.subr.mxu0 0.0
        %1435 = vmatpush2.msra.mxu0 0.0
        %1436 = vmatprep.mubr.f32.mxu0 0.0
        %1437 = vmatmul.mubr.f32.gmra.mxu0 %v1361
        %v1438 = vpop.f32.mrf.mxu0
        %v1439 = vadd.f32 0.0, %v1438
        %v1440 = vpop.f32.mrf.mxu0
        %v1441 = vadd.f32 0.0, %v1440
        %1442 = vmatprep.mubr.f32.mxu0 0.0
        %1443 = vmatmul.mubr.f32.gmra.mxu0 %v1364
        %v1444 = vpop.f32.mrf.mxu0
        %v1445 = vadd.f32 0.0, %v1444
        %v1446 = vpop.f32.mrf.mxu0
        %v1447 = vadd.f32 0.0, %v1446
        %1448 = vdwg.mxu0
        %v1450 = vsel %vm1307, %v1311, 0
        %v1453 = vsel %vm1307, %v1312, 0
        %v1456 = vsel %vm969, %v1333, 0
        %v1459 = vsel %vm969, %v1334, 0
        %1461 = vmatprep.subr.mxu0 0.0
        %1462 = vmatpush1.msra.mxu0 0.0
        %1463 = vmatprep.subr.mxu0 0.0
        %1464 = vmatpush1.msra.mxu0 0.0
        %1465 = vmatprep.subr.mxu0 0.0
        %1466 = vmatpush1.msra.mxu0 0.0
        %1467 = vmatprep.subr.mxu0 0.0
        %1468 = vmatpush1.msra.mxu0 0.0
        %1469 = vmatprep.subr.mxu0 0.0
        %1470 = vmatpush1.msra.mxu0 0.0
        %1471 = vmatprep.subr.mxu0 %v1459
        %1472 = vmatpush1.msra.mxu0 %v1456
        %1473 = vmatprep.subr.mxu0 %v1332
        %1474 = vmatpush1.msra.mxu0 %v1331
        %1475 = vmatprep.subr.mxu0 %v1330
        %1476 = vmatpush1.msra.mxu0 %v1329
        %1477 = vmatprep.subr.mxu0 %v1328
        %1478 = vmatpush1.msra.mxu0 %v1327
        %1479 = vmatprep.subr.mxu0 %v1326
        %1480 = vmatpush1.msra.mxu0 %v1325
        %1481 = vmatprep.subr.mxu0 %v1324
        %1482 = vmatpush1.msra.mxu0 %v1323
        %1483 = vmatprep.subr.mxu0 %v1322
        %1484 = vmatpush1.msra.mxu0 %v1321
        %1485 = vmatprep.subr.mxu0 %v1320
        %1486 = vmatpush1.msra.mxu0 %v1319
        %1487 = vmatprep.subr.mxu0 %v1318
        %1488 = vmatpush1.msra.mxu0 %v1317
        %1489 = vmatprep.subr.mxu0 %v1316
        %1490 = vmatpush1.msra.mxu0 %v1315
        %1491 = vmatprep.subr.mxu0 %v1314
        %1492 = vmatpush1.msra.mxu0 %v1313
        %1493 = vmatprep.subr.mxu0 0.0
        %1494 = vmatpush2.msra.mxu0 0.0
        %1495 = vmatprep.subr.mxu0 0.0
        %1496 = vmatpush2.msra.mxu0 0.0
        %1497 = vmatprep.subr.mxu0 0.0
        %1498 = vmatpush2.msra.mxu0 0.0
        %1499 = vmatprep.subr.mxu0 0.0
        %1500 = vmatpush2.msra.mxu0 0.0
        %1501 = vmatprep.subr.mxu0 0.0
        %1502 = vmatpush2.msra.mxu0 0.0
        %1503 = vmatprep.subr.mxu0 0.0
        %1504 = vmatpush2.msra.mxu0 0.0
        %1505 = vmatprep.subr.mxu0 0.0
        %1506 = vmatpush2.msra.mxu0 0.0
        %1507 = vmatprep.subr.mxu0 0.0
        %1508 = vmatpush2.msra.mxu0 0.0
        %1509 = vmatprep.subr.mxu0 0.0
        %1510 = vmatpush2.msra.mxu0 0.0
        %1511 = vmatprep.subr.mxu0 0.0
        %1512 = vmatpush2.msra.mxu0 0.0
        %1513 = vmatprep.subr.mxu0 0.0
        %1514 = vmatpush2.msra.mxu0 0.0
        %1515 = vmatprep.subr.mxu0 0.0
        %1516 = vmatpush2.msra.mxu0 0.0
        %1517 = vmatprep.subr.mxu0 0.0
        %1518 = vmatpush2.msra.mxu0 0.0
        %1519 = vmatprep.subr.mxu0 0.0
        %1520 = vmatpush2.msra.mxu0 0.0
        %1521 = vmatprep.subr.mxu0 0.0
        %1522 = vmatpush2.msra.mxu0 0.0
        %1523 = vmatprep.subr.mxu0 0.0
        %1524 = vmatpush2.msra.mxu0 0.0
        %1525 = vmatprep.mubr.f32.mxu0 0.0
        %1526 = vmatmul.mubr.f32.gmra.mxu0 %v1450
        %v1527 = vpop.f32.mrf.mxu0
        %v1528 = vadd.f32 %v1439, %v1527
        %v1529 = vpop.f32.mrf.mxu0
        %v1530 = vadd.f32 %v1441, %v1529
        %1531 = vmatprep.mubr.f32.mxu0 0.0
        %1532 = vmatmul.mubr.f32.gmra.mxu0 %v1453
        %v1533 = vpop.f32.mrf.mxu0
        %v1534 = vadd.f32 %v1445, %v1533
        %v1535 = vpop.f32.mrf.mxu0
        %v1536 = vadd.f32 %v1447, %v1535
        %1537 = vdwg.mxu0
        %v1538 = vld [vmem:[#allocation2 + $0x2] sm:$0xff]
        %v1539 = vld [vmem:[#allocation2 + $0xa] sm:$0x3]
        %s1540 = scalar_lea.vmem %s2, 352
        %v1541 = vld [vmem:[%s1540] sm:$0xff]
        %v1542 = vld [vmem:[%s1540 + $0x8] sm:$0xff]
        %v1543 = vld [vmem:[%s1540 + $0x10] sm:$0xff]
        %v1544 = vld [vmem:[%s1540 + $0x18] sm:$0xff]
        %v1545 = vld [vmem:[%s1540 + $0x20] sm:$0xff]
        %v1546 = vld [vmem:[%s1540 + $0x28] sm:$0xff]
        %v1547 = vld [vmem:[%s1540 + $0x30] sm:$0xff]
        %v1548 = vld [vmem:[%s1540 + $0x38] sm:$0xff]
        %v1549 = vld [vmem:[%s1540 + $0x40] sm:$0xff]
        %v1550 = vld [vmem:[%s1540 + $0x48] sm:$0xff]
        %v1551 = vld [vmem:[%s1540 + $0x50] sm:$0xff]
        %v1552 = vld [vmem:[%s1540 + $0x58] sm:$0xff]
        %v1553 = vld [vmem:[%s1540 + $0x60] sm:$0xff]
        %v1554 = vld [vmem:[%s1540 + $0x68] sm:$0xff]
        %v1555 = vld [vmem:[%s1540 + $0x70] sm:$0xff]
        %v1556 = vld [vmem:[%s1540 + $0x78] sm:$0xff]
        %v1557 = vld [vmem:[%s1540 + $0x80] sm:$0xff]
        %v1558 = vld [vmem:[%s1540 + $0x88] sm:$0xff]
        %v1559 = vld [vmem:[%s1540 + $0x90] sm:$0xff]
        %v1560 = vld [vmem:[%s1540 + $0x98] sm:$0xff]
        %v1561 = vld [vmem:[%s1540 + $0xa0] sm:$0xf]
        %v1562 = vld [vmem:[%s1540 + $0xa8] sm:$0xf]
        %v1564 = vsel %vm1307, %v1538, 0
        %v1567 = vsel %vm1307, %v1539, 0
        %v1570 = vsel %vm969, %v1561, 0
        %v1573 = vsel %vm969, %v1562, 0
        %1575 = vmatprep.subr.mxu0 0.0
        %1576 = vmatpush1.msra.mxu0 0.0
        %1577 = vmatprep.subr.mxu0 0.0
        %1578 = vmatpush1.msra.mxu0 0.0
        %1579 = vmatprep.subr.mxu0 0.0
        %1580 = vmatpush1.msra.mxu0 0.0
        %1581 = vmatprep.subr.mxu0 0.0
        %1582 = vmatpush1.msra.mxu0 0.0
        %1583 = vmatprep.subr.mxu0 0.0
        %1584 = vmatpush1.msra.mxu0 0.0
        %1585 = vmatprep.subr.mxu0 %v1573
        %1586 = vmatpush1.msra.mxu0 %v1570
        %1587 = vmatprep.subr.mxu0 %v1560
        %1588 = vmatpush1.msra.mxu0 %v1559
        %1589 = vmatprep.subr.mxu0 %v1558
        %1590 = vmatpush1.msra.mxu0 %v1557
        %1591 = vmatprep.subr.mxu0 %v1556
        %1592 = vmatpush1.msra.mxu0 %v1555
        %1593 = vmatprep.subr.mxu0 %v1554
        %1594 = vmatpush1.msra.mxu0 %v1553
        %1595 = vmatprep.subr.mxu0 %v1552
        %1596 = vmatpush1.msra.mxu0 %v1551
        %1597 = vmatprep.subr.mxu0 %v1550
        %1598 = vmatpush1.msra.mxu0 %v1549
        %1599 = vmatprep.subr.mxu0 %v1548
        %1600 = vmatpush1.msra.mxu0 %v1547
        %1601 = vmatprep.subr.mxu0 %v1546
        %1602 = vmatpush1.msra.mxu0 %v1545
        %1603 = vmatprep.subr.mxu0 %v1544
        %1604 = vmatpush1.msra.mxu0 %v1543
        %1605 = vmatprep.subr.mxu0 %v1542
        %1606 = vmatpush1.msra.mxu0 %v1541
        %1607 = vmatprep.subr.mxu0 0.0
        %1608 = vmatpush2.msra.mxu0 0.0
        %1609 = vmatprep.subr.mxu0 0.0
        %1610 = vmatpush2.msra.mxu0 0.0
        %1611 = vmatprep.subr.mxu0 0.0
        %1612 = vmatpush2.msra.mxu0 0.0
        %1613 = vmatprep.subr.mxu0 0.0
        %1614 = vmatpush2.msra.mxu0 0.0
        %1615 = vmatprep.subr.mxu0 0.0
        %1616 = vmatpush2.msra.mxu0 0.0
        %1617 = vmatprep.subr.mxu0 0.0
        %1618 = vmatpush2.msra.mxu0 0.0
        %1619 = vmatprep.subr.mxu0 0.0
        %1620 = vmatpush2.msra.mxu0 0.0
        %1621 = vmatprep.subr.mxu0 0.0
        %1622 = vmatpush2.msra.mxu0 0.0
        %1623 = vmatprep.subr.mxu0 0.0
        %1624 = vmatpush2.msra.mxu0 0.0
        %1625 = vmatprep.subr.mxu0 0.0
        %1626 = vmatpush2.msra.mxu0 0.0
        %1627 = vmatprep.subr.mxu0 0.0
        %1628 = vmatpush2.msra.mxu0 0.0
        %1629 = vmatprep.subr.mxu0 0.0
        %1630 = vmatpush2.msra.mxu0 0.0
        %1631 = vmatprep.subr.mxu0 0.0
        %1632 = vmatpush2.msra.mxu0 0.0
        %1633 = vmatprep.subr.mxu0 0.0
        %1634 = vmatpush2.msra.mxu0 0.0
        %1635 = vmatprep.subr.mxu0 0.0
        %1636 = vmatpush2.msra.mxu0 0.0
        %1637 = vmatprep.subr.mxu0 0.0
        %1638 = vmatpush2.msra.mxu0 0.0
        %1639 = vmatprep.mubr.f32.mxu0 0.0
        %1640 = vmatmul.mubr.f32.gmra.mxu0 %v1564
        %v1641 = vpop.f32.mrf.mxu0
        %v1642 = vadd.f32 0.0, %v1641
        %v1643 = vpop.f32.mrf.mxu0
        %v1644 = vadd.f32 0.0, %v1643
        %1645 = vmatprep.mubr.f32.mxu0 0.0
        %1646 = vmatmul.mubr.f32.gmra.mxu0 %v1567
        %v1647 = vpop.f32.mrf.mxu0
        %v1648 = vadd.f32 0.0, %v1647
        %v1649 = vpop.f32.mrf.mxu0
        %v1650 = vadd.f32 0.0, %v1649
        %1651 = vdwg.mxu0
        %v1652 = vadd.f32 %v1528, %v1642
        %v1653 = vadd.f32 %v1530, %v1644
        %v1654 = vadd.f32 %v1534, %v1648
        %v1655 = vadd.f32 %v1536, %v1650
        %v1656 = vld [vmem:[#allocation2 + $0x3] sm:$0xff]
        %v1657 = vld [vmem:[#allocation2 + $0xb] sm:$0x3]
        %s1658 = scalar_lea.vmem %s2, 528
        %v1659 = vld [vmem:[%s1658] sm:$0xff]
        %v1660 = vld [vmem:[%s1658 + $0x8] sm:$0xff]
        %v1661 = vld [vmem:[%s1658 + $0x10] sm:$0xff]
        %v1662 = vld [vmem:[%s1658 + $0x18] sm:$0xff]
        %v1663 = vld [vmem:[%s1658 + $0x20] sm:$0xff]
        %v1664 = vld [vmem:[%s1658 + $0x28] sm:$0xff]
        %v1665 = vld [vmem:[%s1658 + $0x30] sm:$0xff]
        %v1666 = vld [vmem:[%s1658 + $0x38] sm:$0xff]
        %v1667 = vld [vmem:[%s1658 + $0x40] sm:$0xff]
        %v1668 = vld [vmem:[%s1658 + $0x48] sm:$0xff]
        %v1669 = vld [vmem:[%s1658 + $0x50] sm:$0xff]
        %v1670 = vld [vmem:[%s1658 + $0x58] sm:$0xff]
        %v1671 = vld [vmem:[%s1658 + $0x60] sm:$0xff]
        %v1672 = vld [vmem:[%s1658 + $0x68] sm:$0xff]
        %v1673 = vld [vmem:[%s1658 + $0x70] sm:$0xff]
        %v1674 = vld [vmem:[%s1658 + $0x78] sm:$0xff]
        %v1675 = vld [vmem:[%s1658 + $0x80] sm:$0xff]
        %v1676 = vld [vmem:[%s1658 + $0x88] sm:$0xff]
        %v1677 = vld [vmem:[%s1658 + $0x90] sm:$0xff]
        %v1678 = vld [vmem:[%s1658 + $0x98] sm:$0xff]
        %v1679 = vld [vmem:[%s1658 + $0xa0] sm:$0xf]
        %v1680 = vld [vmem:[%s1658 + $0xa8] sm:$0xf]
        %v1682 = vsel %vm1307, %v1656, 0
        %v1685 = vsel %vm1307, %v1657, 0
        %v1688 = vsel %vm969, %v1679, 0
        %v1691 = vsel %vm969, %v1680, 0
        %1693 = vmatprep.subr.mxu0 0.0
        %1694 = vmatpush1.msra.mxu0 0.0
        %1695 = vmatprep.subr.mxu0 0.0
        %1696 = vmatpush1.msra.mxu0 0.0
        %1697 = vmatprep.subr.mxu0 0.0
        %1698 = vmatpush1.msra.mxu0 0.0
        %1699 = vmatprep.subr.mxu0 0.0
        %1700 = vmatpush1.msra.mxu0 0.0
        %1701 = vmatprep.subr.mxu0 0.0
        %1702 = vmatpush1.msra.mxu0 0.0
        %1703 = vmatprep.subr.mxu0 %v1691
        %1704 = vmatpush1.msra.mxu0 %v1688
        %1705 = vmatprep.subr.mxu0 %v1678
        %1706 = vmatpush1.msra.mxu0 %v1677
        %1707 = vmatprep.subr.mxu0 %v1676
        %1708 = vmatpush1.msra.mxu0 %v1675
        %1709 = vmatprep.subr.mxu0 %v1674
        %1710 = vmatpush1.msra.mxu0 %v1673
        %1711 = vmatprep.subr.mxu0 %v1672
        %1712 = vmatpush1.msra.mxu0 %v1671
        %1713 = vmatprep.subr.mxu0 %v1670
        %1714 = vmatpush1.msra.mxu0 %v1669
        %1715 = vmatprep.subr.mxu0 %v1668
        %1716 = vmatpush1.msra.mxu0 %v1667
        %1717 = vmatprep.subr.mxu0 %v1666
        %1718 = vmatpush1.msra.mxu0 %v1665
        %1719 = vmatprep.subr.mxu0 %v1664
        %1720 = vmatpush1.msra.mxu0 %v1663
        %1721 = vmatprep.subr.mxu0 %v1662
        %1722 = vmatpush1.msra.mxu0 %v1661
        %1723 = vmatprep.subr.mxu0 %v1660
        %1724 = vmatpush1.msra.mxu0 %v1659
        %1725 = vmatprep.subr.mxu0 0.0
        %1726 = vmatpush2.msra.mxu0 0.0
        %1727 = vmatprep.subr.mxu0 0.0
        %1728 = vmatpush2.msra.mxu0 0.0
        %1729 = vmatprep.subr.mxu0 0.0
        %1730 = vmatpush2.msra.mxu0 0.0
        %1731 = vmatprep.subr.mxu0 0.0
        %1732 = vmatpush2.msra.mxu0 0.0
        %1733 = vmatprep.subr.mxu0 0.0
        %1734 = vmatpush2.msra.mxu0 0.0
        %1735 = vmatprep.subr.mxu0 0.0
        %1736 = vmatpush2.msra.mxu0 0.0
        %1737 = vmatprep.subr.mxu0 0.0
        %1738 = vmatpush2.msra.mxu0 0.0
        %1739 = vmatprep.subr.mxu0 0.0
        %1740 = vmatpush2.msra.mxu0 0.0
        %1741 = vmatprep.subr.mxu0 0.0
        %1742 = vmatpush2.msra.mxu0 0.0
        %1743 = vmatprep.subr.mxu0 0.0
        %1744 = vmatpush2.msra.mxu0 0.0
        %1745 = vmatprep.subr.mxu0 0.0
        %1746 = vmatpush2.msra.mxu0 0.0
        %1747 = vmatprep.subr.mxu0 0.0
        %1748 = vmatpush2.msra.mxu0 0.0
        %1749 = vmatprep.subr.mxu0 0.0
        %1750 = vmatpush2.msra.mxu0 0.0
        %1751 = vmatprep.subr.mxu0 0.0
        %1752 = vmatpush2.msra.mxu0 0.0
        %1753 = vmatprep.subr.mxu0 0.0
        %1754 = vmatpush2.msra.mxu0 0.0
        %1755 = vmatprep.subr.mxu0 0.0
        %1756 = vmatpush2.msra.mxu0 0.0
        %1757 = vmatprep.mubr.f32.mxu0 0.0
        %1758 = vmatmul.mubr.f32.gmra.mxu0 %v1682
        %v1759 = vpop.f32.mrf.mxu0
        %v1760 = vadd.f32 0.0, %v1759
        %v1761 = vpop.f32.mrf.mxu0
        %v1762 = vadd.f32 0.0, %v1761
        %1763 = vmatprep.mubr.f32.mxu0 0.0
        %1764 = vmatmul.mubr.f32.gmra.mxu0 %v1685
        %v1765 = vpop.f32.mrf.mxu0
        %v1766 = vadd.f32 0.0, %v1765
        %v1767 = vpop.f32.mrf.mxu0
        %v1768 = vadd.f32 0.0, %v1767
        %1769 = vdwg.mxu0
        %v1770 = vadd.f32 %v1652, %v1760
        %v1771 = vadd.f32 %v1653, %v1762
        %v1772 = vadd.f32 %v1654, %v1766
        %v1773 = vadd.f32 %v1655, %v1768
        %v1774 = vld [vmem:[#allocation2 + $0x4] sm:$0xff]
        %v1775 = vld [vmem:[#allocation2 + $0xc] sm:$0x3]
        %s1776 = scalar_lea.vmem %s2, 704
        %v1777 = vld [vmem:[%s1776] sm:$0xff]
        %v1778 = vld [vmem:[%s1776 + $0x8] sm:$0xff]
        %v1779 = vld [vmem:[%s1776 + $0x10] sm:$0xff]
        %v1780 = vld [vmem:[%s1776 + $0x18] sm:$0xff]
        %v1781 = vld [vmem:[%s1776 + $0x20] sm:$0xff]
        %v1782 = vld [vmem:[%s1776 + $0x28] sm:$0xff]
        %v1783 = vld [vmem:[%s1776 + $0x30] sm:$0xff]
        %v1784 = vld [vmem:[%s1776 + $0x38] sm:$0xff]
        %v1785 = vld [vmem:[%s1776 + $0x40] sm:$0xff]
        %v1786 = vld [vmem:[%s1776 + $0x48] sm:$0xff]
        %v1787 = vld [vmem:[%s1776 + $0x50] sm:$0xff]
        %v1788 = vld [vmem:[%s1776 + $0x58] sm:$0xff]
        %v1789 = vld [vmem:[%s1776 + $0x60] sm:$0xff]
        %v1790 = vld [vmem:[%s1776 + $0x68] sm:$0xff]
        %v1791 = vld [vmem:[%s1776 + $0x70] sm:$0xff]
        %v1792 = vld [vmem:[%s1776 + $0x78] sm:$0xff]
        %v1793 = vld [vmem:[%s1776 + $0x80] sm:$0xff]
        %v1794 = vld [vmem:[%s1776 + $0x88] sm:$0xff]
        %v1795 = vld [vmem:[%s1776 + $0x90] sm:$0xff]
        %v1796 = vld [vmem:[%s1776 + $0x98] sm:$0xff]
        %v1797 = vld [vmem:[%s1776 + $0xa0] sm:$0xf]
        %v1798 = vld [vmem:[%s1776 + $0xa8] sm:$0xf]
        %v1800 = vsel %vm1307, %v1774, 0
        %v1803 = vsel %vm1307, %v1775, 0
        %v1806 = vsel %vm969, %v1797, 0
        %v1809 = vsel %vm969, %v1798, 0
        %1811 = vmatprep.subr.mxu0 0.0
        %1812 = vmatpush1.msra.mxu0 0.0
        %1813 = vmatprep.subr.mxu0 0.0
        %1814 = vmatpush1.msra.mxu0 0.0
        %1815 = vmatprep.subr.mxu0 0.0
        %1816 = vmatpush1.msra.mxu0 0.0
        %1817 = vmatprep.subr.mxu0 0.0
        %1818 = vmatpush1.msra.mxu0 0.0
        %1819 = vmatprep.subr.mxu0 0.0
        %1820 = vmatpush1.msra.mxu0 0.0
        %1821 = vmatprep.subr.mxu0 %v1809
        %1822 = vmatpush1.msra.mxu0 %v1806
        %1823 = vmatprep.subr.mxu0 %v1796
        %1824 = vmatpush1.msra.mxu0 %v1795
        %1825 = vmatprep.subr.mxu0 %v1794
        %1826 = vmatpush1.msra.mxu0 %v1793
        %1827 = vmatprep.subr.mxu0 %v1792
        %1828 = vmatpush1.msra.mxu0 %v1791
        %1829 = vmatprep.subr.mxu0 %v1790
        %1830 = vmatpush1.msra.mxu0 %v1789
        %1831 = vmatprep.subr.mxu0 %v1788
        %1832 = vmatpush1.msra.mxu0 %v1787
        %1833 = vmatprep.subr.mxu0 %v1786
        %1834 = vmatpush1.msra.mxu0 %v1785
        %1835 = vmatprep.subr.mxu0 %v1784
        %1836 = vmatpush1.msra.mxu0 %v1783
        %1837 = vmatprep.subr.mxu0 %v1782
        %1838 = vmatpush1.msra.mxu0 %v1781
        %1839 = vmatprep.subr.mxu0 %v1780
        %1840 = vmatpush1.msra.mxu0 %v1779
        %1841 = vmatprep.subr.mxu0 %v1778
        %1842 = vmatpush1.msra.mxu0 %v1777
        %1843 = vmatprep.subr.mxu0 0.0
        %1844 = vmatpush2.msra.mxu0 0.0
        %1845 = vmatprep.subr.mxu0 0.0
        %1846 = vmatpush2.msra.mxu0 0.0
        %1847 = vmatprep.subr.mxu0 0.0
        %1848 = vmatpush2.msra.mxu0 0.0
        %1849 = vmatprep.subr.mxu0 0.0
        %1850 = vmatpush2.msra.mxu0 0.0
        %1851 = vmatprep.subr.mxu0 0.0
        %1852 = vmatpush2.msra.mxu0 0.0
        %1853 = vmatprep.subr.mxu0 0.0
        %1854 = vmatpush2.msra.mxu0 0.0
        %1855 = vmatprep.subr.mxu0 0.0
        %1856 = vmatpush2.msra.mxu0 0.0
        %1857 = vmatprep.subr.mxu0 0.0
        %1858 = vmatpush2.msra.mxu0 0.0
        %1859 = vmatprep.subr.mxu0 0.0
        %1860 = vmatpush2.msra.mxu0 0.0
        %1861 = vmatprep.subr.mxu0 0.0
        %1862 = vmatpush2.msra.mxu0 0.0
        %1863 = vmatprep.subr.mxu0 0.0
        %1864 = vmatpush2.msra.mxu0 0.0
        %1865 = vmatprep.subr.mxu0 0.0
        %1866 = vmatpush2.msra.mxu0 0.0
        %1867 = vmatprep.subr.mxu0 0.0
        %1868 = vmatpush2.msra.mxu0 0.0
        %1869 = vmatprep.subr.mxu0 0.0
        %1870 = vmatpush2.msra.mxu0 0.0
        %1871 = vmatprep.subr.mxu0 0.0
        %1872 = vmatpush2.msra.mxu0 0.0
        %1873 = vmatprep.subr.mxu0 0.0
        %1874 = vmatpush2.msra.mxu0 0.0
        %1875 = vmatprep.mubr.f32.mxu0 0.0
        %1876 = vmatmul.mubr.f32.gmra.mxu0 %v1800
        %v1877 = vpop.f32.mrf.mxu0
        %v1878 = vadd.f32 0.0, %v1877
        %v1879 = vpop.f32.mrf.mxu0
        %v1880 = vadd.f32 0.0, %v1879
        %1881 = vmatprep.mubr.f32.mxu0 0.0
        %1882 = vmatmul.mubr.f32.gmra.mxu0 %v1803
        %v1883 = vpop.f32.mrf.mxu0
        %v1884 = vadd.f32 0.0, %v1883
        %v1885 = vpop.f32.mrf.mxu0
        %v1886 = vadd.f32 0.0, %v1885
        %1887 = vdwg.mxu0
        %v1888 = vadd.f32 %v1770, %v1878
        %v1889 = vadd.f32 %v1771, %v1880
        %v1890 = vadd.f32 %v1772, %v1884
        %v1891 = vadd.f32 %v1773, %v1886
        %vm1892 = vcmask 80896
        %v1894 = vsel %vm1892, %v335, 0
        %vm1896 = vcmask 1041408
        %v1898 = vsel %vm1896, %v1890, 0
        %v1901 = vsel %vm1896, %v1891, 0
        %1903 = vmatprep.subr.mxu0 0.0
        %1904 = vmatpush1.msra.mxu0 0.0
        %1905 = vmatprep.subr.mxu0 0.0
        %1906 = vmatpush1.msra.mxu0 0.0
        %1907 = vmatprep.subr.mxu0 0.0
        %1908 = vmatpush1.msra.mxu0 0.0
        %1909 = vmatprep.subr.mxu0 0.0
        %1910 = vmatpush1.msra.mxu0 0.0
        %1911 = vmatprep.subr.mxu0 0.0
        %1912 = vmatpush1.msra.mxu0 0.0
        %1913 = vmatprep.subr.mxu0 0.0
        %1914 = vmatpush1.msra.mxu0 0.0
        %1915 = vmatprep.subr.mxu0 0.0
        %1916 = vmatpush1.msra.mxu0 0.0
        %1917 = vmatprep.subr.mxu0 0.0
        %1918 = vmatpush1.msra.mxu0 0.0
        %1919 = vmatprep.subr.mxu0 0.0
        %1920 = vmatpush1.msra.mxu0 0.0
        %1921 = vmatprep.subr.mxu0 0.0
        %1922 = vmatpush1.msra.mxu0 0.0
        %1923 = vmatprep.subr.mxu0 0.0
        %1924 = vmatpush1.msra.mxu0 0.0
        %1925 = vmatprep.subr.mxu0 0.0
        %1926 = vmatpush1.msra.mxu0 0.0
        %1927 = vmatprep.subr.mxu0 0.0
        %1928 = vmatpush1.msra.mxu0 0.0
        %1929 = vmatprep.subr.mxu0 0.0
        %1930 = vmatpush1.msra.mxu0 0.0
        %1931 = vmatprep.subr.mxu0 %v1901
        %1932 = vmatpush1.msra.mxu0 %v1898
        %1933 = vmatprep.subr.mxu0 %v1889
        %1934 = vmatpush1.msra.mxu0 %v1888
        %1935 = vmatprep.subr.mxu0 0.0
        %1936 = vmatpush2.msra.mxu0 0.0
        %1937 = vmatprep.subr.mxu0 0.0
        %1938 = vmatpush2.msra.mxu0 0.0
        %1939 = vmatprep.subr.mxu0 0.0
        %1940 = vmatpush2.msra.mxu0 0.0
        %1941 = vmatprep.subr.mxu0 0.0
        %1942 = vmatpush2.msra.mxu0 0.0
        %1943 = vmatprep.subr.mxu0 0.0
        %1944 = vmatpush2.msra.mxu0 0.0
        %1945 = vmatprep.subr.mxu0 0.0
        %1946 = vmatpush2.msra.mxu0 0.0
        %1947 = vmatprep.subr.mxu0 0.0
        %1948 = vmatpush2.msra.mxu0 0.0
        %1949 = vmatprep.subr.mxu0 0.0
        %1950 = vmatpush2.msra.mxu0 0.0
        %1951 = vmatprep.subr.mxu0 0.0
        %1952 = vmatpush2.msra.mxu0 0.0
        %1953 = vmatprep.subr.mxu0 0.0
        %1954 = vmatpush2.msra.mxu0 0.0
        %1955 = vmatprep.subr.mxu0 0.0
        %1956 = vmatpush2.msra.mxu0 0.0
        %1957 = vmatprep.subr.mxu0 0.0
        %1958 = vmatpush2.msra.mxu0 0.0
        %1959 = vmatprep.subr.mxu0 0.0
        %1960 = vmatpush2.msra.mxu0 0.0
        %1961 = vmatprep.subr.mxu0 0.0
        %1962 = vmatpush2.msra.mxu0 0.0
        %1963 = vmatprep.subr.mxu0 0.0
        %1964 = vmatpush2.msra.mxu0 0.0
        %1965 = vmatprep.subr.mxu0 0.0
        %1966 = vmatpush2.msra.mxu0 0.0
        %1967 = vmatprep.mubr.f32.mxu0 0.0
        %1968 = vmatmul.mubr.f32.gmra.mxu0 %v1894
        %v1969 = vpop.f32.mrf.mxu0
        %v1970 = vadd.f32 0.0, %v1969
        %v1971 = vpop.f32.mrf.mxu0
        %v1972 = vadd.f32 0.0, %v1971
        %1973 = vdwg.mxu0
        %v1975 = vsel %vm1892, %v336, 0
        %1977 = vmatprep.subr.mxu0 0.0
        %1978 = vmatpush1.msra.mxu0 0.0
        %1979 = vmatprep.subr.mxu0 0.0
        %1980 = vmatpush1.msra.mxu0 0.0
        %1981 = vmatprep.subr.mxu0 0.0
        %1982 = vmatpush1.msra.mxu0 0.0
        %1983 = vmatprep.subr.mxu0 0.0
        %1984 = vmatpush1.msra.mxu0 0.0
        %1985 = vmatprep.subr.mxu0 0.0
        %1986 = vmatpush1.msra.mxu0 0.0
        %1987 = vmatprep.subr.mxu0 0.0
        %1988 = vmatpush1.msra.mxu0 0.0
        %1989 = vmatprep.subr.mxu0 0.0
        %1990 = vmatpush1.msra.mxu0 0.0
        %1991 = vmatprep.subr.mxu0 0.0
        %1992 = vmatpush1.msra.mxu0 0.0
        %1993 = vmatprep.subr.mxu0 0.0
        %1994 = vmatpush1.msra.mxu0 0.0
        %1995 = vmatprep.subr.mxu0 0.0
        %1996 = vmatpush1.msra.mxu0 0.0
        %1997 = vmatprep.subr.mxu0 0.0
        %1998 = vmatpush1.msra.mxu0 0.0
        %1999 = vmatprep.subr.mxu0 0.0
        %2000 = vmatpush1.msra.mxu0 0.0
        %2001 = vmatprep.subr.mxu0 0.0
        %2002 = vmatpush1.msra.mxu0 0.0
        %2003 = vmatprep.subr.mxu0 0.0
        %2004 = vmatpush1.msra.mxu0 0.0
        %2005 = vmatprep.subr.mxu0 %v1901
        %2006 = vmatpush1.msra.mxu0 %v1898
        %2007 = vmatprep.subr.mxu0 %v1889
        %2008 = vmatpush1.msra.mxu0 %v1888
        %2009 = vmatprep.subr.mxu0 0.0
        %2010 = vmatpush2.msra.mxu0 0.0
        %2011 = vmatprep.subr.mxu0 0.0
        %2012 = vmatpush2.msra.mxu0 0.0
        %2013 = vmatprep.subr.mxu0 0.0
        %2014 = vmatpush2.msra.mxu0 0.0
        %2015 = vmatprep.subr.mxu0 0.0
        %2016 = vmatpush2.msra.mxu0 0.0
        %2017 = vmatprep.subr.mxu0 0.0
        %2018 = vmatpush2.msra.mxu0 0.0
        %2019 = vmatprep.subr.mxu0 0.0
        %2020 = vmatpush2.msra.mxu0 0.0
        %2021 = vmatprep.subr.mxu0 0.0
        %2022 = vmatpush2.msra.mxu0 0.0
        %2023 = vmatprep.subr.mxu0 0.0
        %2024 = vmatpush2.msra.mxu0 0.0
        %2025 = vmatprep.subr.mxu0 0.0
        %2026 = vmatpush2.msra.mxu0 0.0
        %2027 = vmatprep.subr.mxu0 0.0
        %2028 = vmatpush2.msra.mxu0 0.0
        %2029 = vmatprep.subr.mxu0 0.0
        %2030 = vmatpush2.msra.mxu0 0.0
        %2031 = vmatprep.subr.mxu0 0.0
        %2032 = vmatpush2.msra.mxu0 0.0
        %2033 = vmatprep.subr.mxu0 0.0
        %2034 = vmatpush2.msra.mxu0 0.0
        %2035 = vmatprep.subr.mxu0 0.0
        %2036 = vmatpush2.msra.mxu0 0.0
        %2037 = vmatprep.subr.mxu0 0.0
        %2038 = vmatpush2.msra.mxu0 0.0
        %2039 = vmatprep.subr.mxu0 0.0
        %2040 = vmatpush2.msra.mxu0 0.0
        %2041 = vmatprep.mubr.f32.mxu0 0.0
        %2042 = vmatmul.mubr.f32.gmra.mxu0 %v1975
        %v2043 = vpop.f32.mrf.mxu0
        %v2044 = vadd.f32 0.0, %v2043
        %v2045 = vpop.f32.mrf.mxu0
        %v2046 = vadd.f32 0.0, %v2045
        %2047 = vdwg.mxu0
        %v2048 = vmax.f32 %v1970, %v2044
        %v2049 = vmax.f32 %v1972, %v2046
        %v2051 = vsel %vm393, %v2049, 0
        %2053 = vmatprep.subr.mxu0 0.0
        %2054 = vmatpush1.msra.mxu0 %v306
        %2055 = vmatprep.subr.mxu0 0.0
        %2056 = vmatpush1.msra.mxu0 %v305
        %2057 = vmatprep.subr.mxu0 0.0
        %2058 = vmatpush1.msra.mxu0 %v304
        %2059 = vmatprep.subr.mxu0 0.0
        %2060 = vmatpush1.msra.mxu0 %v303
        %2061 = vmatprep.subr.mxu0 0.0
        %2062 = vmatpush1.msra.mxu0 %v302
        %2063 = vmatprep.subr.mxu0 0.0
        %2064 = vmatpush1.msra.mxu0 %v301
        %2065 = vmatprep.subr.mxu0 0.0
        %2066 = vmatpush1.msra.mxu0 %v300
        %2067 = vmatprep.subr.mxu0 0.0
        %2068 = vmatpush1.msra.mxu0 %v299
        %2069 = vmatprep.subr.mxu0 0.0
        %2070 = vmatpush1.msra.mxu0 %v298
        %2071 = vmatprep.subr.mxu0 0.0
        %2072 = vmatpush1.msra.mxu0 %v297
        %2073 = vmatprep.subr.mxu0 0.0
        %2074 = vmatpush1.msra.mxu0 %v296
        %2075 = vmatprep.subr.mxu0 0.0
        %2076 = vmatpush1.msra.mxu0 %v295
        %2077 = vmatprep.subr.mxu0 0.0
        %2078 = vmatpush1.msra.mxu0 %v294
        %2079 = vmatprep.subr.mxu0 0.0
        %2080 = vmatpush1.msra.mxu0 %v293
        %2081 = vmatprep.subr.mxu0 0.0
        %2082 = vmatpush1.msra.mxu0 %v292
        %2083 = vmatprep.subr.mxu0 0.0
        %2084 = vmatpush1.msra.mxu0 %v291
        %2085 = vmatprep.subr.mxu0 0.0
        %2086 = vmatpush2.msra.mxu0 0.0
        %2087 = vmatprep.subr.mxu0 0.0
        %2088 = vmatpush2.msra.mxu0 0.0
        %2089 = vmatprep.subr.mxu0 0.0
        %2090 = vmatpush2.msra.mxu0 0.0
        %2091 = vmatprep.subr.mxu0 0.0
        %2092 = vmatpush2.msra.mxu0 0.0
        %2093 = vmatprep.subr.mxu0 0.0
        %2094 = vmatpush2.msra.mxu0 0.0
        %2095 = vmatprep.subr.mxu0 0.0
        %2096 = vmatpush2.msra.mxu0 0.0
        %2097 = vmatprep.subr.mxu0 0.0
        %2098 = vmatpush2.msra.mxu0 0.0
        %2099 = vmatprep.subr.mxu0 0.0
        %2100 = vmatpush2.msra.mxu0 0.0
        %2101 = vmatprep.subr.mxu0 0.0
        %2102 = vmatpush2.msra.mxu0 0.0
        %2103 = vmatprep.subr.mxu0 0.0
        %2104 = vmatpush2.msra.mxu0 0.0
        %2105 = vmatprep.subr.mxu0 0.0
        %2106 = vmatpush2.msra.mxu0 0.0
        %2107 = vmatprep.subr.mxu0 0.0
        %2108 = vmatpush2.msra.mxu0 0.0
        %2109 = vmatprep.subr.mxu0 0.0
        %2110 = vmatpush2.msra.mxu0 %v310
        %2111 = vmatprep.subr.mxu0 0.0
        %2112 = vmatpush2.msra.mxu0 %v309
        %2113 = vmatprep.subr.mxu0 0.0
        %2114 = vmatpush2.msra.mxu0 %v308
        %2115 = vmatprep.subr.mxu0 0.0
        %2116 = vmatpush2.msra.mxu0 %v307
        %2117 = vmatprep.mubr.f32.mxu0 %v2051
        %2118 = vmatmul.mubr.f32.gmra.mxu0 %v2048
        %v2119 = vpop.f32.mrf.mxu0
        %v2120 = vadd.f32 0.0, %v2119
        %v2121 = vpop.f32.mrf.mxu0
        %2122 = vdwg.mxu0
        %2123 = vmatprep.subr.mxu0 0.0
        %2124 = vmatpush1.msra.mxu0 %v326
        %2125 = vmatprep.subr.mxu0 0.0
        %2126 = vmatpush1.msra.mxu0 %v325
        %2127 = vmatprep.subr.mxu0 0.0
        %2128 = vmatpush1.msra.mxu0 %v324
        %2129 = vmatprep.subr.mxu0 0.0
        %2130 = vmatpush1.msra.mxu0 %v323
        %2131 = vmatprep.subr.mxu0 0.0
        %2132 = vmatpush1.msra.mxu0 %v322
        %2133 = vmatprep.subr.mxu0 0.0
        %2134 = vmatpush1.msra.mxu0 %v321
        %2135 = vmatprep.subr.mxu0 0.0
        %2136 = vmatpush1.msra.mxu0 %v320
        %2137 = vmatprep.subr.mxu0 0.0
        %2138 = vmatpush1.msra.mxu0 %v319
        %2139 = vmatprep.subr.mxu0 0.0
        %2140 = vmatpush1.msra.mxu0 %v318
        %2141 = vmatprep.subr.mxu0 0.0
        %2142 = vmatpush1.msra.mxu0 %v317
        %2143 = vmatprep.subr.mxu0 0.0
        %2144 = vmatpush1.msra.mxu0 %v316
        %2145 = vmatprep.subr.mxu0 0.0
        %2146 = vmatpush1.msra.mxu0 %v315
        %2147 = vmatprep.subr.mxu0 0.0
        %2148 = vmatpush1.msra.mxu0 %v314
        %2149 = vmatprep.subr.mxu0 0.0
        %2150 = vmatpush1.msra.mxu0 %v313
        %2151 = vmatprep.subr.mxu0 0.0
        %2152 = vmatpush1.msra.mxu0 %v312
        %2153 = vmatprep.subr.mxu0 0.0
        %2154 = vmatpush1.msra.mxu0 %v311
        %2155 = vmatprep.subr.mxu0 0.0
        %2156 = vmatpush2.msra.mxu0 0.0
        %2157 = vmatprep.subr.mxu0 0.0
        %2158 = vmatpush2.msra.mxu0 0.0
        %2159 = vmatprep.subr.mxu0 0.0
        %2160 = vmatpush2.msra.mxu0 0.0
        %2161 = vmatprep.subr.mxu0 0.0
        %2162 = vmatpush2.msra.mxu0 0.0
        %2163 = vmatprep.subr.mxu0 0.0
        %2164 = vmatpush2.msra.mxu0 0.0
        %2165 = vmatprep.subr.mxu0 0.0
        %2166 = vmatpush2.msra.mxu0 0.0
        %2167 = vmatprep.subr.mxu0 0.0
        %2168 = vmatpush2.msra.mxu0 0.0
        %2169 = vmatprep.subr.mxu0 0.0
        %2170 = vmatpush2.msra.mxu0 0.0
        %2171 = vmatprep.subr.mxu0 0.0
        %2172 = vmatpush2.msra.mxu0 0.0
        %2173 = vmatprep.subr.mxu0 0.0
        %2174 = vmatpush2.msra.mxu0 0.0
        %2175 = vmatprep.subr.mxu0 0.0
        %2176 = vmatpush2.msra.mxu0 0.0
        %2177 = vmatprep.subr.mxu0 0.0
        %2178 = vmatpush2.msra.mxu0 0.0
        %2179 = vmatprep.subr.mxu0 0.0
        %2180 = vmatpush2.msra.mxu0 %v330
        %2181 = vmatprep.subr.mxu0 0.0
        %2182 = vmatpush2.msra.mxu0 %v329
        %2183 = vmatprep.subr.mxu0 0.0
        %2184 = vmatpush2.msra.mxu0 %v328
        %2185 = vmatprep.subr.mxu0 0.0
        %2186 = vmatpush2.msra.mxu0 %v327
        %2187 = vmatprep.mubr.f32.mxu0 %v2051
        %2188 = vmatmul.mubr.f32.gmra.mxu0 %v2048
        %v2189 = vpop.f32.mrf.mxu0
        %v2190 = vadd.f32 0.0, %v2189
        %v2191 = vpop.f32.mrf.mxu0
        %2192 = vdwg.mxu0
        %v2193 = vmax.f32 %v2120, %v2190
        %v2194 = vlaneseq
        %v2195 = vshrl.u32 %v2194, 7
        %v2196 = vsub.s32 0, %v2195
        %v2197 = vrot.slane %v364, %v2196
        %v2198 = vadd.f32 %v2193, %v2197
        %v2199 = vmax.f32 %v2198, 0.0
        %vm2200 = vcmask 651264
        %2201 = vst.msk [vmem:[#allocation3] sm:$0x1f] %vm2200, %v2199
        %v2202 = vld [vmem:[#allocation3] sm:$0x1]
        %v2203 = vld [vmem:[%s3] sm:$0xff]
        %v2204 = vld [vmem:[%s3 + $0x8] sm:$0xff]
        %v2205 = vld [vmem:[%s3 + $0x10] sm:$0xff]
        %v2206 = vld [vmem:[%s3 + $0x18] sm:$0xff]
        %v2207 = vld [vmem:[%s3 + $0x20] sm:$0xff]
        %v2208 = vld [vmem:[%s3 + $0x28] sm:$0xff]
        %v2209 = vld [vmem:[%s3 + $0x30] sm:$0xff]
        %v2210 = vld [vmem:[%s3 + $0x38] sm:$0xff]
        %v2211 = vld [vmem:[%s3 + $0x40] sm:$0xff]
        %v2212 = vld [vmem:[%s3 + $0x48] sm:$0xff]
        %v2213 = vld [vmem:[#allocation3 + $0x1] sm:$0x1]
        %s2214 = scalar_lea.vmem %s3, 80
        %v2215 = vld [vmem:[%s2214] sm:$0xff]
        %v2216 = vld [vmem:[%s2214 + $0x8] sm:$0xff]
        %v2217 = vld [vmem:[%s2214 + $0x10] sm:$0xff]
        %v2218 = vld [vmem:[%s2214 + $0x18] sm:$0xff]
        %v2219 = vld [vmem:[%s2214 + $0x20] sm:$0xff]
        %v2220 = vld [vmem:[%s2214 + $0x28] sm:$0xff]
        %v2221 = vld [vmem:[%s2214 + $0x30] sm:$0xff]
        %v2222 = vld [vmem:[%s2214 + $0x38] sm:$0xff]
        %v2223 = vld [vmem:[%s2214 + $0x40] sm:$0xff]
        %v2224 = vld [vmem:[%s2214 + $0x48] sm:$0xff]
        %vm2225 = vcmask 654336
        %v2227 = vsel %vm2225, %v2213, 0
        %2229 = vmatprep.subr.mxu0 0.0
        %2230 = vmatpush1.msra.mxu0 0.0
        %2231 = vmatprep.subr.mxu0 0.0
        %2232 = vmatpush1.msra.mxu0 0.0
        %2233 = vmatprep.subr.mxu0 0.0
        %2234 = vmatpush1.msra.mxu0 0.0
        %2235 = vmatprep.subr.mxu0 0.0
        %2236 = vmatpush1.msra.mxu0 0.0
        %2237 = vmatprep.subr.mxu0 0.0
        %2238 = vmatpush1.msra.mxu0 0.0
        %2239 = vmatprep.subr.mxu0 0.0
        %2240 = vmatpush1.msra.mxu0 0.0
        %2241 = vmatprep.subr.mxu0 0.0
        %2242 = vmatpush1.msra.mxu0 %v2224
        %2243 = vmatprep.subr.mxu0 0.0
        %2244 = vmatpush1.msra.mxu0 %v2223
        %2245 = vmatprep.subr.mxu0 0.0
        %2246 = vmatpush1.msra.mxu0 %v2222
        %2247 = vmatprep.subr.mxu0 0.0
        %2248 = vmatpush1.msra.mxu0 %v2221
        %2249 = vmatprep.subr.mxu0 0.0
        %2250 = vmatpush1.msra.mxu0 %v2220
        %2251 = vmatprep.subr.mxu0 0.0
        %2252 = vmatpush1.msra.mxu0 %v2219
        %2253 = vmatprep.subr.mxu0 0.0
        %2254 = vmatpush1.msra.mxu0 %v2218
        %2255 = vmatprep.subr.mxu0 0.0
        %2256 = vmatpush1.msra.mxu0 %v2217
        %2257 = vmatprep.subr.mxu0 0.0
        %2258 = vmatpush1.msra.mxu0 %v2216
        %2259 = vmatprep.subr.mxu0 0.0
        %2260 = vmatpush1.msra.mxu0 %v2215
        %2261 = vmatprep.subr.mxu0 0.0
        %2262 = vmatpush2.msra.mxu0 0.0
        %2263 = vmatprep.subr.mxu0 0.0
        %2264 = vmatpush2.msra.mxu0 0.0
        %2265 = vmatprep.subr.mxu0 0.0
        %2266 = vmatpush2.msra.mxu0 0.0
        %2267 = vmatprep.subr.mxu0 0.0
        %2268 = vmatpush2.msra.mxu0 0.0
        %2269 = vmatprep.subr.mxu0 0.0
        %2270 = vmatpush2.msra.mxu0 0.0
        %2271 = vmatprep.subr.mxu0 0.0
        %2272 = vmatpush2.msra.mxu0 0.0
        %2273 = vmatprep.subr.mxu0 0.0
        %2274 = vmatpush2.msra.mxu0 0.0
        %2275 = vmatprep.subr.mxu0 0.0
        %2276 = vmatpush2.msra.mxu0 0.0
        %2277 = vmatprep.subr.mxu0 0.0
        %2278 = vmatpush2.msra.mxu0 0.0
        %2279 = vmatprep.subr.mxu0 0.0
        %2280 = vmatpush2.msra.mxu0 0.0
        %2281 = vmatprep.subr.mxu0 0.0
        %2282 = vmatpush2.msra.mxu0 0.0
        %2283 = vmatprep.subr.mxu0 0.0
        %2284 = vmatpush2.msra.mxu0 0.0
        %2285 = vmatprep.subr.mxu0 0.0
        %2286 = vmatpush2.msra.mxu0 0.0
        %2287 = vmatprep.subr.mxu0 0.0
        %2288 = vmatpush2.msra.mxu0 0.0
        %2289 = vmatprep.subr.mxu0 0.0
        %2290 = vmatpush2.msra.mxu0 0.0
        %2291 = vmatprep.subr.mxu0 0.0
        %2292 = vmatpush2.msra.mxu0 0.0
        %2293 = vmatprep.mubr.f32.mxu0 0.0
        %2294 = vmatmul.mubr.f32.gmra.mxu0 %v2227
        %v2295 = vpop.f32.mrf.mxu0
        %v2296 = vadd.f32 0.0, %v2295
        %v2297 = vpop.f32.mrf.mxu0
        %2298 = vdwg.mxu0
        %v2300 = vsel %vm2225, %v2202, 0
        %2302 = vmatprep.subr.mxu0 0.0
        %2303 = vmatpush1.msra.mxu0 0.0
        %2304 = vmatprep.subr.mxu0 0.0
        %2305 = vmatpush1.msra.mxu0 0.0
        %2306 = vmatprep.subr.mxu0 0.0
        %2307 = vmatpush1.msra.mxu0 0.0
        %2308 = vmatprep.subr.mxu0 0.0
        %2309 = vmatpush1.msra.mxu0 0.0
        %2310 = vmatprep.subr.mxu0 0.0
        %2311 = vmatpush1.msra.mxu0 0.0
        %2312 = vmatprep.subr.mxu0 0.0
        %2313 = vmatpush1.msra.mxu0 0.0
        %2314 = vmatprep.subr.mxu0 0.0
        %2315 = vmatpush1.msra.mxu0 %v2212
        %2316 = vmatprep.subr.mxu0 0.0
        %2317 = vmatpush1.msra.mxu0 %v2211
        %2318 = vmatprep.subr.mxu0 0.0
        %2319 = vmatpush1.msra.mxu0 %v2210
        %2320 = vmatprep.subr.mxu0 0.0
        %2321 = vmatpush1.msra.mxu0 %v2209
        %2322 = vmatprep.subr.mxu0 0.0
        %2323 = vmatpush1.msra.mxu0 %v2208
        %2324 = vmatprep.subr.mxu0 0.0
        %2325 = vmatpush1.msra.mxu0 %v2207
        %2326 = vmatprep.subr.mxu0 0.0
        %2327 = vmatpush1.msra.mxu0 %v2206
        %2328 = vmatprep.subr.mxu0 0.0
        %2329 = vmatpush1.msra.mxu0 %v2205
        %2330 = vmatprep.subr.mxu0 0.0
        %2331 = vmatpush1.msra.mxu0 %v2204
        %2332 = vmatprep.subr.mxu0 0.0
        %2333 = vmatpush1.msra.mxu0 %v2203
        %2334 = vmatprep.subr.mxu0 0.0
        %2335 = vmatpush2.msra.mxu0 0.0
        %2336 = vmatprep.subr.mxu0 0.0
        %2337 = vmatpush2.msra.mxu0 0.0
        %2338 = vmatprep.subr.mxu0 0.0
        %2339 = vmatpush2.msra.mxu0 0.0
        %2340 = vmatprep.subr.mxu0 0.0
        %2341 = vmatpush2.msra.mxu0 0.0
        %2342 = vmatprep.subr.mxu0 0.0
        %2343 = vmatpush2.msra.mxu0 0.0
        %2344 = vmatprep.subr.mxu0 0.0
        %2345 = vmatpush2.msra.mxu0 0.0
        %2346 = vmatprep.subr.mxu0 0.0
        %2347 = vmatpush2.msra.mxu0 0.0
        %2348 = vmatprep.subr.mxu0 0.0
        %2349 = vmatpush2.msra.mxu0 0.0
        %2350 = vmatprep.subr.mxu0 0.0
        %2351 = vmatpush2.msra.mxu0 0.0
        %2352 = vmatprep.subr.mxu0 0.0
        %2353 = vmatpush2.msra.mxu0 0.0
        %2354 = vmatprep.subr.mxu0 0.0
        %2355 = vmatpush2.msra.mxu0 0.0
        %2356 = vmatprep.subr.mxu0 0.0
        %2357 = vmatpush2.msra.mxu0 0.0
        %2358 = vmatprep.subr.mxu0 0.0
        %2359 = vmatpush2.msra.mxu0 0.0
        %2360 = vmatprep.subr.mxu0 0.0
        %2361 = vmatpush2.msra.mxu0 0.0
        %2362 = vmatprep.subr.mxu0 0.0
        %2363 = vmatpush2.msra.mxu0 0.0
        %2364 = vmatprep.subr.mxu0 0.0
        %2365 = vmatpush2.msra.mxu0 0.0
        %2366 = vmatprep.mubr.f32.mxu0 0.0
        %2367 = vmatmul.mubr.f32.gmra.mxu0 %v2300
        %v2368 = vpop.f32.mrf.mxu0
        %v2369 = vadd.f32 %v2296, %v2368
        %v2370 = vpop.f32.mrf.mxu0
        %2371 = vdwg.mxu0
        %v2372 = vld [vmem:[#allocation3 + $0x2] sm:$0x1]
        %s2373 = scalar_lea.vmem %s3, 160
        %v2374 = vld [vmem:[%s2373] sm:$0xff]
        %v2375 = vld [vmem:[%s2373 + $0x8] sm:$0xff]
        %v2376 = vld [vmem:[%s2373 + $0x10] sm:$0xff]
        %v2377 = vld [vmem:[%s2373 + $0x18] sm:$0xff]
        %v2378 = vld [vmem:[%s2373 + $0x20] sm:$0xff]
        %v2379 = vld [vmem:[%s2373 + $0x28] sm:$0xff]
        %v2380 = vld [vmem:[%s2373 + $0x30] sm:$0xff]
        %v2381 = vld [vmem:[%s2373 + $0x38] sm:$0xff]
        %v2382 = vld [vmem:[%s2373 + $0x40] sm:$0xff]
        %v2383 = vld [vmem:[%s2373 + $0x48] sm:$0xff]
        %v2385 = vsel %vm2225, %v2372, 0
        %2387 = vmatprep.subr.mxu0 0.0
        %2388 = vmatpush1.msra.mxu0 0.0
        %2389 = vmatprep.subr.mxu0 0.0
        %2390 = vmatpush1.msra.mxu0 0.0
        %2391 = vmatprep.subr.mxu0 0.0
        %2392 = vmatpush1.msra.mxu0 0.0
        %2393 = vmatprep.subr.mxu0 0.0
        %2394 = vmatpush1.msra.mxu0 0.0
        %2395 = vmatprep.subr.mxu0 0.0
        %2396 = vmatpush1.msra.mxu0 0.0
        %2397 = vmatprep.subr.mxu0 0.0
        %2398 = vmatpush1.msra.mxu0 0.0
        %2399 = vmatprep.subr.mxu0 0.0
        %2400 = vmatpush1.msra.mxu0 %v2383
        %2401 = vmatprep.subr.mxu0 0.0
        %2402 = vmatpush1.msra.mxu0 %v2382
        %2403 = vmatprep.subr.mxu0 0.0
        %2404 = vmatpush1.msra.mxu0 %v2381
        %2405 = vmatprep.subr.mxu0 0.0
        %2406 = vmatpush1.msra.mxu0 %v2380
        %2407 = vmatprep.subr.mxu0 0.0
        %2408 = vmatpush1.msra.mxu0 %v2379
        %2409 = vmatprep.subr.mxu0 0.0
        %2410 = vmatpush1.msra.mxu0 %v2378
        %2411 = vmatprep.subr.mxu0 0.0
        %2412 = vmatpush1.msra.mxu0 %v2377
        %2413 = vmatprep.subr.mxu0 0.0
        %2414 = vmatpush1.msra.mxu0 %v2376
        %2415 = vmatprep.subr.mxu0 0.0
        %2416 = vmatpush1.msra.mxu0 %v2375
        %2417 = vmatprep.subr.mxu0 0.0
        %2418 = vmatpush1.msra.mxu0 %v2374
        %2419 = vmatprep.subr.mxu0 0.0
        %2420 = vmatpush2.msra.mxu0 0.0
        %2421 = vmatprep.subr.mxu0 0.0
        %2422 = vmatpush2.msra.mxu0 0.0
        %2423 = vmatprep.subr.mxu0 0.0
        %2424 = vmatpush2.msra.mxu0 0.0
        %2425 = vmatprep.subr.mxu0 0.0
        %2426 = vmatpush2.msra.mxu0 0.0
        %2427 = vmatprep.subr.mxu0 0.0
        %2428 = vmatpush2.msra.mxu0 0.0
        %2429 = vmatprep.subr.mxu0 0.0
        %2430 = vmatpush2.msra.mxu0 0.0
        %2431 = vmatprep.subr.mxu0 0.0
        %2432 = vmatpush2.msra.mxu0 0.0
        %2433 = vmatprep.subr.mxu0 0.0
        %2434 = vmatpush2.msra.mxu0 0.0
        %2435 = vmatprep.subr.mxu0 0.0
        %2436 = vmatpush2.msra.mxu0 0.0
        %2437 = vmatprep.subr.mxu0 0.0
        %2438 = vmatpush2.msra.mxu0 0.0
        %2439 = vmatprep.subr.mxu0 0.0
        %2440 = vmatpush2.msra.mxu0 0.0
        %2441 = vmatprep.subr.mxu0 0.0
        %2442 = vmatpush2.msra.mxu0 0.0
        %2443 = vmatprep.subr.mxu0 0.0
        %2444 = vmatpush2.msra.mxu0 0.0
        %2445 = vmatprep.subr.mxu0 0.0
        %2446 = vmatpush2.msra.mxu0 0.0
        %2447 = vmatprep.subr.mxu0 0.0
        %2448 = vmatpush2.msra.mxu0 0.0
        %2449 = vmatprep.subr.mxu0 0.0
        %2450 = vmatpush2.msra.mxu0 0.0
        %2451 = vmatprep.mubr.f32.mxu0 0.0
        %2452 = vmatmul.mubr.f32.gmra.mxu0 %v2385
        %v2453 = vpop.f32.mrf.mxu0
        %v2454 = vadd.f32 0.0, %v2453
        %v2455 = vpop.f32.mrf.mxu0
        %2456 = vdwg.mxu0
        %v2457 = vadd.f32 %v2369, %v2454
        %v2458 = vld [vmem:[#allocation3 + $0x3] sm:$0x1]
        %s2459 = scalar_lea.vmem %s3, 240
        %v2460 = vld [vmem:[%s2459] sm:$0xff]
        %v2461 = vld [vmem:[%s2459 + $0x8] sm:$0xff]
        %v2462 = vld [vmem:[%s2459 + $0x10] sm:$0xff]
        %v2463 = vld [vmem:[%s2459 + $0x18] sm:$0xff]
        %v2464 = vld [vmem:[%s2459 + $0x20] sm:$0xff]
        %v2465 = vld [vmem:[%s2459 + $0x28] sm:$0xff]
        %v2466 = vld [vmem:[%s2459 + $0x30] sm:$0xff]
        %v2467 = vld [vmem:[%s2459 + $0x38] sm:$0xff]
        %v2468 = vld [vmem:[%s2459 + $0x40] sm:$0xff]
        %v2469 = vld [vmem:[%s2459 + $0x48] sm:$0xff]
        %v2471 = vsel %vm2225, %v2458, 0
        %2473 = vmatprep.subr.mxu0 0.0
        %2474 = vmatpush1.msra.mxu0 0.0
        %2475 = vmatprep.subr.mxu0 0.0
        %2476 = vmatpush1.msra.mxu0 0.0
        %2477 = vmatprep.subr.mxu0 0.0
        %2478 = vmatpush1.msra.mxu0 0.0
        %2479 = vmatprep.subr.mxu0 0.0
        %2480 = vmatpush1.msra.mxu0 0.0
        %2481 = vmatprep.subr.mxu0 0.0
        %2482 = vmatpush1.msra.mxu0 0.0
        %2483 = vmatprep.subr.mxu0 0.0
        %2484 = vmatpush1.msra.mxu0 0.0
        %2485 = vmatprep.subr.mxu0 0.0
        %2486 = vmatpush1.msra.mxu0 %v2469
        %2487 = vmatprep.subr.mxu0 0.0
        %2488 = vmatpush1.msra.mxu0 %v2468
        %2489 = vmatprep.subr.mxu0 0.0
        %2490 = vmatpush1.msra.mxu0 %v2467
        %2491 = vmatprep.subr.mxu0 0.0
        %2492 = vmatpush1.msra.mxu0 %v2466
        %2493 = vmatprep.subr.mxu0 0.0
        %2494 = vmatpush1.msra.mxu0 %v2465
        %2495 = vmatprep.subr.mxu0 0.0
        %2496 = vmatpush1.msra.mxu0 %v2464
        %2497 = vmatprep.subr.mxu0 0.0
        %2498 = vmatpush1.msra.mxu0 %v2463
        %2499 = vmatprep.subr.mxu0 0.0
        %2500 = vmatpush1.msra.mxu0 %v2462
        %2501 = vmatprep.subr.mxu0 0.0
        %2502 = vmatpush1.msra.mxu0 %v2461
        %2503 = vmatprep.subr.mxu0 0.0
        %2504 = vmatpush1.msra.mxu0 %v2460
        %2505 = vmatprep.subr.mxu0 0.0
        %2506 = vmatpush2.msra.mxu0 0.0
        %2507 = vmatprep.subr.mxu0 0.0
        %2508 = vmatpush2.msra.mxu0 0.0
        %2509 = vmatprep.subr.mxu0 0.0
        %2510 = vmatpush2.msra.mxu0 0.0
        %2511 = vmatprep.subr.mxu0 0.0
        %2512 = vmatpush2.msra.mxu0 0.0
        %2513 = vmatprep.subr.mxu0 0.0
        %2514 = vmatpush2.msra.mxu0 0.0
        %2515 = vmatprep.subr.mxu0 0.0
        %2516 = vmatpush2.msra.mxu0 0.0
        %2517 = vmatprep.subr.mxu0 0.0
        %2518 = vmatpush2.msra.mxu0 0.0
        %2519 = vmatprep.subr.mxu0 0.0
        %2520 = vmatpush2.msra.mxu0 0.0
        %2521 = vmatprep.subr.mxu0 0.0
        %2522 = vmatpush2.msra.mxu0 0.0
        %2523 = vmatprep.subr.mxu0 0.0
        %2524 = vmatpush2.msra.mxu0 0.0
        %2525 = vmatprep.subr.mxu0 0.0
        %2526 = vmatpush2.msra.mxu0 0.0
        %2527 = vmatprep.subr.mxu0 0.0
        %2528 = vmatpush2.msra.mxu0 0.0
        %2529 = vmatprep.subr.mxu0 0.0
        %2530 = vmatpush2.msra.mxu0 0.0
        %2531 = vmatprep.subr.mxu0 0.0
        %2532 = vmatpush2.msra.mxu0 0.0
        %2533 = vmatprep.subr.mxu0 0.0
        %2534 = vmatpush2.msra.mxu0 0.0
        %2535 = vmatprep.subr.mxu0 0.0
        %2536 = vmatpush2.msra.mxu0 0.0
        %2537 = vmatprep.mubr.f32.mxu0 0.0
        %2538 = vmatmul.mubr.f32.gmra.mxu0 %v2471
        %v2539 = vpop.f32.mrf.mxu0
        %v2540 = vadd.f32 0.0, %v2539
        %v2541 = vpop.f32.mrf.mxu0
        %2542 = vdwg.mxu0
        %v2543 = vadd.f32 %v2457, %v2540
        %v2544 = vld [vmem:[#allocation3 + $0x4] sm:$0x1]
        %s2545 = scalar_lea.vmem %s3, 320
        %v2546 = vld [vmem:[%s2545] sm:$0xff]
        %v2547 = vld [vmem:[%s2545 + $0x8] sm:$0xff]
        %v2548 = vld [vmem:[%s2545 + $0x10] sm:$0xff]
        %v2549 = vld [vmem:[%s2545 + $0x18] sm:$0xff]
        %v2550 = vld [vmem:[%s2545 + $0x20] sm:$0xff]
        %v2551 = vld [vmem:[%s2545 + $0x28] sm:$0xff]
        %v2552 = vld [vmem:[%s2545 + $0x30] sm:$0xff]
        %v2553 = vld [vmem:[%s2545 + $0x38] sm:$0xff]
        %v2554 = vld [vmem:[%s2545 + $0x40] sm:$0xff]
        %v2555 = vld [vmem:[%s2545 + $0x48] sm:$0xff]
        %v2557 = vsel %vm2225, %v2544, 0
        %2559 = vmatprep.subr.mxu0 0.0
        %2560 = vmatpush1.msra.mxu0 0.0
        %2561 = vmatprep.subr.mxu0 0.0
        %2562 = vmatpush1.msra.mxu0 0.0
        %2563 = vmatprep.subr.mxu0 0.0
        %2564 = vmatpush1.msra.mxu0 0.0
        %2565 = vmatprep.subr.mxu0 0.0
        %2566 = vmatpush1.msra.mxu0 0.0
        %2567 = vmatprep.subr.mxu0 0.0
        %2568 = vmatpush1.msra.mxu0 0.0
        %2569 = vmatprep.subr.mxu0 0.0
        %2570 = vmatpush1.msra.mxu0 0.0
        %2571 = vmatprep.subr.mxu0 0.0
        %2572 = vmatpush1.msra.mxu0 %v2555
        %2573 = vmatprep.subr.mxu0 0.0
        %2574 = vmatpush1.msra.mxu0 %v2554
        %2575 = vmatprep.subr.mxu0 0.0
        %2576 = vmatpush1.msra.mxu0 %v2553
        %2577 = vmatprep.subr.mxu0 0.0
        %2578 = vmatpush1.msra.mxu0 %v2552
        %2579 = vmatprep.subr.mxu0 0.0
        %2580 = vmatpush1.msra.mxu0 %v2551
        %2581 = vmatprep.subr.mxu0 0.0
        %2582 = vmatpush1.msra.mxu0 %v2550
        %2583 = vmatprep.subr.mxu0 0.0
        %2584 = vmatpush1.msra.mxu0 %v2549
        %2585 = vmatprep.subr.mxu0 0.0
        %2586 = vmatpush1.msra.mxu0 %v2548
        %2587 = vmatprep.subr.mxu0 0.0
        %2588 = vmatpush1.msra.mxu0 %v2547
        %2589 = vmatprep.subr.mxu0 0.0
        %2590 = vmatpush1.msra.mxu0 %v2546
        %2591 = vmatprep.subr.mxu0 0.0
        %2592 = vmatpush2.msra.mxu0 0.0
        %2593 = vmatprep.subr.mxu0 0.0
        %2594 = vmatpush2.msra.mxu0 0.0
        %2595 = vmatprep.subr.mxu0 0.0
        %2596 = vmatpush2.msra.mxu0 0.0
        %2597 = vmatprep.subr.mxu0 0.0
        %2598 = vmatpush2.msra.mxu0 0.0
        %2599 = vmatprep.subr.mxu0 0.0
        %2600 = vmatpush2.msra.mxu0 0.0
        %2601 = vmatprep.subr.mxu0 0.0
        %2602 = vmatpush2.msra.mxu0 0.0
        %2603 = vmatprep.subr.mxu0 0.0
        %2604 = vmatpush2.msra.mxu0 0.0
        %2605 = vmatprep.subr.mxu0 0.0
        %2606 = vmatpush2.msra.mxu0 0.0
        %2607 = vmatprep.subr.mxu0 0.0
        %2608 = vmatpush2.msra.mxu0 0.0
        %2609 = vmatprep.subr.mxu0 0.0
        %2610 = vmatpush2.msra.mxu0 0.0
        %2611 = vmatprep.subr.mxu0 0.0
        %2612 = vmatpush2.msra.mxu0 0.0
        %2613 = vmatprep.subr.mxu0 0.0
        %2614 = vmatpush2.msra.mxu0 0.0
        %2615 = vmatprep.subr.mxu0 0.0
        %2616 = vmatpush2.msra.mxu0 0.0
        %2617 = vmatprep.subr.mxu0 0.0
        %2618 = vmatpush2.msra.mxu0 0.0
        %2619 = vmatprep.subr.mxu0 0.0
        %2620 = vmatpush2.msra.mxu0 0.0
        %2621 = vmatprep.subr.mxu0 0.0
        %2622 = vmatpush2.msra.mxu0 0.0
        %2623 = vmatprep.mubr.f32.mxu0 0.0
        %2624 = vmatmul.mubr.f32.gmra.mxu0 %v2557
        %v2625 = vpop.f32.mrf.mxu0
        %v2626 = vadd.f32 0.0, %v2625
        %v2627 = vpop.f32.mrf.mxu0
        %2628 = vdwg.mxu0
        %v2629 = vadd.f32 %v2543, %v2626
        %v2630 = vadd.f32 %v2629, %v365
        %v2631 = vmax.f32 %v2630, 0.0
        %vm2632 = vcmask 982016
        %v2634 = vsel %vm2632, %v2631, 0
        %2636 = vmatprep.subr.mxu0 0.0
        %2637 = vmatpush1.msra.mxu0 0.0
        %2638 = vmatprep.subr.mxu0 0.0
        %2639 = vmatpush1.msra.mxu0 %v351
        %2640 = vmatprep.subr.mxu0 0.0
        %2641 = vmatpush1.msra.mxu0 %v350
        %2642 = vmatprep.subr.mxu0 0.0
        %2643 = vmatpush1.msra.mxu0 %v349
        %2644 = vmatprep.subr.mxu0 0.0
        %2645 = vmatpush1.msra.mxu0 %v348
        %2646 = vmatprep.subr.mxu0 0.0
        %2647 = vmatpush1.msra.mxu0 %v347
        %2648 = vmatprep.subr.mxu0 0.0
        %2649 = vmatpush1.msra.mxu0 %v346
        %2650 = vmatprep.subr.mxu0 0.0
        %2651 = vmatpush1.msra.mxu0 %v345
        %2652 = vmatprep.subr.mxu0 0.0
        %2653 = vmatpush1.msra.mxu0 %v344
        %2654 = vmatprep.subr.mxu0 0.0
        %2655 = vmatpush1.msra.mxu0 %v343
        %2656 = vmatprep.subr.mxu0 0.0
        %2657 = vmatpush1.msra.mxu0 %v342
        %2658 = vmatprep.subr.mxu0 0.0
        %2659 = vmatpush1.msra.mxu0 %v341
        %2660 = vmatprep.subr.mxu0 0.0
        %2661 = vmatpush1.msra.mxu0 %v340
        %2662 = vmatprep.subr.mxu0 0.0
        %2663 = vmatpush1.msra.mxu0 %v339
        %2664 = vmatprep.subr.mxu0 0.0
        %2665 = vmatpush1.msra.mxu0 %v338
        %2666 = vmatprep.subr.mxu0 0.0
        %2667 = vmatpush1.msra.mxu0 %v337
        %2668 = vmatprep.subr.mxu0 0.0
        %2669 = vmatpush2.msra.mxu0 0.0
        %2670 = vmatprep.subr.mxu0 0.0
        %2671 = vmatpush2.msra.mxu0 0.0
        %2672 = vmatprep.subr.mxu0 0.0
        %2673 = vmatpush2.msra.mxu0 0.0
        %2674 = vmatprep.subr.mxu0 0.0
        %2675 = vmatpush2.msra.mxu0 0.0
        %2676 = vmatprep.subr.mxu0 0.0
        %2677 = vmatpush2.msra.mxu0 0.0
        %2678 = vmatprep.subr.mxu0 0.0
        %2679 = vmatpush2.msra.mxu0 0.0
        %2680 = vmatprep.subr.mxu0 0.0
        %2681 = vmatpush2.msra.mxu0 0.0
        %2682 = vmatprep.subr.mxu0 0.0
        %2683 = vmatpush2.msra.mxu0 0.0
        %2684 = vmatprep.subr.mxu0 0.0
        %2685 = vmatpush2.msra.mxu0 0.0
        %2686 = vmatprep.subr.mxu0 0.0
        %2687 = vmatpush2.msra.mxu0 0.0
        %2688 = vmatprep.subr.mxu0 0.0
        %2689 = vmatpush2.msra.mxu0 0.0
        %2690 = vmatprep.subr.mxu0 0.0
        %2691 = vmatpush2.msra.mxu0 0.0
        %2692 = vmatprep.subr.mxu0 0.0
        %2693 = vmatpush2.msra.mxu0 0.0
        %2694 = vmatprep.subr.mxu0 0.0
        %2695 = vmatpush2.msra.mxu0 0.0
        %2696 = vmatprep.subr.mxu0 0.0
        %2697 = vmatpush2.msra.mxu0 0.0
        %2698 = vmatprep.subr.mxu0 0.0
        %2699 = vmatpush2.msra.mxu0 0.0
        %2700 = vmatprep.mubr.f32.mxu0 0.0
        %2701 = vmatmul.mubr.f32.gmra.mxu0 %v2634
        %v2702 = vpop.f32.mrf.mxu0
        %v2703 = vadd.f32 %v366, %v2702
        %v2704 = vpop.f32.mrf.mxu0
        %2705 = vdwg.mxu0
        %v2706 = vmax.f32 %v2703, 0.0
        %v2708 = vsel %vm1307, %v2706, 0
        %v2711 = vsel %vm969, %v362, 0
        %2713 = vmatprep.subr.mxu0 0.0
        %2714 = vmatpush1.msra.mxu0 0.0
        %2715 = vmatprep.subr.mxu0 0.0
        %2716 = vmatpush1.msra.mxu0 0.0
        %2717 = vmatprep.subr.mxu0 0.0
        %2718 = vmatpush1.msra.mxu0 0.0
        %2719 = vmatprep.subr.mxu0 0.0
        %2720 = vmatpush1.msra.mxu0 0.0
        %2721 = vmatprep.subr.mxu0 0.0
        %2722 = vmatpush1.msra.mxu0 0.0
        %2723 = vmatprep.subr.mxu0 0.0
        %2724 = vmatpush1.msra.mxu0 %v2711
        %2725 = vmatprep.subr.mxu0 0.0
        %2726 = vmatpush1.msra.mxu0 %v361
        %2727 = vmatprep.subr.mxu0 0.0
        %2728 = vmatpush1.msra.mxu0 %v360
        %2729 = vmatprep.subr.mxu0 0.0
        %2730 = vmatpush1.msra.mxu0 %v359
        %2731 = vmatprep.subr.mxu0 0.0
        %2732 = vmatpush1.msra.mxu0 %v358
        %2733 = vmatprep.subr.mxu0 0.0
        %2734 = vmatpush1.msra.mxu0 %v357
        %2735 = vmatprep.subr.mxu0 0.0
        %2736 = vmatpush1.msra.mxu0 %v356
        %2737 = vmatprep.subr.mxu0 0.0
        %2738 = vmatpush1.msra.mxu0 %v355
        %2739 = vmatprep.subr.mxu0 0.0
        %2740 = vmatpush1.msra.mxu0 %v354
        %2741 = vmatprep.subr.mxu0 0.0
        %2742 = vmatpush1.msra.mxu0 %v353
        %2743 = vmatprep.subr.mxu0 0.0
        %2744 = vmatpush1.msra.mxu0 %v352
        %2745 = vmatprep.subr.mxu0 0.0
        %2746 = vmatpush2.msra.mxu0 0.0
        %2747 = vmatprep.subr.mxu0 0.0
        %2748 = vmatpush2.msra.mxu0 0.0
        %2749 = vmatprep.subr.mxu0 0.0
        %2750 = vmatpush2.msra.mxu0 0.0
        %2751 = vmatprep.subr.mxu0 0.0
        %2752 = vmatpush2.msra.mxu0 0.0
        %2753 = vmatprep.subr.mxu0 0.0
        %2754 = vmatpush2.msra.mxu0 0.0
        %2755 = vmatprep.subr.mxu0 0.0
        %2756 = vmatpush2.msra.mxu0 0.0
        %2757 = vmatprep.subr.mxu0 0.0
        %2758 = vmatpush2.msra.mxu0 0.0
        %2759 = vmatprep.subr.mxu0 0.0
        %2760 = vmatpush2.msra.mxu0 0.0
        %2761 = vmatprep.subr.mxu0 0.0
        %2762 = vmatpush2.msra.mxu0 0.0
        %2763 = vmatprep.subr.mxu0 0.0
        %2764 = vmatpush2.msra.mxu0 0.0
        %2765 = vmatprep.subr.mxu0 0.0
        %2766 = vmatpush2.msra.mxu0 0.0
        %2767 = vmatprep.subr.mxu0 0.0
        %2768 = vmatpush2.msra.mxu0 0.0
        %2769 = vmatprep.subr.mxu0 0.0
        %2770 = vmatpush2.msra.mxu0 0.0
        %2771 = vmatprep.subr.mxu0 0.0
        %2772 = vmatpush2.msra.mxu0 0.0
        %2773 = vmatprep.subr.mxu0 0.0
        %2774 = vmatpush2.msra.mxu0 0.0
        %2775 = vmatprep.subr.mxu0 0.0
        %2776 = vmatpush2.msra.mxu0 0.0
        %2777 = vmatprep.mubr.f32.mxu0 0.0
        %2778 = vmatmul.mubr.f32.gmra.mxu0 %v2708
        %v2779 = vpop.f32.mrf.mxu0
        %v2780 = vadd.f32 %v367, %v2779
        %v2781 = vpop.f32.mrf.mxu0
        %2782 = vdwg.mxu0
        %vm2783 = vcmask 73728
        %2784 = vst.msk [vmem:[%s243] sm:$0x1] %vm2783, %v2780
        %s2785 = sand.u32 %s159, 1
        %s2786 = scalar_lea.sflag [#allocation5], %s2785
        %s2787 = sand.u32 %s159, 1
        %s2788 = scalar_lea.vmem [#allocation4], %s2787
        // Predicated region
        $region45: #{tpu_custom_call.1} parent=43 // pred_check
          %p2789 = pneg %p169
        $region46: #{tpu_custom_call.1} parent=43 // pred_check_branch
          %2791 = sbr.rel (%p2789) target = $region48
        $region47: #{tpu_custom_call.1} parent=43 // pred_region
          %s2793 = ssub.s32 16, 16
          %2794 = vsyncadd %s2786, %s2793
          %s2795 = smul.addr %s20, 16
          %s2796 = scalar_lea.hbm %s6, %s2795
          %s2798 = sshll.u32 %s2788, 4
          %s2799 = int_to_ptr.vmem [resolvable:$true] %s2798
          %2801 = dma.vmem_to_hbm [thread:$0]  %s2799, 16, %s2796, %s2786
        $region48: #{tpu_custom_call.1} parent=43 // pred_fallthru
          _
      $region44: #{tpu_custom_call.1} parent=5 // pred_fallthru
        _
      %p2802 = scmp.le.s32.totalorder 2, %s15
      // Predicated region
      $region49: #{tpu_custom_call.1} parent=5 // pred_check
        %p2803 = pneg %p2802
      $region50: #{tpu_custom_call.1} parent=5 // pred_check_branch
        %2805 = sbr.rel (%p2803) target = $region52
      $region51: #{tpu_custom_call.1} parent=5 // pred_region
        %s2806 = ssub.s32 %s15, 2
        // Predicated region
        $region53: #{tpu_custom_call.1} parent=51 // pred_check
          %p2807 = pneg %p175
        $region54: #{tpu_custom_call.1} parent=51 // pred_check_branch
          %2809 = sbr.rel (%p2807) target = $region56
        $region55: #{tpu_custom_call.1} parent=51 // pred_region
          %s2810 = sand.u32 %s160, 1
          %s2811 = scalar_lea.sflag [#allocation5], %s2810
          %s2812 = sand.u32 %s160, 1
          %s2813 = scalar_lea.vmem [#allocation4], %s2812
          %2814 = dma.done %s2811, 16
        $region56: #{tpu_custom_call.1} parent=51 // pred_fallthru
          _
      $region52: #{tpu_custom_call.1} parent=5 // pred_fallthru
        _
    $region6: #{tpu_custom_call.1} parent=1 // loop_footer
      %s19 = sadd.s32 1, %s15
    $region7: #{tpu_custom_call.1} parent=1 // loop_footer_branch
      %14 = sbr.rel target = $region3
    $region8: #{tpu_custom_call.1} parent=1 // loop_exit
      _
    %2815 = vsyncpa [#allocation5], 1
    %s2816 = scalar_lea.sflag [#allocation5], 1
    %2817 = vsyncpa %s2816, 1

</llo_original>
